<compile_context>
chip_gen: v6e
topology: v6e:2x2x1
jax: 0.10.0
libtpu: 0.0.40
codegen_flags: <defaults>
</compile_context>

<pallas_src>
import jax
import jax.numpy as jnp
from jax import lax
from jax.experimental import pallas as pl
from jax.experimental.pallas import tpu as pltpu

block_size = 128      # causal-mask buffer size in the PyTorch module
n_embd     = 256
num_heads  = 4
head_size  = 64       # num_heads * head_size == n_embd

_MASK_VALUE = -1e30   # large finite negative (NaN-safe vs -inf if ever reused)


# ---------------------------------------------------------------------------
# Fused kernel: one batch block = QKV proj + causal attention + out proj
# ---------------------------------------------------------------------------
def mha_fused_kernel(x_ref, wqkv_ref, wproj_ref, bproj_ref, o_ref):
    Bblk, T, C = x_ref.shape
    H, hs = num_heads, head_size
    D = H * hs
    M = Bblk * T

    # x arrives f32; cast to bf16 inside the kernel (no extra wrapper pass).
    x2d = x_ref[...].reshape(M, C).astype(jnp.bfloat16)            # (M, C)

    # One wide, lane-dense MXU matmul for Q, K, V across the whole batch block
    # (batch folded into M). 1/sqrt(hs) is already folded into the Q weights.
    qkv = jnp.dot(x2d, wqkv_ref[...],
                  preferred_element_type=jnp.float32)              # (M, 3D) f32

    # Extract head-major Q/K/V once (the 64-lane relayout is paid a single
    # time), casting the slices to bf16 as part of the extraction.
    q3 = jnp.stack([qkv[:,          h * hs:          (h + 1) * hs]
                    for h in range(H)], axis=0).astype(jnp.bfloat16)   # (H, M, hs)
    k3 = jnp.stack([qkv[:,     D + h * hs:     D + (h + 1) * hs]
                    for h in range(H)], axis=0).astype(jnp.bfloat16)   # (H, M, hs)
    v3 = jnp.stack([qkv[:, 2 * D + h * hs: 2 * D + (h + 1) * hs]
                    for h in range(H)], axis=0).astype(jnp.bfloat16)   # (H, M, hs)

    # Causal (lower-triangular) mask, shared by all heads / batch elements.
    row = lax.broadcasted_iota(jnp.int32, (T, T), 0)
    col = lax.broadcasted_iota(jnp.int32, (T, T), 1)
    causal = (col <= row)[None]                                    # (1, T, T)

    bias = bproj_ref[...]                                          # (1, C) f32

    for b in range(Bblk):                                          # static unroll
        # Sublane slices at multiples of T=128 -> aligned, free.
        q_b = q3[:, b * T:(b + 1) * T, :]                          # (H, T, hs)
        k_b = k3[:, b * T:(b + 1) * T, :]
        v_b = v3[:, b * T:(b + 1) * T, :]

        # Scores for all heads at once (batched dot_general over heads).
        s = jnp.einsum('hqd,hkd->hqk', q_b, k_b,
                       preferred_element_type=jnp.float32)         # (H, T, T)
        s = jnp.where(causal, s, _MASK_VALUE)

        # Softmax in f32; exact reciprocal on the (H, T, 1) column is ~free.
        m = jnp.max(s, axis=-1, keepdims=True)
        e = jnp.exp(s - m)
        denom = jnp.sum(e, axis=-1, keepdims=True)
        wei = (e * pl.reciprocal(denom, approx=False)).astype(jnp.bfloat16)
        # TODO(synk): attention-weight dropout is identity (eval mode).

        head_out = jnp.einsum('hqk,hkd->hqd', wei, v_b,
                              preferred_element_type=jnp.float32)  # (H, T, hs) f32

        # Output projection via per-head accumulation against 64-row
        # (sublane-aligned) slabs of W_proj — no head concatenate.
        acc = jnp.dot(head_out[0].astype(jnp.bfloat16), wproj_ref[0:hs, :],
                      preferred_element_type=jnp.float32)          # (T, C) f32
        for h in range(1, H):
            acc = acc + jnp.dot(head_out[h].astype(jnp.bfloat16),
                                wproj_ref[h * hs:(h + 1) * hs, :],
                                preferred_element_type=jnp.float32)

        # TODO(synk): output dropout is identity (eval mode).
        o_ref[b] = (acc + bias).astype(o_ref.dtype)                # lane-dense store


# ---------------------------------------------------------------------------
# Parameter preparation (done ONCE, outside the per-call forward path)
# ---------------------------------------------------------------------------
def prepare_mha_params(wq, wk, wv, w_proj, b_proj):
    """wq/wk/wv: (H, C, hs) stored as (in, out).  w_proj: (H*hs, C).  b_proj: (C,)."""
    H, C, hs = wq.shape
    D = H * hs
    scale = hs ** -0.5
    # (H, C, hs) -> (C, H*hs); fold the attention scale into the Q weights
    # BEFORE the bf16 cast (avoids compounding rounding).
    wq_f = jnp.transpose(wq, (1, 0, 2)).reshape(C, D) * scale
    wk_f = jnp.transpose(wk, (1, 0, 2)).reshape(C, D)
    wv_f = jnp.transpose(wv, (1, 0, 2)).reshape(C, D)
    wqkv  = jnp.concatenate([wq_f, wk_f, wv_f], axis=-1).astype(jnp.bfloat16)  # (C, 3D)
    wproj = w_proj.astype(jnp.bfloat16)                                        # (D, C)
    bproj = b_proj.reshape(1, C).astype(jnp.float32)                           # (1, C)
    return wqkv, wproj, bproj


def _pick_batch_block(B, max_block=8):
    """Largest divisor of B <= max_block, preferring an even grid length
    (v7x has 2 TensorCores sharing the 'parallel' grid axis)."""
    divs = [d for d in range(1, min(B, max_block) + 1) if B % d == 0]
    even = [d for d in divs if (B // d) % 2 == 0]
    return max(even) if even else max(divs)


# ---------------------------------------------------------------------------
# Forward wrapper
# ---------------------------------------------------------------------------
def multi_head_attention(x, params, out_dtype=jnp.float32):
    """x: (B, T, C) f32.  params: output of prepare_mha_params()."""
    wqkv, wproj, bproj = params
    B, T, C = x.shape
    D = wproj.shape[0]
    H, hs = num_heads, head_size
    assert C == n_embd and D == n_embd and T <= block_size

    bblk = _pick_batch_block(B)
    grid = (B // bblk,)

    cost = pl.CostEstimate(
        flops=B * (2 * T * C * 3 * D          # QKV projection
                   + H * 4 * T * T * hs       # per-head q@k^T and wei@v
                   + 2 * T * D * C),          # output projection
        transcendentals=B * H * T * T,        # exp in softmax
        bytes_accessed=(x.size * 4 + wqkv.size * 2 + wproj.size * 2
                        + bproj.size * 4
                        + B * T * C * jnp.dtype(out_dtype).itemsize),
    )

    return pl.pallas_call(
        mha_fused_kernel,
        out_shape=jax.ShapeDtypeStruct((B, T, C), out_dtype),
        grid_spec=pltpu.PrefetchScalarGridSpec(
            num_scalar_prefetch=0,
            grid=grid,
            in_specs=[
                pl.BlockSpec((bblk, T, C), lambda i: (i, 0, 0)),   # x (f32)
                pl.BlockSpec((C, 3 * D),   lambda i: (0, 0)),      # fused Wqkv (bf16)
                pl.BlockSpec((D, C),       lambda i: (0, 0)),      # W_proj (bf16)
                pl.BlockSpec((1, C),       lambda i: (0, 0)),      # b_proj (f32)
            ],
            out_specs=pl.BlockSpec((bblk, T, C), lambda i: (i, 0, 0)),
        ),
        compiler_params=pltpu.CompilerParams(
            dimension_semantics=("parallel",)),
        cost_estimate=cost,
    )(x, wqkv, wproj, bproj)


# ---------------------------------------------------------------------------
# Pure-JAX reference (f32, for a correctness spot check)
# ---------------------------------------------------------------------------
def reference(x, wq, wk, wv, w_proj, b_proj):
    B, T, C = x.shape
    outs = []
    for h in range(wq.shape[0]):
        q = x @ wq[h]
        k = x @ wk[h]
        v = x @ wv[h]
        wei = (q @ jnp.swapaxes(k, -2, -1)) * (k.shape[-1] ** -0.5)
        mask = jnp.tril(jnp.ones((T, T), dtype=bool))
        wei = jnp.where(mask, wei, -jnp.inf)
        wei = jax.nn.softmax(wei, axis=-1)
        outs.append(wei @ v)
    cat = jnp.concatenate(outs, axis=-1)
    return cat @ w_proj + b_proj[None, None, :]


if __name__ == "__main__":
    key = jax.random.PRNGKey(0)
    k_x, k_q, k_k, k_v, k_p, k_b = jax.random.split(key, 6)

    B, T = 2, 128
    x = jax.random.normal(k_x, (B, T, n_embd), dtype=jnp.float32)

    # Deterministic synthetic parameters (stored as (in, out) for x @ W).
    wq = 0.02 * jax.random.normal(k_q, (num_heads, n_embd, head_size), jnp.float32)
    wk = 0.02 * jax.random.normal(k_k, (num_heads, n_embd, head_size), jnp.float32)
    wv = 0.02 * jax.random.normal(k_v, (num_heads, n_embd, head_size), jnp.float32)
    w_proj = 0.02 * jax.random.normal(k_p, (num_heads * head_size, n_embd), jnp.float32)
    b_proj = 0.02 * jax.random.normal(k_b, (n_embd,), jnp.float32)

    # Fused bf16 weights built once (parameter-prep time, not per forward call).
    params = prepare_mha_params(wq, wk, wv, w_proj, b_proj)

    out = multi_head_attention(x, params)
    out = jax.block_until_ready(out)

    ref = reference(x, wq, wk, wv, w_proj, b_proj)
    assert out.shape == (B, T, n_embd)
    # bf16 MXU operands (f32 accumulation) vs f32 reference -> loose tolerance.
    assert jnp.allclose(out, ref, atol=2e-2, rtol=2e-2), float(
        jnp.max(jnp.abs(out - ref)))

    print("KERNEL_OK")
</pallas_src>

<mosaic_0001>
module attributes {stable_mosaic.version = 11 : i64} {
  func.func @mha_fused_kernel(%arg0: i32, %arg1: memref<1x128x256xf32, #tpu.memory_space<vmem>>, %arg2: memref<256x768xbf16, #tpu.memory_space<vmem>>, %arg3: memref<256x256xbf16, #tpu.memory_space<vmem>>, %arg4: memref<1x256xf32, #tpu.memory_space<vmem>>, %arg5: memref<1x128x256xf32, #tpu.memory_space<vmem>>) attributes {dimension_semantics = [#tpu.dimension_semantics<parallel>], iteration_bounds = array<i64: 2>, scalar_prefetch = 0 : i64, scratch_operands = 0 : i64, tpu.core_type = #tpu.core_type<tc>, window_params = [{transform_indices = @transform_0, window_bounds = array<i64: 1, 128, 256>}, {pipeline_mode = #tpu.pipeline_mode<synchronous>, transform_indices = @transform_1, window_bounds = array<i64: 256, 768>}, {pipeline_mode = #tpu.pipeline_mode<synchronous>, transform_indices = @transform_2, window_bounds = array<i64: 256, 256>}, {pipeline_mode = #tpu.pipeline_mode<synchronous>, transform_indices = @transform_3, window_bounds = array<i64: 1, 256>}, {transform_indices = @transform_4, window_bounds = array<i64: 1, 128, 256>}]} {
    %c0 = arith.constant 0 : index
    %c0_0 = arith.constant 0 : index
    %c0_1 = arith.constant 0 : index
    %0 = vector.load %arg1[%c0, %c0_0, %c0_1] : memref<1x128x256xf32, #tpu.memory_space<vmem>>, vector<1x128x256xf32>
    %1 = vector.shape_cast %0 : vector<1x128x256xf32> to vector<128x256xf32>
    %2 = arith.truncf %1 : vector<128x256xf32> to vector<128x256xbf16>
    %c0_2 = arith.constant 0 : index
    %c0_3 = arith.constant 0 : index
    %3 = vector.load %arg2[%c0_2, %c0_3] : memref<256x768xbf16, #tpu.memory_space<vmem>>, vector<256x768xbf16>
    %cst = arith.constant dense<0.000000e+00> : vector<128x768xf32>
    %4 = tpu.matmul %2, %3, %cst {dimension_numbers = #tpu.dot_dimension_numbers<[1], [0], [0], [1], [0, 0, 1, 1], [], []>} : vector<128x256xbf16>, vector<256x768xbf16>, vector<128x768xf32> -> vector<128x768xf32>
    %5 = vector.extract_strided_slice %4 {offsets = [0, 0], sizes = [128, 64], strides = [1, 1]} : vector<128x768xf32> to vector<128x64xf32>
    %6 = vector.extract_strided_slice %4 {offsets = [0, 64], sizes = [128, 64], strides = [1, 1]} : vector<128x768xf32> to vector<128x64xf32>
    %7 = vector.extract_strided_slice %4 {offsets = [0, 128], sizes = [128, 64], strides = [1, 1]} : vector<128x768xf32> to vector<128x64xf32>
    %8 = vector.extract_strided_slice %4 {offsets = [0, 192], sizes = [128, 64], strides = [1, 1]} : vector<128x768xf32> to vector<128x64xf32>
    %9 = vector.shape_cast %5 : vector<128x64xf32> to vector<1x128x64xf32>
    %10 = vector.shape_cast %6 : vector<128x64xf32> to vector<1x128x64xf32>
    %11 = vector.shape_cast %7 : vector<128x64xf32> to vector<1x128x64xf32>
    %12 = vector.shape_cast %8 : vector<128x64xf32> to vector<1x128x64xf32>
    %13 = tpu.concatenate %9, %10, %11, %12 in 0 : vector<1x128x64xf32>, vector<1x128x64xf32>, vector<1x128x64xf32>, vector<1x128x64xf32> -> vector<4x128x64xf32>
    %14 = arith.truncf %13 : vector<4x128x64xf32> to vector<4x128x64xbf16>
    %15 = vector.extract_strided_slice %4 {offsets = [0, 256], sizes = [128, 64], strides = [1, 1]} : vector<128x768xf32> to vector<128x64xf32>
    %16 = vector.extract_strided_slice %4 {offsets = [0, 320], sizes = [128, 64], strides = [1, 1]} : vector<128x768xf32> to vector<128x64xf32>
    %17 = vector.extract_strided_slice %4 {offsets = [0, 384], sizes = [128, 64], strides = [1, 1]} : vector<128x768xf32> to vector<128x64xf32>
    %18 = vector.extract_strided_slice %4 {offsets = [0, 448], sizes = [128, 64], strides = [1, 1]} : vector<128x768xf32> to vector<128x64xf32>
    %19 = vector.shape_cast %15 : vector<128x64xf32> to vector<1x128x64xf32>
    %20 = vector.shape_cast %16 : vector<128x64xf32> to vector<1x128x64xf32>
    %21 = vector.shape_cast %17 : vector<128x64xf32> to vector<1x128x64xf32>
    %22 = vector.shape_cast %18 : vector<128x64xf32> to vector<1x128x64xf32>
    %23 = tpu.concatenate %19, %20, %21, %22 in 0 : vector<1x128x64xf32>, vector<1x128x64xf32>, vector<1x128x64xf32>, vector<1x128x64xf32> -> vector<4x128x64xf32>
    %24 = arith.truncf %23 : vector<4x128x64xf32> to vector<4x128x64xbf16>
    %25 = vector.extract_strided_slice %4 {offsets = [0, 512], sizes = [128, 64], strides = [1, 1]} : vector<128x768xf32> to vector<128x64xf32>
    %26 = vector.extract_strided_slice %4 {offsets = [0, 576], sizes = [128, 64], strides = [1, 1]} : vector<128x768xf32> to vector<128x64xf32>
    %27 = vector.extract_strided_slice %4 {offsets = [0, 640], sizes = [128, 64], strides = [1, 1]} : vector<128x768xf32> to vector<128x64xf32>
    %28 = vector.extract_strided_slice %4 {offsets = [0, 704], sizes = [128, 64], strides = [1, 1]} : vector<128x768xf32> to vector<128x64xf32>
    %29 = vector.shape_cast %25 : vector<128x64xf32> to vector<1x128x64xf32>
    %30 = vector.shape_cast %26 : vector<128x64xf32> to vector<1x128x64xf32>
    %31 = vector.shape_cast %27 : vector<128x64xf32> to vector<1x128x64xf32>
    %32 = vector.shape_cast %28 : vector<128x64xf32> to vector<1x128x64xf32>
    %33 = tpu.concatenate %29, %30, %31, %32 in 0 : vector<1x128x64xf32>, vector<1x128x64xf32>, vector<1x128x64xf32>, vector<1x128x64xf32> -> vector<4x128x64xf32>
    %34 = arith.truncf %33 : vector<4x128x64xf32> to vector<4x128x64xbf16>
    %35 = tpu.iota {dimensions = array<i32: 0>} : vector<128x128xi32>
    %36 = tpu.iota {dimensions = array<i32: 1>} : vector<128x128xi32>
    %37 = arith.cmpi sle, %36, %35 : vector<128x128xi32>
    %38 = vector.shape_cast %37 : vector<128x128xi1> to vector<1x128x128xi1>
    %c0_4 = arith.constant 0 : index
    %c0_5 = arith.constant 0 : index
    %39 = vector.load %arg4[%c0_4, %c0_5] : memref<1x256xf32, #tpu.memory_space<vmem>>, vector<1x256xf32>
    "tpu.trace_start"() <{level = 10 : i32, message = "hqd,hkd->hqk"}> : () -> ()
    %cst_6 = arith.constant dense<0.000000e+00> : vector<4x128x128xf32>
    %40 = tpu.matmul %14, %24, %cst_6 {dimension_numbers = #tpu.dot_dimension_numbers<[2], [2], [1], [1], [0, 0, 0, 1, 1, 1], [0], [0]>} : vector<4x128x64xbf16>, vector<4x128x64xbf16>, vector<4x128x128xf32> -> vector<4x128x128xf32>
    %cst_7 = arith.constant -1.000000e+30 : f32
    "tpu.trace_stop"() : () -> ()
    %41 = vector.shape_cast %38 : vector<1x128x128xi1> to vector<1x128x128xi1>
    %42 = vector.broadcast %41 : vector<1x128x128xi1> to vector<4x128x128xi1>
    %43 = vector.broadcast %cst_7 : f32 to vector<4x128x128xf32>
    %44 = arith.select %42, %40, %43 : vector<4x128x128xi1>, vector<4x128x128xf32>
    %cst_8 = arith.constant dense<0xFF800000> : vector<4x128xf32>
    %45 = vector.multi_reduction <maximumf>, %44, %cst_8 [2] : vector<4x128x128xf32> to vector<4x128xf32>
    %46 = vector.shape_cast %45 : vector<4x128xf32> to vector<4x128x1xf32>
    %47 = vector.broadcast %46 : vector<4x128x1xf32> to vector<4x128x128xf32>
    %48 = arith.subf %44, %47 : vector<4x128x128xf32>
    %49 = math.exp %48 : vector<4x128x128xf32>
    %cst_9 = arith.constant dense<0.000000e+00> : vector<4x128xf32>
    %50 = vector.multi_reduction <add>, %49, %cst_9 [2] : vector<4x128x128xf32> to vector<4x128xf32>
    %51 = vector.shape_cast %50 : vector<4x128xf32> to vector<4x128x1xf32>
    %52 = tpu.reciprocal %51 : vector<4x128x1xf32> -> vector<4x128x1xf32>
    %53 = vector.broadcast %52 : vector<4x128x1xf32> to vector<4x128x128xf32>
    %54 = arith.mulf %49, %53 : vector<4x128x128xf32>
    %55 = arith.truncf %54 : vector<4x128x128xf32> to vector<4x128x128xbf16>
    "tpu.trace_start"() <{level = 10 : i32, message = "hqk,hkd->hqd"}> : () -> ()
    %cst_10 = arith.constant dense<0.000000e+00> : vector<4x128x64xf32>
    %56 = tpu.matmul %55, %34, %cst_10 {dimension_numbers = #tpu.dot_dimension_numbers<[2], [1], [1], [2], [0, 0, 0, 1, 1, 2], [0], [0]>} : vector<4x128x128xbf16>, vector<4x128x64xbf16>, vector<4x128x64xf32> -> vector<4x128x64xf32>
    "tpu.trace_stop"() : () -> ()
    %57 = vector.extract_strided_slice %56 {offsets = [0, 0, 0], sizes = [1, 128, 64], strides = [1, 1, 1]} : vector<4x128x64xf32> to vector<1x128x64xf32>
    %58 = vector.shape_cast %57 : vector<1x128x64xf32> to vector<128x64xf32>
    %59 = arith.truncf %58 : vector<128x64xf32> to vector<128x64xbf16>
    %c0_11 = arith.constant 0 : index
    %c0_12 = arith.constant 0 : index
    %60 = vector.load %arg3[%c0_11, %c0_12] : memref<256x256xbf16, #tpu.memory_space<vmem>>, vector<64x256xbf16>
    %cst_13 = arith.constant dense<0.000000e+00> : vector<128x256xf32>
    %61 = tpu.matmul %59, %60, %cst_13 {dimension_numbers = #tpu.dot_dimension_numbers<[1], [0], [0], [1], [0, 0, 1, 1], [], []>} : vector<128x64xbf16>, vector<64x256xbf16>, vector<128x256xf32> -> vector<128x256xf32>
    %62 = vector.extract_strided_slice %56 {offsets = [1, 0, 0], sizes = [1, 128, 64], strides = [1, 1, 1]} : vector<4x128x64xf32> to vector<1x128x64xf32>
    %63 = vector.shape_cast %62 : vector<1x128x64xf32> to vector<128x64xf32>
    %64 = arith.truncf %63 : vector<128x64xf32> to vector<128x64xbf16>
    %c64 = arith.constant 64 : index
    %c0_14 = arith.constant 0 : index
    %65 = vector.load %arg3[%c64, %c0_14] : memref<256x256xbf16, #tpu.memory_space<vmem>>, vector<64x256xbf16>
    %cst_15 = arith.constant dense<0.000000e+00> : vector<128x256xf32>
    %66 = tpu.matmul %64, %65, %cst_15 {dimension_numbers = #tpu.dot_dimension_numbers<[1], [0], [0], [1], [0, 0, 1, 1], [], []>} : vector<128x64xbf16>, vector<64x256xbf16>, vector<128x256xf32> -> vector<128x256xf32>
    %67 = arith.addf %61, %66 : vector<128x256xf32>
    %68 = vector.extract_strided_slice %56 {offsets = [2, 0, 0], sizes = [1, 128, 64], strides = [1, 1, 1]} : vector<4x128x64xf32> to vector<1x128x64xf32>
    %69 = vector.shape_cast %68 : vector<1x128x64xf32> to vector<128x64xf32>
    %70 = arith.truncf %69 : vector<128x64xf32> to vector<128x64xbf16>
    %c128 = arith.constant 128 : index
    %c0_16 = arith.constant 0 : index
    %71 = vector.load %arg3[%c128, %c0_16] : memref<256x256xbf16, #tpu.memory_space<vmem>>, vector<64x256xbf16>
    %cst_17 = arith.constant dense<0.000000e+00> : vector<128x256xf32>
    %72 = tpu.matmul %70, %71, %cst_17 {dimension_numbers = #tpu.dot_dimension_numbers<[1], [0], [0], [1], [0, 0, 1, 1], [], []>} : vector<128x64xbf16>, vector<64x256xbf16>, vector<128x256xf32> -> vector<128x256xf32>
    %73 = arith.addf %67, %72 : vector<128x256xf32>
    %74 = vector.extract_strided_slice %56 {offsets = [3, 0, 0], sizes = [1, 128, 64], strides = [1, 1, 1]} : vector<4x128x64xf32> to vector<1x128x64xf32>
    %75 = vector.shape_cast %74 : vector<1x128x64xf32> to vector<128x64xf32>
    %76 = arith.truncf %75 : vector<128x64xf32> to vector<128x64xbf16>
    %c192 = arith.constant 192 : index
    %c0_18 = arith.constant 0 : index
    %77 = vector.load %arg3[%c192, %c0_18] : memref<256x256xbf16, #tpu.memory_space<vmem>>, vector<64x256xbf16>
    %cst_19 = arith.constant dense<0.000000e+00> : vector<128x256xf32>
    %78 = tpu.matmul %76, %77, %cst_19 {dimension_numbers = #tpu.dot_dimension_numbers<[1], [0], [0], [1], [0, 0, 1, 1], [], []>} : vector<128x64xbf16>, vector<64x256xbf16>, vector<128x256xf32> -> vector<128x256xf32>
    %79 = arith.addf %73, %78 : vector<128x256xf32>
    %80 = vector.broadcast %39 : vector<1x256xf32> to vector<128x256xf32>
    %81 = arith.addf %79, %80 : vector<128x256xf32>
    %c0_20 = arith.constant 0 : index
    %c0_21 = arith.constant 0 : index
    %c0_22 = arith.constant 0 : index
    %82 = vector.load %arg5[%c0_20, %c0_21, %c0_22] : memref<1x128x256xf32, #tpu.memory_space<vmem>>, vector<1x128x256xf32>
    %83 = vector.shape_cast %82 : vector<1x128x256xf32> to vector<128x256xf32>
    %84 = vector.shape_cast %81 : vector<128x256xf32> to vector<1x128x256xf32>
    tpu.vector_store %arg5[%c0_20, %c0_21, %c0_22], %84 {strides = array<i32>} : memref<1x128x256xf32, #tpu.memory_space<vmem>>, vector<1x128x256xf32>,
    return
  }
  func.func @transform_0(%arg0: i32) -> (i32, i32, i32) {
    %c0_i32 = arith.constant 0 : i32
    %c0_i32_0 = arith.constant 0 : i32
    %c0_i32_1 = arith.constant 0 : i32
    return %arg0, %c0_i32, %c0_i32_0 : i32, i32, i32
  }
  func.func @transform_1(%arg0: i32) -> (i32, i32) {
    %c0_i32 = arith.constant 0 : i32
    %c0_i32_0 = arith.constant 0 : i32
    %c0_i32_1 = arith.constant 0 : i32
    return %c0_i32, %c0_i32_0 : i32, i32
  }
  func.func @transform_2(%arg0: i32) -> (i32, i32) {
    %c0_i32 = arith.constant 0 : i32
    %c0_i32_0 = arith.constant 0 : i32
    %c0_i32_1 = arith.constant 0 : i32
    return %c0_i32, %c0_i32_0 : i32, i32
  }
  func.func @transform_3(%arg0: i32) -> (i32, i32) {
    %c0_i32 = arith.constant 0 : i32
    %c0_i32_0 = arith.constant 0 : i32
    %c0_i32_1 = arith.constant 0 : i32
    return %c0_i32, %c0_i32_0 : i32, i32
  }
  func.func @transform_4(%arg0: i32) -> (i32, i32, i32) {
    %c0_i32 = arith.constant 0 : i32
    %c0_i32_0 = arith.constant 0 : i32
    %c0_i32_1 = arith.constant 0 : i32
    return %arg0, %c0_i32, %c0_i32_0 : i32, i32, i32
  }
}

</mosaic_0001>

<llo_original>
// kernel: tpu_custom_call.1
$region0: #{tpu_custom_call.1}
  #allocation0 [shape = 'u32[]', space=smem, size = 0x4, offset = 0x4, fixed_abs, tag = 'smem constant byte address 0x4 - core index']
  #allocation1 [shape = 'u32[144,128]{1,0:T(1,128)}', space=vmem, size = 0x12000, scoped, tag = 'internal scratch']
  %s0 = inlined_call_operand.hbm [shape: f32[2,128,256], index: 0, kind: input, shape index: {}]
  %s1 = inlined_call_operand.hbm [shape: bf16[256,768], index: 1, kind: input, shape index: {}]
  %s2 = inlined_call_operand.hbm [shape: bf16[256,256], index: 2, kind: input, shape index: {}]
  %s3 = inlined_call_operand.vmem [shape: f32[1,256], index: 3, kind: input, shape index: {}]
  %s4 = inlined_call_operand.hbm [shape: f32[2,128,256], index: 4, kind: output, shape index: {}]
  %s5 = sld [smem:[#allocation0]]
  $region61: #{tpu_custom_call.1} parent=0
    _
  %s7 = ssub.s32 1, %s5
  %s8 = scalar_select 0, %s7, %s5
  $region1: #{tpu_custom_call.1} parent=0
    #allocation2 [shape = 'u8[262144]{0}', space=vmem, size = 0x40000, scoped, tag = 'input window, operand 0']
    #allocation3 [shape = 's32[2]{0}', space=sflag, size = 0x8, scoped, tag = 'scoped memory for tpu_custom_call.1']
    #allocation4 [shape = 's32[2]{0}', space=sflag, size = 0x8, scoped, tag = 'scoped memory for tpu_custom_call.1']
    #allocation5 [shape = 'u8[393216]{0}', space=vmem, size = 0x60000, scoped, tag = 'input window, operand 1, single buffered']
    #allocation6 [shape = 's32[1]{0}', space=sflag, size = 0x4, scoped, tag = 'scoped memory for tpu_custom_call.1']
    #allocation7 [shape = 'u8[131072]{0}', space=vmem, size = 0x20000, scoped, tag = 'input window, operand 2, single buffered']
    #allocation8 [shape = 'u8[262144]{0}', space=vmem, size = 0x40000, scoped, tag = 'output window, operand 0']
    %9 = vsyncpa [#allocation3], 0
    %s10 = scalar_lea.sflag [#allocation3], 1
    %11 = vsyncpa %s10, 0
    %12 = vsyncpa [#allocation6], 0
    %13 = vsyncpa [#allocation4], 0
    %s14 = scalar_lea.sflag [#allocation4], 1
    %15 = vsyncpa %s14, 0
    loop: start=0, step=1, limit=4
    $region2: #{tpu_custom_call.1} parent=1 // loop_pre_header
      _
    $region3: #{tpu_custom_call.1} parent=1 // loop_header
      %s17 = sphi 0, %s21
      %p18 = scmp.ge.s32.totalorder %s17, 4
      %s27 = sphi 0, %s29
      %s30 = sphi 0, %s27
      %s31 = sphi 0, %s30
      %s47 = sphi 0, %s31
      %s51 = sphi 0, %s51
      %s53 = sphi 0, %s51
      %s54 = sphi 0, %s53
      %s68 = sphi 0, %s54
      %s72 = sphi 0, %s72
      %s74 = sphi 0, %s72
      %s75 = sphi 0, %s74
      %s89 = sphi 0, %s75
      %s93 = sphi 0, %s93
      %s95 = sphi 0, %s93
      %s96 = sphi 0, %s95
      %s110 = sphi 0, %s96
      %s116 = sphi 0, %s118
      %s119 = sphi 0, %s116
      %s120 = sphi 0, %s119
      %s136 = sphi 0, %s120
    $region4: #{tpu_custom_call.1} parent=1 // loop_header_branch
      %20 = sbr.rel (%p18) target = $region8
    $region5: #{tpu_custom_call.1} parent=1 // loop_body
      %s22 = ssub.s32 %s17, 1
      %s23 = ssub.s32 %s17, 2
      %s24 = sadd.s32 %s17, 1
      %s25 = ssub.s32 %s17, %s24
      %p26 = scmp.eq.s32.totalorder %s25, 0
      %s28 = sadd.s32 %s27, 1
      %s29 = scalar_select %p26, %s27, %s28
      %p32 = pneg %p26
      %p33 = scmp.eq.s32.totalorder %s17, 1
      %p34 = por %p32, %p33
      %p35 = scmp.ne.s32.totalorder %s27, %s30
      %p36 = scmp.eq.s32.totalorder %s17, 0
      %p37 = por %p35, %p36
      %p38 = scmp.ne.s32.totalorder %s27, %s30
      %p39 = scmp.eq.s32.totalorder %s22, 1
      %p40 = por %p38, %p39
      %p41 = scmp.ne.s32.totalorder %s30, %s31
      %p42 = scmp.eq.s32.totalorder %s22, 0
      %p43 = por %p41, %p42
      %p44 = scmp.ne.s32.totalorder %s30, %s31
      %p45 = scmp.eq.s32.totalorder %s23, 1
      %p46 = por %p44, %p45
      %p48 = scmp.ne.s32.totalorder %s31, %s47
      %p49 = scmp.eq.s32.totalorder %s23, 0
      %p50 = por %p48, %p49
      %s52 = sadd.s32 %s51, 1
      %p55 = scmp.eq.s32.totalorder %s17, 1
      %p56 = scmp.ne.s32.totalorder %s51, %s53
      %p57 = scmp.eq.s32.totalorder %s17, 0
      %p58 = por %p56, %p57
      %p59 = scmp.ne.s32.totalorder %s51, %s53
      %p60 = scmp.eq.s32.totalorder %s22, 1
      %p61 = por %p59, %p60
      %p62 = scmp.ne.s32.totalorder %s53, %s54
      %p63 = scmp.eq.s32.totalorder %s22, 0
      %p64 = por %p62, %p63
      %p65 = scmp.ne.s32.totalorder %s53, %s54
      %p66 = scmp.eq.s32.totalorder %s23, 1
      %p67 = por %p65, %p66
      %p69 = scmp.ne.s32.totalorder %s54, %s68
      %p70 = scmp.eq.s32.totalorder %s23, 0
      %p71 = por %p69, %p70
      %s73 = sadd.s32 %s72, 1
      %p76 = scmp.eq.s32.totalorder %s17, 1
      %p77 = scmp.ne.s32.totalorder %s72, %s74
      %p78 = scmp.eq.s32.totalorder %s17, 0
      %p79 = por %p77, %p78
      %p80 = scmp.ne.s32.totalorder %s72, %s74
      %p81 = scmp.eq.s32.totalorder %s22, 1
      %p82 = por %p80, %p81
      %p83 = scmp.ne.s32.totalorder %s74, %s75
      %p84 = scmp.eq.s32.totalorder %s22, 0
      %p85 = por %p83, %p84
      %p86 = scmp.ne.s32.totalorder %s74, %s75
      %p87 = scmp.eq.s32.totalorder %s23, 1
      %p88 = por %p86, %p87
      %p90 = scmp.ne.s32.totalorder %s75, %s89
      %p91 = scmp.eq.s32.totalorder %s23, 0
      %p92 = por %p90, %p91
      %s94 = sadd.s32 %s93, 1
      %p97 = scmp.eq.s32.totalorder %s17, 1
      %p98 = scmp.ne.s32.totalorder %s93, %s95
      %p99 = scmp.eq.s32.totalorder %s17, 0
      %p100 = por %p98, %p99
      %p101 = scmp.ne.s32.totalorder %s93, %s95
      %p102 = scmp.eq.s32.totalorder %s22, 1
      %p103 = por %p101, %p102
      %p104 = scmp.ne.s32.totalorder %s95, %s96
      %p105 = scmp.eq.s32.totalorder %s22, 0
      %p106 = por %p104, %p105
      %p107 = scmp.ne.s32.totalorder %s95, %s96
      %p108 = scmp.eq.s32.totalorder %s23, 1
      %p109 = por %p107, %p108
      %p111 = scmp.ne.s32.totalorder %s96, %s110
      %p112 = scmp.eq.s32.totalorder %s23, 0
      %p113 = por %p111, %p112
      %s114 = ssub.s32 %s17, %s24
      %p115 = scmp.eq.s32.totalorder %s114, 0
      %s117 = sadd.s32 %s116, 1
      %s118 = scalar_select %p115, %s116, %s117
      %p121 = pneg %p115
      %p122 = scmp.eq.s32.totalorder %s17, 1
      %p123 = por %p121, %p122
      %p124 = scmp.ne.s32.totalorder %s116, %s119
      %p125 = scmp.eq.s32.totalorder %s17, 0
      %p126 = por %p124, %p125
      %p127 = scmp.ne.s32.totalorder %s116, %s119
      %p128 = scmp.eq.s32.totalorder %s22, 1
      %p129 = por %p127, %p128
      %p130 = scmp.ne.s32.totalorder %s119, %s120
      %p131 = scmp.eq.s32.totalorder %s22, 0
      %p132 = por %p130, %p131
      %p133 = scmp.ne.s32.totalorder %s119, %s120
      %p134 = scmp.eq.s32.totalorder %s23, 1
      %p135 = por %p133, %p134
      %p137 = scmp.ne.s32.totalorder %s120, %s136
      %p138 = scmp.eq.s32.totalorder %s23, 0
      %p139 = por %p137, %p138
      %p140 = scmp.le.s32.totalorder 1, %s17
      %p141 = scmp.lt.s32.totalorder %s17, 3
      %p142 = pnand %p140, %p141
      %p143 = pneg %p142
      // Predicated region
      $region9: #{tpu_custom_call.1} parent=5 // pred_check
        _
      $region10: #{tpu_custom_call.1} parent=5 // pred_check_branch
        %145 = sbr.rel (%p142) target = $region12
      $region11: #{tpu_custom_call.1} parent=5 // pred_region
        %s146 = ssub.s32 %s17, 1
        // Predicated region
        $region13: #{tpu_custom_call.1} parent=11 // pred_check
          %p147 = pneg %p64
        $region14: #{tpu_custom_call.1} parent=11 // pred_check_branch
          %149 = sbr.rel (%p147) target = $region16
        $region15: #{tpu_custom_call.1} parent=11 // pred_region
          %s151 = ssub.s32 12288, 12288
          %152 = vsyncadd [#allocation6], %s151
          %s153 = sshll.u32 [#allocation5], 4
          %s154 = int_to_ptr.vmem [resolvable:$true] %s153
          %159 = dma.hbm_to_vmem [thread:$0]  %s1, 12288, %s154, [#allocation6], 384, 384, 24
        $region16: #{tpu_custom_call.1} parent=11 // pred_fallthru
          _
        // Predicated region
        $region17: #{tpu_custom_call.1} parent=11 // pred_check
          %p160 = pneg %p85
        $region18: #{tpu_custom_call.1} parent=11 // pred_check_branch
          %162 = sbr.rel (%p160) target = $region20
        $region19: #{tpu_custom_call.1} parent=11 // pred_region
          %s164 = ssub.s32 4096, 4096
          %165 = vsyncadd [#allocation6], %s164
          %s166 = sshll.u32 [#allocation7], 4
          %s167 = int_to_ptr.vmem [resolvable:$true] %s166
          %172 = dma.hbm_to_vmem [thread:$0]  %s2, 4096, %s167, [#allocation6], 128, 128, 8
        $region20: #{tpu_custom_call.1} parent=11 // pred_fallthru
          _
        // Predicated region
        $region21: #{tpu_custom_call.1} parent=11 // pred_check
          %p173 = pneg %p106
        $region22: #{tpu_custom_call.1} parent=11 // pred_check_branch
          %175 = sbr.rel (%p173) target = $region24
        $region23: #{tpu_custom_call.1} parent=11 // pred_region
          _
        $region24: #{tpu_custom_call.1} parent=11 // pred_fallthru
          _
      $region12: #{tpu_custom_call.1} parent=5 // pred_fallthru
        _
      %p176 = scmp.lt.s32.totalorder %s17, 2
      // Predicated region
      $region25: #{tpu_custom_call.1} parent=5 // pred_check
        %p177 = pneg %p176
      $region26: #{tpu_custom_call.1} parent=5 // pred_check_branch
        %179 = sbr.rel (%p177) target = $region28
      $region27: #{tpu_custom_call.1} parent=5 // pred_region
        // Predicated region
        $region29: #{tpu_custom_call.1} parent=27 // pred_check
          %p180 = pneg %p37
        $region30: #{tpu_custom_call.1} parent=27 // pred_check_branch
          %182 = sbr.rel (%p180) target = $region32
        $region31: #{tpu_custom_call.1} parent=27 // pred_region
          %s183 = sand.u32 %s27, 1
          %s184 = scalar_lea.sflag [#allocation3], %s183
          %s185 = sand.u32 %s27, 1
          %s186 = smul.addr %s185, 256
          %s187 = scalar_lea.vmem [#allocation2], %s186
          %s189 = ssub.s32 4096, 4096
          %190 = vsyncadd %s184, %s189
          %s191 = smul.addr %s17, 32
          %s192 = smul.addr %s191, 128
          %s193 = scalar_lea.hbm %s0, %s192
          %s194 = sshll.u32 %s187, 4
          %s195 = int_to_ptr.vmem [resolvable:$true] %s194
          %200 = dma.hbm_to_vmem [thread:$0]  %s193, 4096, %s195, %s184, 256, 256, 16
        $region32: #{tpu_custom_call.1} parent=27 // pred_fallthru
          _
      $region28: #{tpu_custom_call.1} parent=5 // pred_fallthru
        _
      %p201 = scmp.le.s32.totalorder 1, %s17
      %p202 = scmp.lt.s32.totalorder %s17, 3
      %p203 = pnand %p201, %p202
      %p204 = pneg %p203
      // Predicated region
      $region33: #{tpu_custom_call.1} parent=5 // pred_check
        _
      $region34: #{tpu_custom_call.1} parent=5 // pred_check_branch
        %206 = sbr.rel (%p203) target = $region36
      $region35: #{tpu_custom_call.1} parent=5 // pred_region
        %s207 = ssub.s32 %s17, 1
        %s208 = sand.u32 %s30, 1
        %s209 = scalar_lea.sflag [#allocation3], %s208
        %s210 = sand.u32 %s30, 1
        %s211 = smul.addr %s210, 256
        %s212 = scalar_lea.vmem [#allocation2], %s211
        // Predicated region
        $region37: #{tpu_custom_call.1} parent=35 // pred_check
          %p213 = pneg %p43
        $region38: #{tpu_custom_call.1} parent=35 // pred_check_branch
          %215 = sbr.rel (%p213) target = $region40
        $region39: #{tpu_custom_call.1} parent=35 // pred_region
          %216 = dma.done %s209, 4096
        $region40: #{tpu_custom_call.1} parent=35 // pred_fallthru
          _
        // Predicated region
        $region41: #{tpu_custom_call.1} parent=35 // pred_check
          %p217 = pneg %p64
        $region42: #{tpu_custom_call.1} parent=35 // pred_check_branch
          %219 = sbr.rel (%p217) target = $region44
        $region43: #{tpu_custom_call.1} parent=35 // pred_region
          %220 = dma.done [#allocation6], 12288
        $region44: #{tpu_custom_call.1} parent=35 // pred_fallthru
          _
        // Predicated region
        $region45: #{tpu_custom_call.1} parent=35 // pred_check
          %p221 = pneg %p85
        $region46: #{tpu_custom_call.1} parent=35 // pred_check_branch
          %223 = sbr.rel (%p221) target = $region48
        $region47: #{tpu_custom_call.1} parent=35 // pred_region
          %224 = dma.done [#allocation6], 4096
        $region48: #{tpu_custom_call.1} parent=35 // pred_fallthru
          _
        %s225 = sand.u32 %s30, 1
        %s226 = scalar_lea.sflag [#allocation3], %s225
        %s227 = sand.u32 %s30, 1
        %s228 = smul.addr %s227, 256
        %s229 = scalar_lea.vmem [#allocation2], %s228
        %p230 = pneg %p43
        %p231 = pneg %p40
        %p232 = pneg %p64
        %p233 = pneg %p61
        %p234 = pneg %p85
        %p235 = pneg %p82
        %p236 = pneg %p106
        %p237 = pneg %p103
        %p238 = pneg %p132
        %p239 = pneg %p129
        %s240 = sand.u32 %s119, 1
        %s241 = scalar_lea.sflag [#allocation4], %s240
        %s242 = sand.u32 %s119, 1
        %s243 = smul.addr %s242, 256
        %s244 = scalar_lea.vmem [#allocation8], %s243
        %v246 = vld [vmem:[%s212] sm:$0xff]
        %v247 = vld [vmem:[%s212 + $0x8] sm:$0xff]
        %v248 = vld [vmem:[%s212 + $0x10] sm:$0xff]
        %v249 = vld [vmem:[%s212 + $0x18] sm:$0xff]
        %v250 = vld [vmem:[%s212 + $0x20] sm:$0xff]
        %v251 = vld [vmem:[%s212 + $0x28] sm:$0xff]
        %v252 = vld [vmem:[%s212 + $0x30] sm:$0xff]
        %v253 = vld [vmem:[%s212 + $0x38] sm:$0xff]
        %v254 = vld [vmem:[%s212 + $0x40] sm:$0xff]
        %v255 = vld [vmem:[%s212 + $0x48] sm:$0xff]
        %v256 = vld [vmem:[%s212 + $0x50] sm:$0xff]
        %v257 = vld [vmem:[%s212 + $0x58] sm:$0xff]
        %v258 = vld [vmem:[%s212 + $0x60] sm:$0xff]
        %v259 = vld [vmem:[%s212 + $0x68] sm:$0xff]
        %v260 = vld [vmem:[%s212 + $0x70] sm:$0xff]
        %v261 = vld [vmem:[%s212 + $0x78] sm:$0xff]
        %v262 = vld [vmem:[%s212 + $0x80] sm:$0xff]
        %v263 = vld [vmem:[%s212 + $0x88] sm:$0xff]
        %v264 = vld [vmem:[%s212 + $0x90] sm:$0xff]
        %v265 = vld [vmem:[%s212 + $0x98] sm:$0xff]
        %v266 = vld [vmem:[%s212 + $0xa0] sm:$0xff]
        %v267 = vld [vmem:[%s212 + $0xa8] sm:$0xff]
        %v268 = vld [vmem:[%s212 + $0xb0] sm:$0xff]
        %v269 = vld [vmem:[%s212 + $0xb8] sm:$0xff]
        %v270 = vld [vmem:[%s212 + $0xc0] sm:$0xff]
        %v271 = vld [vmem:[%s212 + $0xc8] sm:$0xff]
        %v272 = vld [vmem:[%s212 + $0xd0] sm:$0xff]
        %v273 = vld [vmem:[%s212 + $0xd8] sm:$0xff]
        %v274 = vld [vmem:[%s212 + $0xe0] sm:$0xff]
        %v275 = vld [vmem:[%s212 + $0xe8] sm:$0xff]
        %v276 = vld [vmem:[%s212 + $0xf0] sm:$0xff]
        %v277 = vld [vmem:[%s212 + $0xf8] sm:$0xff]
        %v278 = vpack.c.bf16 %v248, %v246
        %v279 = vpack.c.bf16 %v249, %v247
        %v280 = vpack.c.bf16 %v252, %v250
        %v281 = vpack.c.bf16 %v253, %v251
        %v282 = vpack.c.bf16 %v256, %v254
        %v283 = vpack.c.bf16 %v257, %v255
        %v284 = vpack.c.bf16 %v260, %v258
        %v285 = vpack.c.bf16 %v261, %v259
        %v286 = vpack.c.bf16 %v264, %v262
        %v287 = vpack.c.bf16 %v265, %v263
        %v288 = vpack.c.bf16 %v268, %v266
        %v289 = vpack.c.bf16 %v269, %v267
        %v290 = vpack.c.bf16 %v272, %v270
        %v291 = vpack.c.bf16 %v273, %v271
        %v292 = vpack.c.bf16 %v276, %v274
        %v293 = vpack.c.bf16 %v277, %v275
        %v294 = vld [vmem:[#allocation5] sm:$0xff]
        %v295 = vld [vmem:[#allocation5 + $0x8] sm:$0xff]
        %v296 = vld [vmem:[#allocation5 + $0x10] sm:$0xff]
        %v297 = vld [vmem:[#allocation5 + $0x18] sm:$0xff]
        %v298 = vld [vmem:[#allocation5 + $0x20] sm:$0xff]
        %v299 = vld [vmem:[#allocation5 + $0x28] sm:$0xff]
        %v300 = vld [vmem:[#allocation5 + $0x30] sm:$0xff]
        %v301 = vld [vmem:[#allocation5 + $0x38] sm:$0xff]
        %v302 = vld [vmem:[#allocation5 + $0x40] sm:$0xff]
        %v303 = vld [vmem:[#allocation5 + $0x48] sm:$0xff]
        %v304 = vld [vmem:[#allocation5 + $0x50] sm:$0xff]
        %v305 = vld [vmem:[#allocation5 + $0x58] sm:$0xff]
        %v306 = vld [vmem:[#allocation5 + $0x60] sm:$0xff]
        %v307 = vld [vmem:[#allocation5 + $0x68] sm:$0xff]
        %v308 = vld [vmem:[#allocation5 + $0x70] sm:$0xff]
        %v309 = vld [vmem:[#allocation5 + $0x78] sm:$0xff]
        %v310 = vld [vmem:[#allocation5 + $0x80] sm:$0xff]
        %v311 = vld [vmem:[#allocation5 + $0x88] sm:$0xff]
        %v312 = vld [vmem:[#allocation5 + $0x90] sm:$0xff]
        %v313 = vld [vmem:[#allocation5 + $0x98] sm:$0xff]
        %v314 = vld [vmem:[#allocation5 + $0xa0] sm:$0xff]
        %v315 = vld [vmem:[#allocation5 + $0xa8] sm:$0xff]
        %v316 = vld [vmem:[#allocation5 + $0xb0] sm:$0xff]
        %v317 = vld [vmem:[#allocation5 + $0xb8] sm:$0xff]
        %v318 = vld [vmem:[#allocation5 + $0xc0] sm:$0xff]
        %v319 = vld [vmem:[#allocation5 + $0xc8] sm:$0xff]
        %v320 = vld [vmem:[#allocation5 + $0xd0] sm:$0xff]
        %v321 = vld [vmem:[#allocation5 + $0xd8] sm:$0xff]
        %v322 = vld [vmem:[#allocation5 + $0xe0] sm:$0xff]
        %v323 = vld [vmem:[#allocation5 + $0xe8] sm:$0xff]
        %v324 = vld [vmem:[#allocation5 + $0xf0] sm:$0xff]
        %v325 = vld [vmem:[#allocation5 + $0xf8] sm:$0xff]
        %v326 = vld [vmem:[#allocation5 + $0x100] sm:$0xff]
        %v327 = vld [vmem:[#allocation5 + $0x108] sm:$0xff]
        %v328 = vld [vmem:[#allocation5 + $0x110] sm:$0xff]
        %v329 = vld [vmem:[#allocation5 + $0x118] sm:$0xff]
        %v330 = vld [vmem:[#allocation5 + $0x120] sm:$0xff]
        %v331 = vld [vmem:[#allocation5 + $0x128] sm:$0xff]
        %v332 = vld [vmem:[#allocation5 + $0x130] sm:$0xff]
        %v333 = vld [vmem:[#allocation5 + $0x138] sm:$0xff]
        %v334 = vld [vmem:[#allocation5 + $0x140] sm:$0xff]
        %v335 = vld [vmem:[#allocation5 + $0x148] sm:$0xff]
        %v336 = vld [vmem:[#allocation5 + $0x150] sm:$0xff]
        %v337 = vld [vmem:[#allocation5 + $0x158] sm:$0xff]
        %v338 = vld [vmem:[#allocation5 + $0x160] sm:$0xff]
        %v339 = vld [vmem:[#allocation5 + $0x168] sm:$0xff]
        %v340 = vld [vmem:[#allocation5 + $0x170] sm:$0xff]
        %v341 = vld [vmem:[#allocation5 + $0x178] sm:$0xff]
        %v342 = vld [vmem:[#allocation5 + $0x180] sm:$0xff]
        %v343 = vld [vmem:[#allocation5 + $0x188] sm:$0xff]
        %v344 = vld [vmem:[#allocation5 + $0x190] sm:$0xff]
        %v345 = vld [vmem:[#allocation5 + $0x198] sm:$0xff]
        %v346 = vld [vmem:[#allocation5 + $0x1a0] sm:$0xff]
        %v347 = vld [vmem:[#allocation5 + $0x1a8] sm:$0xff]
        %v348 = vld [vmem:[#allocation5 + $0x1b0] sm:$0xff]
        %v349 = vld [vmem:[#allocation5 + $0x1b8] sm:$0xff]
        %v350 = vld [vmem:[#allocation5 + $0x1c0] sm:$0xff]
        %v351 = vld [vmem:[#allocation5 + $0x1c8] sm:$0xff]
        %v352 = vld [vmem:[#allocation5 + $0x1d0] sm:$0xff]
        %v353 = vld [vmem:[#allocation5 + $0x1d8] sm:$0xff]
        %v354 = vld [vmem:[#allocation5 + $0x1e0] sm:$0xff]
        %v355 = vld [vmem:[#allocation5 + $0x1e8] sm:$0xff]
        %v356 = vld [vmem:[#allocation5 + $0x1f0] sm:$0xff]
        %v357 = vld [vmem:[#allocation5 + $0x1f8] sm:$0xff]
        %v358 = vld [vmem:[#allocation5 + $0x200] sm:$0xff]
        %v359 = vld [vmem:[#allocation5 + $0x208] sm:$0xff]
        %v360 = vld [vmem:[#allocation5 + $0x210] sm:$0xff]
        %v361 = vld [vmem:[#allocation5 + $0x218] sm:$0xff]
        %v362 = vld [vmem:[#allocation5 + $0x220] sm:$0xff]
        %v363 = vld [vmem:[#allocation5 + $0x228] sm:$0xff]
        %v364 = vld [vmem:[#allocation5 + $0x230] sm:$0xff]
        %v365 = vld [vmem:[#allocation5 + $0x238] sm:$0xff]
        %v366 = vld [vmem:[#allocation5 + $0x240] sm:$0xff]
        %v367 = vld [vmem:[#allocation5 + $0x248] sm:$0xff]
        %v368 = vld [vmem:[#allocation5 + $0x250] sm:$0xff]
        %v369 = vld [vmem:[#allocation5 + $0x258] sm:$0xff]
        %v370 = vld [vmem:[#allocation5 + $0x260] sm:$0xff]
        %v371 = vld [vmem:[#allocation5 + $0x268] sm:$0xff]
        %v372 = vld [vmem:[#allocation5 + $0x270] sm:$0xff]
        %v373 = vld [vmem:[#allocation5 + $0x278] sm:$0xff]
        %v374 = vld [vmem:[#allocation5 + $0x280] sm:$0xff]
        %v375 = vld [vmem:[#allocation5 + $0x288] sm:$0xff]
        %v376 = vld [vmem:[#allocation5 + $0x290] sm:$0xff]
        %v377 = vld [vmem:[#allocation5 + $0x298] sm:$0xff]
        %v378 = vld [vmem:[#allocation5 + $0x2a0] sm:$0xff]
        %v379 = vld [vmem:[#allocation5 + $0x2a8] sm:$0xff]
        %v380 = vld [vmem:[#allocation5 + $0x2b0] sm:$0xff]
        %v381 = vld [vmem:[#allocation5 + $0x2b8] sm:$0xff]
        %v382 = vld [vmem:[#allocation5 + $0x2c0] sm:$0xff]
        %v383 = vld [vmem:[#allocation5 + $0x2c8] sm:$0xff]
        %v384 = vld [vmem:[#allocation5 + $0x2d0] sm:$0xff]
        %v385 = vld [vmem:[#allocation5 + $0x2d8] sm:$0xff]
        %v386 = vld [vmem:[#allocation5 + $0x2e0] sm:$0xff]
        %v387 = vld [vmem:[#allocation5 + $0x2e8] sm:$0xff]
        %v388 = vld [vmem:[#allocation5 + $0x2f0] sm:$0xff]
        %v389 = vld [vmem:[#allocation5 + $0x2f8] sm:$0xff]
        %v486 = vunpack.c.l.b16 %v294
        %v487 = vunpack.c.h.b16 %v294
        %v488 = vunpack.c.l.b16 %v295
        %v489 = vunpack.c.h.b16 %v295
        %v490 = vunpack.c.l.b16 %v296
        %v491 = vunpack.c.h.b16 %v296
        %v492 = vunpack.c.l.b16 %v297
        %v493 = vunpack.c.h.b16 %v297
        %v494 = vunpack.c.l.b16 %v298
        %v495 = vunpack.c.h.b16 %v298
        %v496 = vunpack.c.l.b16 %v299
        %v497 = vunpack.c.h.b16 %v299
        %v498 = vunpack.c.l.b16 %v300
        %v499 = vunpack.c.h.b16 %v300
        %v500 = vunpack.c.l.b16 %v301
        %v501 = vunpack.c.h.b16 %v301
        %v502 = vunpack.c.l.b16 %v302
        %v503 = vunpack.c.h.b16 %v302
        %v504 = vunpack.c.l.b16 %v303
        %v505 = vunpack.c.h.b16 %v303
        %v506 = vunpack.c.l.b16 %v304
        %v507 = vunpack.c.h.b16 %v304
        %v508 = vunpack.c.l.b16 %v305
        %v509 = vunpack.c.h.b16 %v305
        %v510 = vunpack.c.l.b16 %v306
        %v511 = vunpack.c.h.b16 %v306
        %v512 = vunpack.c.l.b16 %v307
        %v513 = vunpack.c.h.b16 %v307
        %v514 = vunpack.c.l.b16 %v308
        %v515 = vunpack.c.h.b16 %v308
        %v516 = vunpack.c.l.b16 %v309
        %v517 = vunpack.c.h.b16 %v309
        %v518 = vunpack.c.l.b16 %v310
        %v519 = vunpack.c.h.b16 %v310
        %v520 = vunpack.c.l.b16 %v311
        %v521 = vunpack.c.h.b16 %v311
        %v522 = vunpack.c.l.b16 %v312
        %v523 = vunpack.c.h.b16 %v312
        %v524 = vunpack.c.l.b16 %v313
        %v525 = vunpack.c.h.b16 %v313
        %v526 = vunpack.c.l.b16 %v314
        %v527 = vunpack.c.h.b16 %v314
        %v528 = vunpack.c.l.b16 %v315
        %v529 = vunpack.c.h.b16 %v315
        %v530 = vunpack.c.l.b16 %v316
        %v531 = vunpack.c.h.b16 %v316
        %v532 = vunpack.c.l.b16 %v317
        %v533 = vunpack.c.h.b16 %v317
        %v534 = vunpack.c.l.b16 %v318
        %v535 = vunpack.c.h.b16 %v318
        %v536 = vunpack.c.l.b16 %v319
        %v537 = vunpack.c.h.b16 %v319
        %v538 = vunpack.c.l.b16 %v320
        %v539 = vunpack.c.h.b16 %v320
        %v540 = vunpack.c.l.b16 %v321
        %v541 = vunpack.c.h.b16 %v321
        %v542 = vunpack.c.l.b16 %v322
        %v543 = vunpack.c.h.b16 %v322
        %v544 = vunpack.c.l.b16 %v323
        %v545 = vunpack.c.h.b16 %v323
        %v546 = vunpack.c.l.b16 %v324
        %v547 = vunpack.c.h.b16 %v324
        %v548 = vunpack.c.l.b16 %v325
        %v549 = vunpack.c.h.b16 %v325
        %v550 = vunpack.c.l.b16 %v326
        %v551 = vunpack.c.h.b16 %v326
        %v552 = vunpack.c.l.b16 %v327
        %v553 = vunpack.c.h.b16 %v327
        %v554 = vunpack.c.l.b16 %v328
        %v555 = vunpack.c.h.b16 %v328
        %v556 = vunpack.c.l.b16 %v329
        %v557 = vunpack.c.h.b16 %v329
        %v558 = vunpack.c.l.b16 %v330
        %v559 = vunpack.c.h.b16 %v330
        %v560 = vunpack.c.l.b16 %v331
        %v561 = vunpack.c.h.b16 %v331
        %v562 = vunpack.c.l.b16 %v332
        %v563 = vunpack.c.h.b16 %v332
        %v564 = vunpack.c.l.b16 %v333
        %v565 = vunpack.c.h.b16 %v333
        %v566 = vunpack.c.l.b16 %v334
        %v567 = vunpack.c.h.b16 %v334
        %v568 = vunpack.c.l.b16 %v335
        %v569 = vunpack.c.h.b16 %v335
        %v570 = vunpack.c.l.b16 %v336
        %v571 = vunpack.c.h.b16 %v336
        %v572 = vunpack.c.l.b16 %v337
        %v573 = vunpack.c.h.b16 %v337
        %v574 = vunpack.c.l.b16 %v338
        %v575 = vunpack.c.h.b16 %v338
        %v576 = vunpack.c.l.b16 %v339
        %v577 = vunpack.c.h.b16 %v339
        %v578 = vunpack.c.l.b16 %v340
        %v579 = vunpack.c.h.b16 %v340
        %v580 = vunpack.c.l.b16 %v341
        %v581 = vunpack.c.h.b16 %v341
        %v582 = vunpack.c.l.b16 %v342
        %v583 = vunpack.c.h.b16 %v342
        %v584 = vunpack.c.l.b16 %v343
        %v585 = vunpack.c.h.b16 %v343
        %v586 = vunpack.c.l.b16 %v344
        %v587 = vunpack.c.h.b16 %v344
        %v588 = vunpack.c.l.b16 %v345
        %v589 = vunpack.c.h.b16 %v345
        %v590 = vunpack.c.l.b16 %v346
        %v591 = vunpack.c.h.b16 %v346
        %v592 = vunpack.c.l.b16 %v347
        %v593 = vunpack.c.h.b16 %v347
        %v594 = vunpack.c.l.b16 %v348
        %v595 = vunpack.c.h.b16 %v348
        %v596 = vunpack.c.l.b16 %v349
        %v597 = vunpack.c.h.b16 %v349
        %v598 = vunpack.c.l.b16 %v350
        %v599 = vunpack.c.h.b16 %v350
        %v600 = vunpack.c.l.b16 %v351
        %v601 = vunpack.c.h.b16 %v351
        %v602 = vunpack.c.l.b16 %v352
        %v603 = vunpack.c.h.b16 %v352
        %v604 = vunpack.c.l.b16 %v353
        %v605 = vunpack.c.h.b16 %v353
        %v606 = vunpack.c.l.b16 %v354
        %v607 = vunpack.c.h.b16 %v354
        %v608 = vunpack.c.l.b16 %v355
        %v609 = vunpack.c.h.b16 %v355
        %v610 = vunpack.c.l.b16 %v356
        %v611 = vunpack.c.h.b16 %v356
        %v612 = vunpack.c.l.b16 %v357
        %v613 = vunpack.c.h.b16 %v357
        %v614 = vunpack.c.l.b16 %v358
        %v615 = vunpack.c.h.b16 %v358
        %v616 = vunpack.c.l.b16 %v359
        %v617 = vunpack.c.h.b16 %v359
        %v618 = vunpack.c.l.b16 %v360
        %v619 = vunpack.c.h.b16 %v360
        %v620 = vunpack.c.l.b16 %v361
        %v621 = vunpack.c.h.b16 %v361
        %v622 = vunpack.c.l.b16 %v362
        %v623 = vunpack.c.h.b16 %v362
        %v624 = vunpack.c.l.b16 %v363
        %v625 = vunpack.c.h.b16 %v363
        %v626 = vunpack.c.l.b16 %v364
        %v627 = vunpack.c.h.b16 %v364
        %v628 = vunpack.c.l.b16 %v365
        %v629 = vunpack.c.h.b16 %v365
        %v630 = vunpack.c.l.b16 %v366
        %v631 = vunpack.c.h.b16 %v366
        %v632 = vunpack.c.l.b16 %v367
        %v633 = vunpack.c.h.b16 %v367
        %v634 = vunpack.c.l.b16 %v368
        %v635 = vunpack.c.h.b16 %v368
        %v636 = vunpack.c.l.b16 %v369
        %v637 = vunpack.c.h.b16 %v369
        %v638 = vunpack.c.l.b16 %v370
        %v639 = vunpack.c.h.b16 %v370
        %v640 = vunpack.c.l.b16 %v371
        %v641 = vunpack.c.h.b16 %v371
        %v642 = vunpack.c.l.b16 %v372
        %v643 = vunpack.c.h.b16 %v372
        %v644 = vunpack.c.l.b16 %v373
        %v645 = vunpack.c.h.b16 %v373
        %v646 = vunpack.c.l.b16 %v374
        %v647 = vunpack.c.h.b16 %v374
        %v648 = vunpack.c.l.b16 %v375
        %v649 = vunpack.c.h.b16 %v375
        %v650 = vunpack.c.l.b16 %v376
        %v651 = vunpack.c.h.b16 %v376
        %v652 = vunpack.c.l.b16 %v377
        %v653 = vunpack.c.h.b16 %v377
        %v654 = vunpack.c.l.b16 %v378
        %v655 = vunpack.c.h.b16 %v378
        %v656 = vunpack.c.l.b16 %v379
        %v657 = vunpack.c.h.b16 %v379
        %v658 = vunpack.c.l.b16 %v380
        %v659 = vunpack.c.h.b16 %v380
        %v660 = vunpack.c.l.b16 %v381
        %v661 = vunpack.c.h.b16 %v381
        %v662 = vunpack.c.l.b16 %v382
        %v663 = vunpack.c.h.b16 %v382
        %v664 = vunpack.c.l.b16 %v383
        %v665 = vunpack.c.h.b16 %v383
        %v666 = vunpack.c.l.b16 %v384
        %v667 = vunpack.c.h.b16 %v384
        %v668 = vunpack.c.l.b16 %v385
        %v669 = vunpack.c.h.b16 %v385
        %v670 = vunpack.c.l.b16 %v386
        %v671 = vunpack.c.h.b16 %v386
        %v672 = vunpack.c.l.b16 %v387
        %v673 = vunpack.c.h.b16 %v387
        %v674 = vunpack.c.l.b16 %v388
        %v675 = vunpack.c.h.b16 %v388
        %v676 = vunpack.c.l.b16 %v389
        %v677 = vunpack.c.h.b16 %v389
        %v678 = vpack.c.b16 %v492, %v486
        %v679 = vpack.c.b16 %v493, %v487
        %v680 = vpack.c.b16 %v494, %v488
        %v681 = vpack.c.b16 %v495, %v489
        %v682 = vpack.c.b16 %v496, %v490
        %v683 = vpack.c.b16 %v497, %v491
        %v684 = vpack.c.b16 %v504, %v498
        %v685 = vpack.c.b16 %v505, %v499
        %v686 = vpack.c.b16 %v506, %v500
        %v687 = vpack.c.b16 %v507, %v501
        %v688 = vpack.c.b16 %v508, %v502
        %v689 = vpack.c.b16 %v509, %v503
        %v690 = vpack.c.b16 %v516, %v510
        %v691 = vpack.c.b16 %v517, %v511
        %v692 = vpack.c.b16 %v518, %v512
        %v693 = vpack.c.b16 %v519, %v513
        %v694 = vpack.c.b16 %v520, %v514
        %v695 = vpack.c.b16 %v521, %v515
        %v696 = vpack.c.b16 %v528, %v522
        %v697 = vpack.c.b16 %v529, %v523
        %v698 = vpack.c.b16 %v530, %v524
        %v699 = vpack.c.b16 %v531, %v525
        %v700 = vpack.c.b16 %v532, %v526
        %v701 = vpack.c.b16 %v533, %v527
        %v702 = vpack.c.b16 %v540, %v534
        %v703 = vpack.c.b16 %v541, %v535
        %v704 = vpack.c.b16 %v542, %v536
        %v705 = vpack.c.b16 %v543, %v537
        %v706 = vpack.c.b16 %v544, %v538
        %v707 = vpack.c.b16 %v545, %v539
        %v708 = vpack.c.b16 %v552, %v546
        %v709 = vpack.c.b16 %v553, %v547
        %v710 = vpack.c.b16 %v554, %v548
        %v711 = vpack.c.b16 %v555, %v549
        %v712 = vpack.c.b16 %v556, %v550
        %v713 = vpack.c.b16 %v557, %v551
        %v714 = vpack.c.b16 %v564, %v558
        %v715 = vpack.c.b16 %v565, %v559
        %v716 = vpack.c.b16 %v566, %v560
        %v717 = vpack.c.b16 %v567, %v561
        %v718 = vpack.c.b16 %v568, %v562
        %v719 = vpack.c.b16 %v569, %v563
        %v720 = vpack.c.b16 %v576, %v570
        %v721 = vpack.c.b16 %v577, %v571
        %v722 = vpack.c.b16 %v578, %v572
        %v723 = vpack.c.b16 %v579, %v573
        %v724 = vpack.c.b16 %v580, %v574
        %v725 = vpack.c.b16 %v581, %v575
        %v726 = vpack.c.b16 %v588, %v582
        %v727 = vpack.c.b16 %v589, %v583
        %v728 = vpack.c.b16 %v590, %v584
        %v729 = vpack.c.b16 %v591, %v585
        %v730 = vpack.c.b16 %v592, %v586
        %v731 = vpack.c.b16 %v593, %v587
        %v732 = vpack.c.b16 %v600, %v594
        %v733 = vpack.c.b16 %v601, %v595
        %v734 = vpack.c.b16 %v602, %v596
        %v735 = vpack.c.b16 %v603, %v597
        %v736 = vpack.c.b16 %v604, %v598
        %v737 = vpack.c.b16 %v605, %v599
        %v738 = vpack.c.b16 %v612, %v606
        %v739 = vpack.c.b16 %v613, %v607
        %v740 = vpack.c.b16 %v614, %v608
        %v741 = vpack.c.b16 %v615, %v609
        %v742 = vpack.c.b16 %v616, %v610
        %v743 = vpack.c.b16 %v617, %v611
        %v744 = vpack.c.b16 %v624, %v618
        %v745 = vpack.c.b16 %v625, %v619
        %v746 = vpack.c.b16 %v626, %v620
        %v747 = vpack.c.b16 %v627, %v621
        %v748 = vpack.c.b16 %v628, %v622
        %v749 = vpack.c.b16 %v629, %v623
        %v750 = vpack.c.b16 %v636, %v630
        %v751 = vpack.c.b16 %v637, %v631
        %v752 = vpack.c.b16 %v638, %v632
        %v753 = vpack.c.b16 %v639, %v633
        %v754 = vpack.c.b16 %v640, %v634
        %v755 = vpack.c.b16 %v641, %v635
        %v756 = vpack.c.b16 %v648, %v642
        %v757 = vpack.c.b16 %v649, %v643
        %v758 = vpack.c.b16 %v650, %v644
        %v759 = vpack.c.b16 %v651, %v645
        %v760 = vpack.c.b16 %v652, %v646
        %v761 = vpack.c.b16 %v653, %v647
        %v762 = vpack.c.b16 %v660, %v654
        %v763 = vpack.c.b16 %v661, %v655
        %v764 = vpack.c.b16 %v662, %v656
        %v765 = vpack.c.b16 %v663, %v657
        %v766 = vpack.c.b16 %v664, %v658
        %v767 = vpack.c.b16 %v665, %v659
        %v768 = vpack.c.b16 %v672, %v666
        %v769 = vpack.c.b16 %v673, %v667
        %v770 = vpack.c.b16 %v674, %v668
        %v771 = vpack.c.b16 %v675, %v669
        %v772 = vpack.c.b16 %v676, %v670
        %v773 = vpack.c.b16 %v677, %v671
        %870 = vmatprep.subr.bf16.mxu0 %v721
        %871 = vmatpush1.bf16.msra.mxu0 %v720
        %872 = vmatprep.subr.bf16.mxu0 %v715
        %873 = vmatpush1.bf16.msra.mxu0 %v714
        %874 = vmatprep.subr.bf16.mxu0 %v709
        %875 = vmatpush1.bf16.msra.mxu0 %v708
        %876 = vmatprep.subr.bf16.mxu0 %v703
        %877 = vmatpush1.bf16.msra.mxu0 %v702
        %878 = vmatprep.subr.bf16.mxu0 %v697
        %879 = vmatpush1.bf16.msra.mxu0 %v696
        %880 = vmatprep.subr.bf16.mxu0 %v691
        %881 = vmatpush1.bf16.msra.mxu0 %v690
        %882 = vmatprep.subr.bf16.mxu0 %v685
        %883 = vmatpush1.bf16.msra.mxu0 %v684
        %884 = vmatprep.subr.bf16.mxu0 %v679
        %885 = vmatpush1.bf16.msra.mxu0 %v678
        %886 = vmatprep.subr.bf16.mxu0 %v769
        %887 = vmatpush2.bf16.msra.mxu0 %v768
        %888 = vmatprep.subr.bf16.mxu0 %v763
        %889 = vmatpush2.bf16.msra.mxu0 %v762
        %890 = vmatprep.subr.bf16.mxu0 %v757
        %891 = vmatpush2.bf16.msra.mxu0 %v756
        %892 = vmatprep.subr.bf16.mxu0 %v751
        %893 = vmatpush2.bf16.msra.mxu0 %v750
        %894 = vmatprep.subr.bf16.mxu0 %v745
        %895 = vmatpush2.bf16.msra.mxu0 %v744
        %896 = vmatprep.subr.bf16.mxu0 %v739
        %897 = vmatpush2.bf16.msra.mxu0 %v738
        %898 = vmatprep.subr.bf16.mxu0 %v733
        %899 = vmatpush2.bf16.msra.mxu0 %v732
        %900 = vmatprep.subr.bf16.mxu0 %v727
        %901 = vmatpush2.bf16.msra.mxu0 %v726
        %902 = vmatprep.mubr.bf16.mxu0 %v279
        %903 = vmatmul.mubr.bf16.gmra.mxu0 %v278
        %v904 = vpop.f32.mrf.mxu0
        %v905 = vadd.f32 0.0, %v904
        %v906 = vpop.f32.mrf.mxu0
        %v907 = vadd.f32 0.0, %v906
        %v908 = vpop.f32.mrf.mxu0
        %v909 = vadd.f32 0.0, %v908
        %v910 = vpop.f32.mrf.mxu0
        %v911 = vadd.f32 0.0, %v910
        %912 = vmatprep.mubr.bf16.mxu0 %v281
        %913 = vmatmul.mubr.bf16.gmra.mxu0 %v280
        %v914 = vpop.f32.mrf.mxu0
        %v915 = vadd.f32 0.0, %v914
        %v916 = vpop.f32.mrf.mxu0
        %v917 = vadd.f32 0.0, %v916
        %v918 = vpop.f32.mrf.mxu0
        %v919 = vadd.f32 0.0, %v918
        %v920 = vpop.f32.mrf.mxu0
        %v921 = vadd.f32 0.0, %v920
        %922 = vmatprep.mubr.bf16.mxu0 %v283
        %923 = vmatmul.mubr.bf16.gmra.mxu0 %v282
        %v924 = vpop.f32.mrf.mxu0
        %v925 = vadd.f32 0.0, %v924
        %v926 = vpop.f32.mrf.mxu0
        %v927 = vadd.f32 0.0, %v926
        %v928 = vpop.f32.mrf.mxu0
        %v929 = vadd.f32 0.0, %v928
        %v930 = vpop.f32.mrf.mxu0
        %v931 = vadd.f32 0.0, %v930
        %932 = vmatprep.mubr.bf16.mxu0 %v285
        %933 = vmatmul.mubr.bf16.gmra.mxu0 %v284
        %v934 = vpop.f32.mrf.mxu0
        %v935 = vadd.f32 0.0, %v934
        %v936 = vpop.f32.mrf.mxu0
        %v937 = vadd.f32 0.0, %v936
        %v938 = vpop.f32.mrf.mxu0
        %v939 = vadd.f32 0.0, %v938
        %v940 = vpop.f32.mrf.mxu0
        %v941 = vadd.f32 0.0, %v940
        %942 = vmatprep.mubr.bf16.mxu0 %v287
        %943 = vmatmul.mubr.bf16.gmra.mxu0 %v286
        %v944 = vpop.f32.mrf.mxu0
        %v945 = vadd.f32 0.0, %v944
        %v946 = vpop.f32.mrf.mxu0
        %v947 = vadd.f32 0.0, %v946
        %v948 = vpop.f32.mrf.mxu0
        %v949 = vadd.f32 0.0, %v948
        %v950 = vpop.f32.mrf.mxu0
        %v951 = vadd.f32 0.0, %v950
        %952 = vmatprep.mubr.bf16.mxu0 %v289
        %953 = vmatmul.mubr.bf16.gmra.mxu0 %v288
        %v954 = vpop.f32.mrf.mxu0
        %v955 = vadd.f32 0.0, %v954
        %v956 = vpop.f32.mrf.mxu0
        %v957 = vadd.f32 0.0, %v956
        %v958 = vpop.f32.mrf.mxu0
        %v959 = vadd.f32 0.0, %v958
        %v960 = vpop.f32.mrf.mxu0
        %v961 = vadd.f32 0.0, %v960
        %962 = vmatprep.mubr.bf16.mxu0 %v291
        %963 = vmatmul.mubr.bf16.gmra.mxu0 %v290
        %v964 = vpop.f32.mrf.mxu0
        %v965 = vadd.f32 0.0, %v964
        %v966 = vpop.f32.mrf.mxu0
        %v967 = vadd.f32 0.0, %v966
        %v968 = vpop.f32.mrf.mxu0
        %v969 = vadd.f32 0.0, %v968
        %v970 = vpop.f32.mrf.mxu0
        %v971 = vadd.f32 0.0, %v970
        %972 = vmatprep.mubr.bf16.mxu0 %v293
        %973 = vmatmul.mubr.bf16.gmra.mxu0 %v292
        %v974 = vpop.f32.mrf.mxu0
        %v975 = vadd.f32 0.0, %v974
        %v976 = vpop.f32.mrf.mxu0
        %v977 = vadd.f32 0.0, %v976
        %v978 = vpop.f32.mrf.mxu0
        %v979 = vadd.f32 0.0, %v978
        %v980 = vpop.f32.mrf.mxu0
        %v981 = vadd.f32 0.0, %v980
        %982 = vdwg.mxu0
        %983 = vmatprep.subr.bf16.mxu0 %v723
        %984 = vmatpush1.bf16.msra.mxu0 %v722
        %985 = vmatprep.subr.bf16.mxu0 %v717
        %986 = vmatpush1.bf16.msra.mxu0 %v716
        %987 = vmatprep.subr.bf16.mxu0 %v711
        %988 = vmatpush1.bf16.msra.mxu0 %v710
        %989 = vmatprep.subr.bf16.mxu0 %v705
        %990 = vmatpush1.bf16.msra.mxu0 %v704
        %991 = vmatprep.subr.bf16.mxu0 %v699
        %992 = vmatpush1.bf16.msra.mxu0 %v698
        %993 = vmatprep.subr.bf16.mxu0 %v693
        %994 = vmatpush1.bf16.msra.mxu0 %v692
        %995 = vmatprep.subr.bf16.mxu0 %v687
        %996 = vmatpush1.bf16.msra.mxu0 %v686
        %997 = vmatprep.subr.bf16.mxu0 %v681
        %998 = vmatpush1.bf16.msra.mxu0 %v680
        %999 = vmatprep.subr.bf16.mxu0 %v771
        %1000 = vmatpush2.bf16.msra.mxu0 %v770
        %1001 = vmatprep.subr.bf16.mxu0 %v765
        %1002 = vmatpush2.bf16.msra.mxu0 %v764
        %1003 = vmatprep.subr.bf16.mxu0 %v759
        %1004 = vmatpush2.bf16.msra.mxu0 %v758
        %1005 = vmatprep.subr.bf16.mxu0 %v753
        %1006 = vmatpush2.bf16.msra.mxu0 %v752
        %1007 = vmatprep.subr.bf16.mxu0 %v747
        %1008 = vmatpush2.bf16.msra.mxu0 %v746
        %1009 = vmatprep.subr.bf16.mxu0 %v741
        %1010 = vmatpush2.bf16.msra.mxu0 %v740
        %1011 = vmatprep.subr.bf16.mxu0 %v735
        %1012 = vmatpush2.bf16.msra.mxu0 %v734
        %1013 = vmatprep.subr.bf16.mxu0 %v729
        %1014 = vmatpush2.bf16.msra.mxu0 %v728
        %1015 = vmatprep.mubr.bf16.mxu0 %v279
        %1016 = vmatmul.mubr.bf16.gmra.mxu0 %v278
        %v1017 = vpop.f32.mrf.mxu0
        %v1018 = vadd.f32 0.0, %v1017
        %v1019 = vpop.f32.mrf.mxu0
        %v1020 = vadd.f32 0.0, %v1019
        %v1021 = vpop.f32.mrf.mxu0
        %v1022 = vadd.f32 0.0, %v1021
        %v1023 = vpop.f32.mrf.mxu0
        %v1024 = vadd.f32 0.0, %v1023
        %1025 = vmatprep.mubr.bf16.mxu0 %v281
        %1026 = vmatmul.mubr.bf16.gmra.mxu0 %v280
        %v1027 = vpop.f32.mrf.mxu0
        %v1028 = vadd.f32 0.0, %v1027
        %v1029 = vpop.f32.mrf.mxu0
        %v1030 = vadd.f32 0.0, %v1029
        %v1031 = vpop.f32.mrf.mxu0
        %v1032 = vadd.f32 0.0, %v1031
        %v1033 = vpop.f32.mrf.mxu0
        %v1034 = vadd.f32 0.0, %v1033
        %1035 = vmatprep.mubr.bf16.mxu0 %v283
        %1036 = vmatmul.mubr.bf16.gmra.mxu0 %v282
        %v1037 = vpop.f32.mrf.mxu0
        %v1038 = vadd.f32 0.0, %v1037
        %v1039 = vpop.f32.mrf.mxu0
        %v1040 = vadd.f32 0.0, %v1039
        %v1041 = vpop.f32.mrf.mxu0
        %v1042 = vadd.f32 0.0, %v1041
        %v1043 = vpop.f32.mrf.mxu0
        %v1044 = vadd.f32 0.0, %v1043
        %1045 = vmatprep.mubr.bf16.mxu0 %v285
        %1046 = vmatmul.mubr.bf16.gmra.mxu0 %v284
        %v1047 = vpop.f32.mrf.mxu0
        %v1048 = vadd.f32 0.0, %v1047
        %v1049 = vpop.f32.mrf.mxu0
        %v1050 = vadd.f32 0.0, %v1049
        %v1051 = vpop.f32.mrf.mxu0
        %v1052 = vadd.f32 0.0, %v1051
        %v1053 = vpop.f32.mrf.mxu0
        %v1054 = vadd.f32 0.0, %v1053
        %1055 = vmatprep.mubr.bf16.mxu0 %v287
        %1056 = vmatmul.mubr.bf16.gmra.mxu0 %v286
        %v1057 = vpop.f32.mrf.mxu0
        %v1058 = vadd.f32 0.0, %v1057
        %v1059 = vpop.f32.mrf.mxu0
        %v1060 = vadd.f32 0.0, %v1059
        %v1061 = vpop.f32.mrf.mxu0
        %v1062 = vadd.f32 0.0, %v1061
        %v1063 = vpop.f32.mrf.mxu0
        %v1064 = vadd.f32 0.0, %v1063
        %1065 = vmatprep.mubr.bf16.mxu0 %v289
        %1066 = vmatmul.mubr.bf16.gmra.mxu0 %v288
        %v1067 = vpop.f32.mrf.mxu0
        %v1068 = vadd.f32 0.0, %v1067
        %v1069 = vpop.f32.mrf.mxu0
        %v1070 = vadd.f32 0.0, %v1069
        %v1071 = vpop.f32.mrf.mxu0
        %v1072 = vadd.f32 0.0, %v1071
        %v1073 = vpop.f32.mrf.mxu0
        %v1074 = vadd.f32 0.0, %v1073
        %1075 = vmatprep.mubr.bf16.mxu0 %v291
        %1076 = vmatmul.mubr.bf16.gmra.mxu0 %v290
        %v1077 = vpop.f32.mrf.mxu0
        %v1078 = vadd.f32 0.0, %v1077
        %v1079 = vpop.f32.mrf.mxu0
        %v1080 = vadd.f32 0.0, %v1079
        %v1081 = vpop.f32.mrf.mxu0
        %v1082 = vadd.f32 0.0, %v1081
        %v1083 = vpop.f32.mrf.mxu0
        %v1084 = vadd.f32 0.0, %v1083
        %1085 = vmatprep.mubr.bf16.mxu0 %v293
        %1086 = vmatmul.mubr.bf16.gmra.mxu0 %v292
        %v1087 = vpop.f32.mrf.mxu0
        %v1088 = vadd.f32 0.0, %v1087
        %v1089 = vpop.f32.mrf.mxu0
        %v1090 = vadd.f32 0.0, %v1089
        %v1091 = vpop.f32.mrf.mxu0
        %v1092 = vadd.f32 0.0, %v1091
        %v1093 = vpop.f32.mrf.mxu0
        %v1094 = vadd.f32 0.0, %v1093
        %1095 = vdwg.mxu0
        %1096 = vmatprep.subr.bf16.mxu0 %v725
        %1097 = vmatpush1.bf16.msra.mxu0 %v724
        %1098 = vmatprep.subr.bf16.mxu0 %v719
        %1099 = vmatpush1.bf16.msra.mxu0 %v718
        %1100 = vmatprep.subr.bf16.mxu0 %v713
        %1101 = vmatpush1.bf16.msra.mxu0 %v712
        %1102 = vmatprep.subr.bf16.mxu0 %v707
        %1103 = vmatpush1.bf16.msra.mxu0 %v706
        %1104 = vmatprep.subr.bf16.mxu0 %v701
        %1105 = vmatpush1.bf16.msra.mxu0 %v700
        %1106 = vmatprep.subr.bf16.mxu0 %v695
        %1107 = vmatpush1.bf16.msra.mxu0 %v694
        %1108 = vmatprep.subr.bf16.mxu0 %v689
        %1109 = vmatpush1.bf16.msra.mxu0 %v688
        %1110 = vmatprep.subr.bf16.mxu0 %v683
        %1111 = vmatpush1.bf16.msra.mxu0 %v682
        %1112 = vmatprep.subr.bf16.mxu0 %v773
        %1113 = vmatpush2.bf16.msra.mxu0 %v772
        %1114 = vmatprep.subr.bf16.mxu0 %v767
        %1115 = vmatpush2.bf16.msra.mxu0 %v766
        %1116 = vmatprep.subr.bf16.mxu0 %v761
        %1117 = vmatpush2.bf16.msra.mxu0 %v760
        %1118 = vmatprep.subr.bf16.mxu0 %v755
        %1119 = vmatpush2.bf16.msra.mxu0 %v754
        %1120 = vmatprep.subr.bf16.mxu0 %v749
        %1121 = vmatpush2.bf16.msra.mxu0 %v748
        %1122 = vmatprep.subr.bf16.mxu0 %v743
        %1123 = vmatpush2.bf16.msra.mxu0 %v742
        %1124 = vmatprep.subr.bf16.mxu0 %v737
        %1125 = vmatpush2.bf16.msra.mxu0 %v736
        %1126 = vmatprep.subr.bf16.mxu0 %v731
        %1127 = vmatpush2.bf16.msra.mxu0 %v730
        %1128 = vmatprep.mubr.bf16.mxu0 %v279
        %1129 = vmatmul.mubr.bf16.gmra.mxu0 %v278
        %v1130 = vpop.f32.mrf.mxu0
        %v1131 = vadd.f32 0.0, %v1130
        %v1132 = vpop.f32.mrf.mxu0
        %v1133 = vadd.f32 0.0, %v1132
        %v1134 = vpop.f32.mrf.mxu0
        %v1135 = vadd.f32 0.0, %v1134
        %v1136 = vpop.f32.mrf.mxu0
        %v1137 = vadd.f32 0.0, %v1136
        %1138 = vmatprep.mubr.bf16.mxu0 %v281
        %1139 = vmatmul.mubr.bf16.gmra.mxu0 %v280
        %v1140 = vpop.f32.mrf.mxu0
        %v1141 = vadd.f32 0.0, %v1140
        %v1142 = vpop.f32.mrf.mxu0
        %v1143 = vadd.f32 0.0, %v1142
        %v1144 = vpop.f32.mrf.mxu0
        %v1145 = vadd.f32 0.0, %v1144
        %v1146 = vpop.f32.mrf.mxu0
        %v1147 = vadd.f32 0.0, %v1146
        %1148 = vmatprep.mubr.bf16.mxu0 %v283
        %1149 = vmatmul.mubr.bf16.gmra.mxu0 %v282
        %v1150 = vpop.f32.mrf.mxu0
        %v1151 = vadd.f32 0.0, %v1150
        %v1152 = vpop.f32.mrf.mxu0
        %v1153 = vadd.f32 0.0, %v1152
        %v1154 = vpop.f32.mrf.mxu0
        %v1155 = vadd.f32 0.0, %v1154
        %v1156 = vpop.f32.mrf.mxu0
        %v1157 = vadd.f32 0.0, %v1156
        %1158 = vmatprep.mubr.bf16.mxu0 %v285
        %1159 = vmatmul.mubr.bf16.gmra.mxu0 %v284
        %v1160 = vpop.f32.mrf.mxu0
        %v1161 = vadd.f32 0.0, %v1160
        %v1162 = vpop.f32.mrf.mxu0
        %v1163 = vadd.f32 0.0, %v1162
        %v1164 = vpop.f32.mrf.mxu0
        %v1165 = vadd.f32 0.0, %v1164
        %v1166 = vpop.f32.mrf.mxu0
        %v1167 = vadd.f32 0.0, %v1166
        %1168 = vmatprep.mubr.bf16.mxu0 %v287
        %1169 = vmatmul.mubr.bf16.gmra.mxu0 %v286
        %v1170 = vpop.f32.mrf.mxu0
        %v1171 = vadd.f32 0.0, %v1170
        %v1172 = vpop.f32.mrf.mxu0
        %v1173 = vadd.f32 0.0, %v1172
        %v1174 = vpop.f32.mrf.mxu0
        %v1175 = vadd.f32 0.0, %v1174
        %v1176 = vpop.f32.mrf.mxu0
        %v1177 = vadd.f32 0.0, %v1176
        %1178 = vmatprep.mubr.bf16.mxu0 %v289
        %1179 = vmatmul.mubr.bf16.gmra.mxu0 %v288
        %v1180 = vpop.f32.mrf.mxu0
        %v1181 = vadd.f32 0.0, %v1180
        %v1182 = vpop.f32.mrf.mxu0
        %v1183 = vadd.f32 0.0, %v1182
        %v1184 = vpop.f32.mrf.mxu0
        %v1185 = vadd.f32 0.0, %v1184
        %v1186 = vpop.f32.mrf.mxu0
        %v1187 = vadd.f32 0.0, %v1186
        %1188 = vmatprep.mubr.bf16.mxu0 %v291
        %1189 = vmatmul.mubr.bf16.gmra.mxu0 %v290
        %v1190 = vpop.f32.mrf.mxu0
        %v1191 = vadd.f32 0.0, %v1190
        %v1192 = vpop.f32.mrf.mxu0
        %v1193 = vadd.f32 0.0, %v1192
        %v1194 = vpop.f32.mrf.mxu0
        %v1195 = vadd.f32 0.0, %v1194
        %v1196 = vpop.f32.mrf.mxu0
        %v1197 = vadd.f32 0.0, %v1196
        %1198 = vmatprep.mubr.bf16.mxu0 %v293
        %1199 = vmatmul.mubr.bf16.gmra.mxu0 %v292
        %v1200 = vpop.f32.mrf.mxu0
        %v1201 = vadd.f32 0.0, %v1200
        %v1202 = vpop.f32.mrf.mxu0
        %v1203 = vadd.f32 0.0, %v1202
        %v1204 = vpop.f32.mrf.mxu0
        %v1205 = vadd.f32 0.0, %v1204
        %v1206 = vpop.f32.mrf.mxu0
        %v1207 = vadd.f32 0.0, %v1206
        %1208 = vdwg.mxu0
        %1225 = vrot.lane.b32.xlu0 %v905, 64
        %v1226 = vpop.permute.xlu0 %1225
        %1227 = vrot.lane.b32.xlu0 %v909, 64
        %v1228 = vpop.permute.xlu0 %1227
        %1229 = vrot.lane.b32.xlu0 %v915, 64
        %v1230 = vpop.permute.xlu0 %1229
        %1231 = vrot.lane.b32.xlu0 %v919, 64
        %v1232 = vpop.permute.xlu0 %1231
        %1233 = vrot.lane.b32.xlu0 %v925, 64
        %v1234 = vpop.permute.xlu0 %1233
        %1235 = vrot.lane.b32.xlu0 %v929, 64
        %v1236 = vpop.permute.xlu0 %1235
        %1237 = vrot.lane.b32.xlu0 %v935, 64
        %v1238 = vpop.permute.xlu0 %1237
        %1239 = vrot.lane.b32.xlu0 %v939, 64
        %v1240 = vpop.permute.xlu0 %1239
        %1241 = vrot.lane.b32.xlu0 %v945, 64
        %v1242 = vpop.permute.xlu0 %1241
        %1243 = vrot.lane.b32.xlu0 %v949, 64
        %v1244 = vpop.permute.xlu0 %1243
        %1245 = vrot.lane.b32.xlu0 %v955, 64
        %v1246 = vpop.permute.xlu0 %1245
        %1247 = vrot.lane.b32.xlu0 %v959, 64
        %v1248 = vpop.permute.xlu0 %1247
        %1249 = vrot.lane.b32.xlu0 %v965, 64
        %v1250 = vpop.permute.xlu0 %1249
        %1251 = vrot.lane.b32.xlu0 %v969, 64
        %v1252 = vpop.permute.xlu0 %1251
        %1253 = vrot.lane.b32.xlu0 %v975, 64
        %v1254 = vpop.permute.xlu0 %1253
        %1255 = vrot.lane.b32.xlu0 %v979, 64
        %v1256 = vpop.permute.xlu0 %1255
        %1289 = vrot.lane.b32.xlu0 %v907, 64
        %v1290 = vpop.permute.xlu0 %1289
        %1291 = vrot.lane.b32.xlu0 %v911, 64
        %v1292 = vpop.permute.xlu0 %1291
        %1293 = vrot.lane.b32.xlu0 %v917, 64
        %v1294 = vpop.permute.xlu0 %1293
        %1295 = vrot.lane.b32.xlu0 %v921, 64
        %v1296 = vpop.permute.xlu0 %1295
        %1297 = vrot.lane.b32.xlu0 %v927, 64
        %v1298 = vpop.permute.xlu0 %1297
        %1299 = vrot.lane.b32.xlu0 %v931, 64
        %v1300 = vpop.permute.xlu0 %1299
        %1301 = vrot.lane.b32.xlu0 %v937, 64
        %v1302 = vpop.permute.xlu0 %1301
        %1303 = vrot.lane.b32.xlu0 %v941, 64
        %v1304 = vpop.permute.xlu0 %1303
        %1305 = vrot.lane.b32.xlu0 %v947, 64
        %v1306 = vpop.permute.xlu0 %1305
        %1307 = vrot.lane.b32.xlu0 %v951, 64
        %v1308 = vpop.permute.xlu0 %1307
        %1309 = vrot.lane.b32.xlu0 %v957, 64
        %v1310 = vpop.permute.xlu0 %1309
        %1311 = vrot.lane.b32.xlu0 %v961, 64
        %v1312 = vpop.permute.xlu0 %1311
        %1313 = vrot.lane.b32.xlu0 %v967, 64
        %v1314 = vpop.permute.xlu0 %1313
        %1315 = vrot.lane.b32.xlu0 %v971, 64
        %v1316 = vpop.permute.xlu0 %1315
        %1317 = vrot.lane.b32.xlu0 %v977, 64
        %v1318 = vpop.permute.xlu0 %1317
        %1319 = vrot.lane.b32.xlu0 %v981, 64
        %v1320 = vpop.permute.xlu0 %1319
        %v1337 = vpack.c.bf16 %v909, %v905
        %v1338 = vpack.c.bf16 %v919, %v915
        %v1339 = vpack.c.bf16 %v929, %v925
        %v1340 = vpack.c.bf16 %v939, %v935
        %v1341 = vpack.c.bf16 %v949, %v945
        %v1342 = vpack.c.bf16 %v959, %v955
        %v1343 = vpack.c.bf16 %v969, %v965
        %v1344 = vpack.c.bf16 %v979, %v975
        %v1345 = vpack.c.bf16 %v1228, %v1226
        %v1346 = vpack.c.bf16 %v1232, %v1230
        %v1347 = vpack.c.bf16 %v1236, %v1234
        %v1348 = vpack.c.bf16 %v1240, %v1238
        %v1349 = vpack.c.bf16 %v1244, %v1242
        %v1350 = vpack.c.bf16 %v1248, %v1246
        %v1351 = vpack.c.bf16 %v1252, %v1250
        %v1352 = vpack.c.bf16 %v1256, %v1254
        %v1353 = vpack.c.bf16 %v911, %v907
        %v1354 = vpack.c.bf16 %v921, %v917
        %v1355 = vpack.c.bf16 %v931, %v927
        %v1356 = vpack.c.bf16 %v941, %v937
        %v1357 = vpack.c.bf16 %v951, %v947
        %v1358 = vpack.c.bf16 %v961, %v957
        %v1359 = vpack.c.bf16 %v971, %v967
        %v1360 = vpack.c.bf16 %v981, %v977
        %v1361 = vpack.c.bf16 %v1292, %v1290
        %v1362 = vpack.c.bf16 %v1296, %v1294
        %v1363 = vpack.c.bf16 %v1300, %v1298
        %v1364 = vpack.c.bf16 %v1304, %v1302
        %v1365 = vpack.c.bf16 %v1308, %v1306
        %v1366 = vpack.c.bf16 %v1312, %v1310
        %v1367 = vpack.c.bf16 %v1316, %v1314
        %v1368 = vpack.c.bf16 %v1320, %v1318
        %1385 = vrot.lane.b32.xlu0 %v1018, 64
        %v1386 = vpop.permute.xlu0 %1385
        %1387 = vrot.lane.b32.xlu0 %v1022, 64
        %v1388 = vpop.permute.xlu0 %1387
        %1389 = vrot.lane.b32.xlu0 %v1028, 64
        %v1390 = vpop.permute.xlu0 %1389
        %1391 = vrot.lane.b32.xlu0 %v1032, 64
        %v1392 = vpop.permute.xlu0 %1391
        %1393 = vrot.lane.b32.xlu0 %v1038, 64
        %v1394 = vpop.permute.xlu0 %1393
        %1395 = vrot.lane.b32.xlu0 %v1042, 64
        %v1396 = vpop.permute.xlu0 %1395
        %1397 = vrot.lane.b32.xlu0 %v1048, 64
        %v1398 = vpop.permute.xlu0 %1397
        %1399 = vrot.lane.b32.xlu0 %v1052, 64
        %v1400 = vpop.permute.xlu0 %1399
        %1401 = vrot.lane.b32.xlu0 %v1058, 64
        %v1402 = vpop.permute.xlu0 %1401
        %1403 = vrot.lane.b32.xlu0 %v1062, 64
        %v1404 = vpop.permute.xlu0 %1403
        %1405 = vrot.lane.b32.xlu0 %v1068, 64
        %v1406 = vpop.permute.xlu0 %1405
        %1407 = vrot.lane.b32.xlu0 %v1072, 64
        %v1408 = vpop.permute.xlu0 %1407
        %1409 = vrot.lane.b32.xlu0 %v1078, 64
        %v1410 = vpop.permute.xlu0 %1409
        %1411 = vrot.lane.b32.xlu0 %v1082, 64
        %v1412 = vpop.permute.xlu0 %1411
        %1413 = vrot.lane.b32.xlu0 %v1088, 64
        %v1414 = vpop.permute.xlu0 %1413
        %1415 = vrot.lane.b32.xlu0 %v1092, 64
        %v1416 = vpop.permute.xlu0 %1415
        %1449 = vrot.lane.b32.xlu0 %v1020, 64
        %v1450 = vpop.permute.xlu0 %1449
        %1451 = vrot.lane.b32.xlu0 %v1024, 64
        %v1452 = vpop.permute.xlu0 %1451
        %1453 = vrot.lane.b32.xlu0 %v1030, 64
        %v1454 = vpop.permute.xlu0 %1453
        %1455 = vrot.lane.b32.xlu0 %v1034, 64
        %v1456 = vpop.permute.xlu0 %1455
        %1457 = vrot.lane.b32.xlu0 %v1040, 64
        %v1458 = vpop.permute.xlu0 %1457
        %1459 = vrot.lane.b32.xlu0 %v1044, 64
        %v1460 = vpop.permute.xlu0 %1459
        %1461 = vrot.lane.b32.xlu0 %v1050, 64
        %v1462 = vpop.permute.xlu0 %1461
        %1463 = vrot.lane.b32.xlu0 %v1054, 64
        %v1464 = vpop.permute.xlu0 %1463
        %1465 = vrot.lane.b32.xlu0 %v1060, 64
        %v1466 = vpop.permute.xlu0 %1465
        %1467 = vrot.lane.b32.xlu0 %v1064, 64
        %v1468 = vpop.permute.xlu0 %1467
        %1469 = vrot.lane.b32.xlu0 %v1070, 64
        %v1470 = vpop.permute.xlu0 %1469
        %1471 = vrot.lane.b32.xlu0 %v1074, 64
        %v1472 = vpop.permute.xlu0 %1471
        %1473 = vrot.lane.b32.xlu0 %v1080, 64
        %v1474 = vpop.permute.xlu0 %1473
        %1475 = vrot.lane.b32.xlu0 %v1084, 64
        %v1476 = vpop.permute.xlu0 %1475
        %1477 = vrot.lane.b32.xlu0 %v1090, 64
        %v1478 = vpop.permute.xlu0 %1477
        %1479 = vrot.lane.b32.xlu0 %v1094, 64
        %v1480 = vpop.permute.xlu0 %1479
        %v1497 = vpack.c.bf16 %v1022, %v1018
        %v1498 = vpack.c.bf16 %v1032, %v1028
        %v1499 = vpack.c.bf16 %v1042, %v1038
        %v1500 = vpack.c.bf16 %v1052, %v1048
        %v1501 = vpack.c.bf16 %v1062, %v1058
        %v1502 = vpack.c.bf16 %v1072, %v1068
        %v1503 = vpack.c.bf16 %v1082, %v1078
        %v1504 = vpack.c.bf16 %v1092, %v1088
        %v1505 = vpack.c.bf16 %v1388, %v1386
        %v1506 = vpack.c.bf16 %v1392, %v1390
        %v1507 = vpack.c.bf16 %v1396, %v1394
        %v1508 = vpack.c.bf16 %v1400, %v1398
        %v1509 = vpack.c.bf16 %v1404, %v1402
        %v1510 = vpack.c.bf16 %v1408, %v1406
        %v1511 = vpack.c.bf16 %v1412, %v1410
        %v1512 = vpack.c.bf16 %v1416, %v1414
        %v1513 = vpack.c.bf16 %v1024, %v1020
        %v1514 = vpack.c.bf16 %v1034, %v1030
        %v1515 = vpack.c.bf16 %v1044, %v1040
        %v1516 = vpack.c.bf16 %v1054, %v1050
        %v1517 = vpack.c.bf16 %v1064, %v1060
        %v1518 = vpack.c.bf16 %v1074, %v1070
        %v1519 = vpack.c.bf16 %v1084, %v1080
        %v1520 = vpack.c.bf16 %v1094, %v1090
        %v1521 = vpack.c.bf16 %v1452, %v1450
        %v1522 = vpack.c.bf16 %v1456, %v1454
        %v1523 = vpack.c.bf16 %v1460, %v1458
        %v1524 = vpack.c.bf16 %v1464, %v1462
        %v1525 = vpack.c.bf16 %v1468, %v1466
        %v1526 = vpack.c.bf16 %v1472, %v1470
        %v1527 = vpack.c.bf16 %v1476, %v1474
        %v1528 = vpack.c.bf16 %v1480, %v1478
        %1545 = vrot.lane.b32.xlu0 %v1131, 64
        %v1546 = vpop.permute.xlu0 %1545
        %1547 = vrot.lane.b32.xlu0 %v1135, 64
        %v1548 = vpop.permute.xlu0 %1547
        %1549 = vrot.lane.b32.xlu0 %v1141, 64
        %v1550 = vpop.permute.xlu0 %1549
        %1551 = vrot.lane.b32.xlu0 %v1145, 64
        %v1552 = vpop.permute.xlu0 %1551
        %1553 = vrot.lane.b32.xlu0 %v1151, 64
        %v1554 = vpop.permute.xlu0 %1553
        %1555 = vrot.lane.b32.xlu0 %v1155, 64
        %v1556 = vpop.permute.xlu0 %1555
        %1557 = vrot.lane.b32.xlu0 %v1161, 64
        %v1558 = vpop.permute.xlu0 %1557
        %1559 = vrot.lane.b32.xlu0 %v1165, 64
        %v1560 = vpop.permute.xlu0 %1559
        %1561 = vrot.lane.b32.xlu0 %v1171, 64
        %v1562 = vpop.permute.xlu0 %1561
        %1563 = vrot.lane.b32.xlu0 %v1175, 64
        %v1564 = vpop.permute.xlu0 %1563
        %1565 = vrot.lane.b32.xlu0 %v1181, 64
        %v1566 = vpop.permute.xlu0 %1565
        %1567 = vrot.lane.b32.xlu0 %v1185, 64
        %v1568 = vpop.permute.xlu0 %1567
        %1569 = vrot.lane.b32.xlu0 %v1191, 64
        %v1570 = vpop.permute.xlu0 %1569
        %1571 = vrot.lane.b32.xlu0 %v1195, 64
        %v1572 = vpop.permute.xlu0 %1571
        %1573 = vrot.lane.b32.xlu0 %v1201, 64
        %v1574 = vpop.permute.xlu0 %1573
        %1575 = vrot.lane.b32.xlu0 %v1205, 64
        %v1576 = vpop.permute.xlu0 %1575
        %1609 = vrot.lane.b32.xlu0 %v1133, 64
        %v1610 = vpop.permute.xlu0 %1609
        %1611 = vrot.lane.b32.xlu0 %v1137, 64
        %v1612 = vpop.permute.xlu0 %1611
        %1613 = vrot.lane.b32.xlu0 %v1143, 64
        %v1614 = vpop.permute.xlu0 %1613
        %1615 = vrot.lane.b32.xlu0 %v1147, 64
        %v1616 = vpop.permute.xlu0 %1615
        %1617 = vrot.lane.b32.xlu0 %v1153, 64
        %v1618 = vpop.permute.xlu0 %1617
        %1619 = vrot.lane.b32.xlu0 %v1157, 64
        %v1620 = vpop.permute.xlu0 %1619
        %1621 = vrot.lane.b32.xlu0 %v1163, 64
        %v1622 = vpop.permute.xlu0 %1621
        %1623 = vrot.lane.b32.xlu0 %v1167, 64
        %v1624 = vpop.permute.xlu0 %1623
        %1625 = vrot.lane.b32.xlu0 %v1173, 64
        %v1626 = vpop.permute.xlu0 %1625
        %1627 = vrot.lane.b32.xlu0 %v1177, 64
        %v1628 = vpop.permute.xlu0 %1627
        %1629 = vrot.lane.b32.xlu0 %v1183, 64
        %v1630 = vpop.permute.xlu0 %1629
        %1631 = vrot.lane.b32.xlu0 %v1187, 64
        %v1632 = vpop.permute.xlu0 %1631
        %1633 = vrot.lane.b32.xlu0 %v1193, 64
        %v1634 = vpop.permute.xlu0 %1633
        %1635 = vrot.lane.b32.xlu0 %v1197, 64
        %v1636 = vpop.permute.xlu0 %1635
        %1637 = vrot.lane.b32.xlu0 %v1203, 64
        %v1638 = vpop.permute.xlu0 %1637
        %1639 = vrot.lane.b32.xlu0 %v1207, 64
        %v1640 = vpop.permute.xlu0 %1639
        %v1657 = vpack.c.bf16 %v1135, %v1131
        %v1658 = vpack.c.bf16 %v1145, %v1141
        %v1659 = vpack.c.bf16 %v1155, %v1151
        %v1660 = vpack.c.bf16 %v1165, %v1161
        %v1661 = vpack.c.bf16 %v1175, %v1171
        %v1662 = vpack.c.bf16 %v1185, %v1181
        %v1663 = vpack.c.bf16 %v1195, %v1191
        %v1664 = vpack.c.bf16 %v1205, %v1201
        %v1665 = vpack.c.bf16 %v1548, %v1546
        %v1666 = vpack.c.bf16 %v1552, %v1550
        %v1667 = vpack.c.bf16 %v1556, %v1554
        %v1668 = vpack.c.bf16 %v1560, %v1558
        %v1669 = vpack.c.bf16 %v1564, %v1562
        %v1670 = vpack.c.bf16 %v1568, %v1566
        %v1671 = vpack.c.bf16 %v1572, %v1570
        %v1672 = vpack.c.bf16 %v1576, %v1574
        %v1673 = vpack.c.bf16 %v1137, %v1133
        %v1674 = vpack.c.bf16 %v1147, %v1143
        %v1675 = vpack.c.bf16 %v1157, %v1153
        %v1676 = vpack.c.bf16 %v1167, %v1163
        %v1677 = vpack.c.bf16 %v1177, %v1173
        %v1678 = vpack.c.bf16 %v1187, %v1183
        %v1679 = vpack.c.bf16 %v1197, %v1193
        %v1680 = vpack.c.bf16 %v1207, %v1203
        %v1681 = vpack.c.bf16 %v1612, %v1610
        %v1682 = vpack.c.bf16 %v1616, %v1614
        %v1683 = vpack.c.bf16 %v1620, %v1618
        %v1684 = vpack.c.bf16 %v1624, %v1622
        %v1685 = vpack.c.bf16 %v1628, %v1626
        %v1686 = vpack.c.bf16 %v1632, %v1630
        %v1687 = vpack.c.bf16 %v1636, %v1634
        %v1688 = vpack.c.bf16 %v1640, %v1638
        %v1689 = vlaneseq
        %v1690 = vshrl.u32 %v1689, 7
        %v1691 = vadd.s32 %v1690, 8
        %v1692 = vadd.s32 %v1690, 16
        %v1693 = vadd.s32 %v1690, 24
        %v1694 = vadd.s32 %v1690, 32
        %v1695 = vadd.s32 %v1690, 40
        %v1696 = vadd.s32 %v1690, 48
        %v1697 = vadd.s32 %v1690, 56
        %v1698 = vadd.s32 %v1690, 64
        %v1699 = vadd.s32 %v1690, 72
        %v1700 = vadd.s32 %v1690, 80
        %v1701 = vadd.s32 %v1690, 88
        %v1702 = vadd.s32 %v1690, 96
        %v1703 = vadd.s32 %v1690, 104
        %v1704 = vadd.s32 %v1690, 112
        %v1705 = vadd.s32 %v1690, 120
        %v1706 = vlaneseq
        %v1707 = vand.u32 %v1706, 127
        %vm1708 = vcmp.le.s32.totalorder %v1707, %v1690
        %vm1709 = vcmp.le.s32.totalorder %v1707, %v1691
        %vm1710 = vcmp.le.s32.totalorder %v1707, %v1692
        %vm1711 = vcmp.le.s32.totalorder %v1707, %v1693
        %vm1712 = vcmp.le.s32.totalorder %v1707, %v1694
        %vm1713 = vcmp.le.s32.totalorder %v1707, %v1695
        %vm1714 = vcmp.le.s32.totalorder %v1707, %v1696
        %vm1715 = vcmp.le.s32.totalorder %v1707, %v1697
        %vm1716 = vcmp.le.s32.totalorder %v1707, %v1698
        %vm1717 = vcmp.le.s32.totalorder %v1707, %v1699
        %vm1718 = vcmp.le.s32.totalorder %v1707, %v1700
        %vm1719 = vcmp.le.s32.totalorder %v1707, %v1701
        %vm1720 = vcmp.le.s32.totalorder %v1707, %v1702
        %vm1721 = vcmp.le.s32.totalorder %v1707, %v1703
        %vm1722 = vcmp.le.s32.totalorder %v1707, %v1704
        %vm1723 = vcmp.le.s32.totalorder %v1707, %v1705
        %v1724 = vld [vmem:[%s3] sm:$0x3]
        %vm1725 = vcmask 523264
        %v1727 = vsel %vm1725, %v1337, 0
        %v1730 = vsel %vm1725, %v1338, 0
        %v1733 = vsel %vm1725, %v1339, 0
        %v1736 = vsel %vm1725, %v1340, 0
        %v1739 = vsel %vm1725, %v1341, 0
        %v1742 = vsel %vm1725, %v1342, 0
        %v1745 = vsel %vm1725, %v1343, 0
        %v1748 = vsel %vm1725, %v1344, 0
        %v1751 = vsel %vm1725, %v1497, 0
        %v1754 = vsel %vm1725, %v1498, 0
        %v1757 = vsel %vm1725, %v1499, 0
        %v1760 = vsel %vm1725, %v1500, 0
        %v1763 = vsel %vm1725, %v1501, 0
        %v1766 = vsel %vm1725, %v1502, 0
        %v1769 = vsel %vm1725, %v1503, 0
        %v1772 = vsel %vm1725, %v1504, 0
        %1774 = vmatprep.subr.bf16.mxu0 0
        %1775 = vmatpush1.bf16.xpose.msra.mxu0 %v1772
        %1776 = vmatprep.subr.bf16.mxu0 0
        %1777 = vmatpush1.bf16.xpose.msra.mxu0 %v1769
        %1778 = vmatprep.subr.bf16.mxu0 0
        %1779 = vmatpush1.bf16.xpose.msra.mxu0 %v1766
        %1780 = vmatprep.subr.bf16.mxu0 0
        %1781 = vmatpush1.bf16.xpose.msra.mxu0 %v1763
        %1782 = vmatprep.subr.bf16.mxu0 0
        %1783 = vmatpush1.bf16.xpose.msra.mxu0 %v1760
        %1784 = vmatprep.subr.bf16.mxu0 0
        %1785 = vmatpush1.bf16.xpose.msra.mxu0 %v1757
        %1786 = vmatprep.subr.bf16.mxu0 0
        %1787 = vmatpush1.bf16.xpose.msra.mxu0 %v1754
        %1788 = vmatprep.subr.bf16.mxu0 0
        %1789 = vmatpush1.bf16.xpose.msra.mxu0 %v1751
        %1790 = vmatprep.subr.bf16.mxu0 0
        %1791 = vmatpush2.bf16.xpose.msra.mxu0 0
        %1792 = vmatprep.subr.bf16.mxu0 0
        %1793 = vmatpush2.bf16.xpose.msra.mxu0 0
        %1794 = vmatprep.subr.bf16.mxu0 0
        %1795 = vmatpush2.bf16.xpose.msra.mxu0 0
        %1796 = vmatprep.subr.bf16.mxu0 0
        %1797 = vmatpush2.bf16.xpose.msra.mxu0 0
        %1798 = vmatprep.subr.bf16.mxu0 0
        %1799 = vmatpush2.bf16.xpose.msra.mxu0 0
        %1800 = vmatprep.subr.bf16.mxu0 0
        %1801 = vmatpush2.bf16.xpose.msra.mxu0 0
        %1802 = vmatprep.subr.bf16.mxu0 0
        %1803 = vmatpush2.bf16.xpose.msra.mxu0 0
        %1804 = vmatprep.subr.bf16.mxu0 0
        %1805 = vmatpush2.bf16.xpose.msra.mxu0 0
        %1806 = vmatprep.mubr.bf16.mxu0 0
        %1807 = vmatmul.mubr.bf16.gmra.mxu0 %v1727
        %v1808 = vpop.f32.mrf.mxu0
        %v1809 = vadd.f32 0.0, %v1808
        %v1810 = vpop.f32.mrf.mxu0
        %v1811 = vpop.f32.mrf.mxu0
        %v1812 = vadd.f32 0.0, %v1811
        %v1813 = vpop.f32.mrf.mxu0
        %1814 = vmatprep.mubr.bf16.mxu0 0
        %1815 = vmatmul.mubr.bf16.gmra.mxu0 %v1730
        %v1816 = vpop.f32.mrf.mxu0
        %v1817 = vadd.f32 0.0, %v1816
        %v1818 = vpop.f32.mrf.mxu0
        %v1819 = vpop.f32.mrf.mxu0
        %v1820 = vadd.f32 0.0, %v1819
        %v1821 = vpop.f32.mrf.mxu0
        %1822 = vmatprep.mubr.bf16.mxu0 0
        %1823 = vmatmul.mubr.bf16.gmra.mxu0 %v1733
        %v1824 = vpop.f32.mrf.mxu0
        %v1825 = vadd.f32 0.0, %v1824
        %v1826 = vpop.f32.mrf.mxu0
        %v1827 = vpop.f32.mrf.mxu0
        %v1828 = vadd.f32 0.0, %v1827
        %v1829 = vpop.f32.mrf.mxu0
        %1830 = vmatprep.mubr.bf16.mxu0 0
        %1831 = vmatmul.mubr.bf16.gmra.mxu0 %v1736
        %v1832 = vpop.f32.mrf.mxu0
        %v1833 = vadd.f32 0.0, %v1832
        %v1834 = vpop.f32.mrf.mxu0
        %v1835 = vpop.f32.mrf.mxu0
        %v1836 = vadd.f32 0.0, %v1835
        %v1837 = vpop.f32.mrf.mxu0
        %1838 = vmatprep.mubr.bf16.mxu0 0
        %1839 = vmatmul.mubr.bf16.gmra.mxu0 %v1739
        %v1840 = vpop.f32.mrf.mxu0
        %v1841 = vadd.f32 0.0, %v1840
        %v1842 = vpop.f32.mrf.mxu0
        %v1843 = vpop.f32.mrf.mxu0
        %v1844 = vadd.f32 0.0, %v1843
        %v1845 = vpop.f32.mrf.mxu0
        %1846 = vmatprep.mubr.bf16.mxu0 0
        %1847 = vmatmul.mubr.bf16.gmra.mxu0 %v1742
        %v1848 = vpop.f32.mrf.mxu0
        %v1849 = vadd.f32 0.0, %v1848
        %v1850 = vpop.f32.mrf.mxu0
        %v1851 = vpop.f32.mrf.mxu0
        %v1852 = vadd.f32 0.0, %v1851
        %v1853 = vpop.f32.mrf.mxu0
        %1854 = vmatprep.mubr.bf16.mxu0 0
        %1855 = vmatmul.mubr.bf16.gmra.mxu0 %v1745
        %v1856 = vpop.f32.mrf.mxu0
        %v1857 = vadd.f32 0.0, %v1856
        %v1858 = vpop.f32.mrf.mxu0
        %v1859 = vpop.f32.mrf.mxu0
        %v1860 = vadd.f32 0.0, %v1859
        %v1861 = vpop.f32.mrf.mxu0
        %1862 = vmatprep.mubr.bf16.mxu0 0
        %1863 = vmatmul.mubr.bf16.gmra.mxu0 %v1748
        %v1864 = vpop.f32.mrf.mxu0
        %v1865 = vadd.f32 0.0, %v1864
        %v1866 = vpop.f32.mrf.mxu0
        %v1867 = vpop.f32.mrf.mxu0
        %v1868 = vadd.f32 0.0, %v1867
        %v1869 = vpop.f32.mrf.mxu0
        %1870 = vdwg.mxu0
        %v1872 = vsel %vm1725, %v1345, 0
        %v1875 = vsel %vm1725, %v1346, 0
        %v1878 = vsel %vm1725, %v1347, 0
        %v1881 = vsel %vm1725, %v1348, 0
        %v1884 = vsel %vm1725, %v1349, 0
        %v1887 = vsel %vm1725, %v1350, 0
        %v1890 = vsel %vm1725, %v1351, 0
        %v1893 = vsel %vm1725, %v1352, 0
        %v1896 = vsel %vm1725, %v1505, 0
        %v1899 = vsel %vm1725, %v1506, 0
        %v1902 = vsel %vm1725, %v1507, 0
        %v1905 = vsel %vm1725, %v1508, 0
        %v1908 = vsel %vm1725, %v1509, 0
        %v1911 = vsel %vm1725, %v1510, 0
        %v1914 = vsel %vm1725, %v1511, 0
        %v1917 = vsel %vm1725, %v1512, 0
        %1919 = vmatprep.subr.bf16.mxu0 0
        %1920 = vmatpush1.bf16.xpose.msra.mxu0 %v1917
        %1921 = vmatprep.subr.bf16.mxu0 0
        %1922 = vmatpush1.bf16.xpose.msra.mxu0 %v1914
        %1923 = vmatprep.subr.bf16.mxu0 0
        %1924 = vmatpush1.bf16.xpose.msra.mxu0 %v1911
        %1925 = vmatprep.subr.bf16.mxu0 0
        %1926 = vmatpush1.bf16.xpose.msra.mxu0 %v1908
        %1927 = vmatprep.subr.bf16.mxu0 0
        %1928 = vmatpush1.bf16.xpose.msra.mxu0 %v1905
        %1929 = vmatprep.subr.bf16.mxu0 0
        %1930 = vmatpush1.bf16.xpose.msra.mxu0 %v1902
        %1931 = vmatprep.subr.bf16.mxu0 0
        %1932 = vmatpush1.bf16.xpose.msra.mxu0 %v1899
        %1933 = vmatprep.subr.bf16.mxu0 0
        %1934 = vmatpush1.bf16.xpose.msra.mxu0 %v1896
        %1935 = vmatprep.subr.bf16.mxu0 0
        %1936 = vmatpush2.bf16.xpose.msra.mxu0 0
        %1937 = vmatprep.subr.bf16.mxu0 0
        %1938 = vmatpush2.bf16.xpose.msra.mxu0 0
        %1939 = vmatprep.subr.bf16.mxu0 0
        %1940 = vmatpush2.bf16.xpose.msra.mxu0 0
        %1941 = vmatprep.subr.bf16.mxu0 0
        %1942 = vmatpush2.bf16.xpose.msra.mxu0 0
        %1943 = vmatprep.subr.bf16.mxu0 0
        %1944 = vmatpush2.bf16.xpose.msra.mxu0 0
        %1945 = vmatprep.subr.bf16.mxu0 0
        %1946 = vmatpush2.bf16.xpose.msra.mxu0 0
        %1947 = vmatprep.subr.bf16.mxu0 0
        %1948 = vmatpush2.bf16.xpose.msra.mxu0 0
        %1949 = vmatprep.subr.bf16.mxu0 0
        %1950 = vmatpush2.bf16.xpose.msra.mxu0 0
        %1951 = vmatprep.mubr.bf16.mxu0 0
        %1952 = vmatmul.mubr.bf16.gmra.mxu0 %v1872
        %v1953 = vpop.f32.mrf.mxu0
        %v1954 = vadd.f32 0.0, %v1953
        %v1955 = vpop.f32.mrf.mxu0
        %v1956 = vpop.f32.mrf.mxu0
        %v1957 = vadd.f32 0.0, %v1956
        %v1958 = vpop.f32.mrf.mxu0
        %1959 = vmatprep.mubr.bf16.mxu0 0
        %1960 = vmatmul.mubr.bf16.gmra.mxu0 %v1875
        %v1961 = vpop.f32.mrf.mxu0
        %v1962 = vadd.f32 0.0, %v1961
        %v1963 = vpop.f32.mrf.mxu0
        %v1964 = vpop.f32.mrf.mxu0
        %v1965 = vadd.f32 0.0, %v1964
        %v1966 = vpop.f32.mrf.mxu0
        %1967 = vmatprep.mubr.bf16.mxu0 0
        %1968 = vmatmul.mubr.bf16.gmra.mxu0 %v1878
        %v1969 = vpop.f32.mrf.mxu0
        %v1970 = vadd.f32 0.0, %v1969
        %v1971 = vpop.f32.mrf.mxu0
        %v1972 = vpop.f32.mrf.mxu0
        %v1973 = vadd.f32 0.0, %v1972
        %v1974 = vpop.f32.mrf.mxu0
        %1975 = vmatprep.mubr.bf16.mxu0 0
        %1976 = vmatmul.mubr.bf16.gmra.mxu0 %v1881
        %v1977 = vpop.f32.mrf.mxu0
        %v1978 = vadd.f32 0.0, %v1977
        %v1979 = vpop.f32.mrf.mxu0
        %v1980 = vpop.f32.mrf.mxu0
        %v1981 = vadd.f32 0.0, %v1980
        %v1982 = vpop.f32.mrf.mxu0
        %1983 = vmatprep.mubr.bf16.mxu0 0
        %1984 = vmatmul.mubr.bf16.gmra.mxu0 %v1884
        %v1985 = vpop.f32.mrf.mxu0
        %v1986 = vadd.f32 0.0, %v1985
        %v1987 = vpop.f32.mrf.mxu0
        %v1988 = vpop.f32.mrf.mxu0
        %v1989 = vadd.f32 0.0, %v1988
        %v1990 = vpop.f32.mrf.mxu0
        %1991 = vmatprep.mubr.bf16.mxu0 0
        %1992 = vmatmul.mubr.bf16.gmra.mxu0 %v1887
        %v1993 = vpop.f32.mrf.mxu0
        %v1994 = vadd.f32 0.0, %v1993
        %v1995 = vpop.f32.mrf.mxu0
        %v1996 = vpop.f32.mrf.mxu0
        %v1997 = vadd.f32 0.0, %v1996
        %v1998 = vpop.f32.mrf.mxu0
        %1999 = vmatprep.mubr.bf16.mxu0 0
        %2000 = vmatmul.mubr.bf16.gmra.mxu0 %v1890
        %v2001 = vpop.f32.mrf.mxu0
        %v2002 = vadd.f32 0.0, %v2001
        %v2003 = vpop.f32.mrf.mxu0
        %v2004 = vpop.f32.mrf.mxu0
        %v2005 = vadd.f32 0.0, %v2004
        %v2006 = vpop.f32.mrf.mxu0
        %2007 = vmatprep.mubr.bf16.mxu0 0
        %2008 = vmatmul.mubr.bf16.gmra.mxu0 %v1893
        %v2009 = vpop.f32.mrf.mxu0
        %v2010 = vadd.f32 0.0, %v2009
        %v2011 = vpop.f32.mrf.mxu0
        %v2012 = vpop.f32.mrf.mxu0
        %v2013 = vadd.f32 0.0, %v2012
        %v2014 = vpop.f32.mrf.mxu0
        %2015 = vdwg.mxu0
        %v2017 = vsel %vm1725, %v1353, 0
        %v2020 = vsel %vm1725, %v1354, 0
        %v2023 = vsel %vm1725, %v1355, 0
        %v2026 = vsel %vm1725, %v1356, 0
        %v2029 = vsel %vm1725, %v1357, 0
        %v2032 = vsel %vm1725, %v1358, 0
        %v2035 = vsel %vm1725, %v1359, 0
        %v2038 = vsel %vm1725, %v1360, 0
        %v2041 = vsel %vm1725, %v1513, 0
        %v2044 = vsel %vm1725, %v1514, 0
        %v2047 = vsel %vm1725, %v1515, 0
        %v2050 = vsel %vm1725, %v1516, 0
        %v2053 = vsel %vm1725, %v1517, 0
        %v2056 = vsel %vm1725, %v1518, 0
        %v2059 = vsel %vm1725, %v1519, 0
        %v2062 = vsel %vm1725, %v1520, 0
        %2064 = vmatprep.subr.bf16.mxu0 0
        %2065 = vmatpush1.bf16.xpose.msra.mxu0 %v2062
        %2066 = vmatprep.subr.bf16.mxu0 0
        %2067 = vmatpush1.bf16.xpose.msra.mxu0 %v2059
        %2068 = vmatprep.subr.bf16.mxu0 0
        %2069 = vmatpush1.bf16.xpose.msra.mxu0 %v2056
        %2070 = vmatprep.subr.bf16.mxu0 0
        %2071 = vmatpush1.bf16.xpose.msra.mxu0 %v2053
        %2072 = vmatprep.subr.bf16.mxu0 0
        %2073 = vmatpush1.bf16.xpose.msra.mxu0 %v2050
        %2074 = vmatprep.subr.bf16.mxu0 0
        %2075 = vmatpush1.bf16.xpose.msra.mxu0 %v2047
        %2076 = vmatprep.subr.bf16.mxu0 0
        %2077 = vmatpush1.bf16.xpose.msra.mxu0 %v2044
        %2078 = vmatprep.subr.bf16.mxu0 0
        %2079 = vmatpush1.bf16.xpose.msra.mxu0 %v2041
        %2080 = vmatprep.subr.bf16.mxu0 0
        %2081 = vmatpush2.bf16.xpose.msra.mxu0 0
        %2082 = vmatprep.subr.bf16.mxu0 0
        %2083 = vmatpush2.bf16.xpose.msra.mxu0 0
        %2084 = vmatprep.subr.bf16.mxu0 0
        %2085 = vmatpush2.bf16.xpose.msra.mxu0 0
        %2086 = vmatprep.subr.bf16.mxu0 0
        %2087 = vmatpush2.bf16.xpose.msra.mxu0 0
        %2088 = vmatprep.subr.bf16.mxu0 0
        %2089 = vmatpush2.bf16.xpose.msra.mxu0 0
        %2090 = vmatprep.subr.bf16.mxu0 0
        %2091 = vmatpush2.bf16.xpose.msra.mxu0 0
        %2092 = vmatprep.subr.bf16.mxu0 0
        %2093 = vmatpush2.bf16.xpose.msra.mxu0 0
        %2094 = vmatprep.subr.bf16.mxu0 0
        %2095 = vmatpush2.bf16.xpose.msra.mxu0 0
        %2096 = vmatprep.mubr.bf16.mxu0 0
        %2097 = vmatmul.mubr.bf16.gmra.mxu0 %v2017
        %v2098 = vpop.f32.mrf.mxu0
        %v2099 = vadd.f32 0.0, %v2098
        %v2100 = vpop.f32.mrf.mxu0
        %v2101 = vpop.f32.mrf.mxu0
        %v2102 = vadd.f32 0.0, %v2101
        %v2103 = vpop.f32.mrf.mxu0
        %2104 = vmatprep.mubr.bf16.mxu0 0
        %2105 = vmatmul.mubr.bf16.gmra.mxu0 %v2020
        %v2106 = vpop.f32.mrf.mxu0
        %v2107 = vadd.f32 0.0, %v2106
        %v2108 = vpop.f32.mrf.mxu0
        %v2109 = vpop.f32.mrf.mxu0
        %v2110 = vadd.f32 0.0, %v2109
        %v2111 = vpop.f32.mrf.mxu0
        %2112 = vmatprep.mubr.bf16.mxu0 0
        %2113 = vmatmul.mubr.bf16.gmra.mxu0 %v2023
        %v2114 = vpop.f32.mrf.mxu0
        %v2115 = vadd.f32 0.0, %v2114
        %v2116 = vpop.f32.mrf.mxu0
        %v2117 = vpop.f32.mrf.mxu0
        %v2118 = vadd.f32 0.0, %v2117
        %v2119 = vpop.f32.mrf.mxu0
        %2120 = vmatprep.mubr.bf16.mxu0 0
        %2121 = vmatmul.mubr.bf16.gmra.mxu0 %v2026
        %v2122 = vpop.f32.mrf.mxu0
        %v2123 = vadd.f32 0.0, %v2122
        %v2124 = vpop.f32.mrf.mxu0
        %v2125 = vpop.f32.mrf.mxu0
        %v2126 = vadd.f32 0.0, %v2125
        %v2127 = vpop.f32.mrf.mxu0
        %2128 = vmatprep.mubr.bf16.mxu0 0
        %2129 = vmatmul.mubr.bf16.gmra.mxu0 %v2029
        %v2130 = vpop.f32.mrf.mxu0
        %v2131 = vadd.f32 0.0, %v2130
        %v2132 = vpop.f32.mrf.mxu0
        %v2133 = vpop.f32.mrf.mxu0
        %v2134 = vadd.f32 0.0, %v2133
        %v2135 = vpop.f32.mrf.mxu0
        %2136 = vmatprep.mubr.bf16.mxu0 0
        %2137 = vmatmul.mubr.bf16.gmra.mxu0 %v2032
        %v2138 = vpop.f32.mrf.mxu0
        %v2139 = vadd.f32 0.0, %v2138
        %v2140 = vpop.f32.mrf.mxu0
        %v2141 = vpop.f32.mrf.mxu0
        %v2142 = vadd.f32 0.0, %v2141
        %v2143 = vpop.f32.mrf.mxu0
        %2144 = vmatprep.mubr.bf16.mxu0 0
        %2145 = vmatmul.mubr.bf16.gmra.mxu0 %v2035
        %v2146 = vpop.f32.mrf.mxu0
        %v2147 = vadd.f32 0.0, %v2146
        %v2148 = vpop.f32.mrf.mxu0
        %v2149 = vpop.f32.mrf.mxu0
        %v2150 = vadd.f32 0.0, %v2149
        %v2151 = vpop.f32.mrf.mxu0
        %2152 = vmatprep.mubr.bf16.mxu0 0
        %2153 = vmatmul.mubr.bf16.gmra.mxu0 %v2038
        %v2154 = vpop.f32.mrf.mxu0
        %v2155 = vadd.f32 0.0, %v2154
        %v2156 = vpop.f32.mrf.mxu0
        %v2157 = vpop.f32.mrf.mxu0
        %v2158 = vadd.f32 0.0, %v2157
        %v2159 = vpop.f32.mrf.mxu0
        %2160 = vdwg.mxu0
        %v2162 = vsel %vm1725, %v1361, 0
        %v2165 = vsel %vm1725, %v1362, 0
        %v2168 = vsel %vm1725, %v1363, 0
        %v2171 = vsel %vm1725, %v1364, 0
        %v2174 = vsel %vm1725, %v1365, 0
        %v2177 = vsel %vm1725, %v1366, 0
        %v2180 = vsel %vm1725, %v1367, 0
        %v2183 = vsel %vm1725, %v1368, 0
        %v2186 = vsel %vm1725, %v1521, 0
        %v2189 = vsel %vm1725, %v1522, 0
        %v2192 = vsel %vm1725, %v1523, 0
        %v2195 = vsel %vm1725, %v1524, 0
        %v2198 = vsel %vm1725, %v1525, 0
        %v2201 = vsel %vm1725, %v1526, 0
        %v2204 = vsel %vm1725, %v1527, 0
        %v2207 = vsel %vm1725, %v1528, 0
        %2209 = vmatprep.subr.bf16.mxu0 0
        %2210 = vmatpush1.bf16.xpose.msra.mxu0 %v2207
        %2211 = vmatprep.subr.bf16.mxu0 0
        %2212 = vmatpush1.bf16.xpose.msra.mxu0 %v2204
        %2213 = vmatprep.subr.bf16.mxu0 0
        %2214 = vmatpush1.bf16.xpose.msra.mxu0 %v2201
        %2215 = vmatprep.subr.bf16.mxu0 0
        %2216 = vmatpush1.bf16.xpose.msra.mxu0 %v2198
        %2217 = vmatprep.subr.bf16.mxu0 0
        %2218 = vmatpush1.bf16.xpose.msra.mxu0 %v2195
        %2219 = vmatprep.subr.bf16.mxu0 0
        %2220 = vmatpush1.bf16.xpose.msra.mxu0 %v2192
        %2221 = vmatprep.subr.bf16.mxu0 0
        %2222 = vmatpush1.bf16.xpose.msra.mxu0 %v2189
        %2223 = vmatprep.subr.bf16.mxu0 0
        %2224 = vmatpush1.bf16.xpose.msra.mxu0 %v2186
        %2225 = vmatprep.subr.bf16.mxu0 0
        %2226 = vmatpush2.bf16.xpose.msra.mxu0 0
        %2227 = vmatprep.subr.bf16.mxu0 0
        %2228 = vmatpush2.bf16.xpose.msra.mxu0 0
        %2229 = vmatprep.subr.bf16.mxu0 0
        %2230 = vmatpush2.bf16.xpose.msra.mxu0 0
        %2231 = vmatprep.subr.bf16.mxu0 0
        %2232 = vmatpush2.bf16.xpose.msra.mxu0 0
        %2233 = vmatprep.subr.bf16.mxu0 0
        %2234 = vmatpush2.bf16.xpose.msra.mxu0 0
        %2235 = vmatprep.subr.bf16.mxu0 0
        %2236 = vmatpush2.bf16.xpose.msra.mxu0 0
        %2237 = vmatprep.subr.bf16.mxu0 0
        %2238 = vmatpush2.bf16.xpose.msra.mxu0 0
        %2239 = vmatprep.subr.bf16.mxu0 0
        %2240 = vmatpush2.bf16.xpose.msra.mxu0 0
        %2241 = vmatprep.mubr.bf16.mxu0 0
        %2242 = vmatmul.mubr.bf16.gmra.mxu0 %v2162
        %v2243 = vpop.f32.mrf.mxu0
        %v2244 = vadd.f32 0.0, %v2243
        %v2245 = vpop.f32.mrf.mxu0
        %v2246 = vpop.f32.mrf.mxu0
        %v2247 = vadd.f32 0.0, %v2246
        %v2248 = vpop.f32.mrf.mxu0
        %2249 = vmatprep.mubr.bf16.mxu0 0
        %2250 = vmatmul.mubr.bf16.gmra.mxu0 %v2165
        %v2251 = vpop.f32.mrf.mxu0
        %v2252 = vadd.f32 0.0, %v2251
        %v2253 = vpop.f32.mrf.mxu0
        %v2254 = vpop.f32.mrf.mxu0
        %v2255 = vadd.f32 0.0, %v2254
        %v2256 = vpop.f32.mrf.mxu0
        %2257 = vmatprep.mubr.bf16.mxu0 0
        %2258 = vmatmul.mubr.bf16.gmra.mxu0 %v2168
        %v2259 = vpop.f32.mrf.mxu0
        %v2260 = vadd.f32 0.0, %v2259
        %v2261 = vpop.f32.mrf.mxu0
        %v2262 = vpop.f32.mrf.mxu0
        %v2263 = vadd.f32 0.0, %v2262
        %v2264 = vpop.f32.mrf.mxu0
        %2265 = vmatprep.mubr.bf16.mxu0 0
        %2266 = vmatmul.mubr.bf16.gmra.mxu0 %v2171
        %v2267 = vpop.f32.mrf.mxu0
        %v2268 = vadd.f32 0.0, %v2267
        %v2269 = vpop.f32.mrf.mxu0
        %v2270 = vpop.f32.mrf.mxu0
        %v2271 = vadd.f32 0.0, %v2270
        %v2272 = vpop.f32.mrf.mxu0
        %2273 = vmatprep.mubr.bf16.mxu0 0
        %2274 = vmatmul.mubr.bf16.gmra.mxu0 %v2174
        %v2275 = vpop.f32.mrf.mxu0
        %v2276 = vadd.f32 0.0, %v2275
        %v2277 = vpop.f32.mrf.mxu0
        %v2278 = vpop.f32.mrf.mxu0
        %v2279 = vadd.f32 0.0, %v2278
        %v2280 = vpop.f32.mrf.mxu0
        %2281 = vmatprep.mubr.bf16.mxu0 0
        %2282 = vmatmul.mubr.bf16.gmra.mxu0 %v2177
        %v2283 = vpop.f32.mrf.mxu0
        %v2284 = vadd.f32 0.0, %v2283
        %v2285 = vpop.f32.mrf.mxu0
        %v2286 = vpop.f32.mrf.mxu0
        %v2287 = vadd.f32 0.0, %v2286
        %v2288 = vpop.f32.mrf.mxu0
        %2289 = vmatprep.mubr.bf16.mxu0 0
        %2290 = vmatmul.mubr.bf16.gmra.mxu0 %v2180
        %v2291 = vpop.f32.mrf.mxu0
        %v2292 = vadd.f32 0.0, %v2291
        %v2293 = vpop.f32.mrf.mxu0
        %v2294 = vpop.f32.mrf.mxu0
        %v2295 = vadd.f32 0.0, %v2294
        %v2296 = vpop.f32.mrf.mxu0
        %2297 = vmatprep.mubr.bf16.mxu0 0
        %2298 = vmatmul.mubr.bf16.gmra.mxu0 %v2183
        %v2299 = vpop.f32.mrf.mxu0
        %v2300 = vadd.f32 0.0, %v2299
        %v2301 = vpop.f32.mrf.mxu0
        %v2302 = vpop.f32.mrf.mxu0
        %v2303 = vadd.f32 0.0, %v2302
        %v2304 = vpop.f32.mrf.mxu0
        %2305 = vdwg.mxu0
        %v2306 = vsel %vm1708, 1, 0
        %v2307 = vsel %vm1709, 1, 0
        %v2308 = vsel %vm1710, 1, 0
        %v2309 = vsel %vm1711, 1, 0
        %v2310 = vsel %vm1712, 1, 0
        %v2311 = vsel %vm1713, 1, 0
        %v2312 = vsel %vm1714, 1, 0
        %v2313 = vsel %vm1715, 1, 0
        %v2314 = vsel %vm1716, 1, 0
        %v2315 = vsel %vm1717, 1, 0
        %v2316 = vsel %vm1718, 1, 0
        %v2317 = vsel %vm1719, 1, 0
        %v2318 = vsel %vm1720, 1, 0
        %v2319 = vsel %vm1721, 1, 0
        %v2320 = vsel %vm1722, 1, 0
        %v2321 = vsel %vm1723, 1, 0
        %vm2322 = vcmp.eq.s32.totalorder %v2306, 1
        %vm2323 = vcmp.eq.s32.totalorder %v2307, 1
        %vm2324 = vcmp.eq.s32.totalorder %v2308, 1
        %vm2325 = vcmp.eq.s32.totalorder %v2309, 1
        %vm2326 = vcmp.eq.s32.totalorder %v2310, 1
        %vm2327 = vcmp.eq.s32.totalorder %v2311, 1
        %vm2328 = vcmp.eq.s32.totalorder %v2312, 1
        %vm2329 = vcmp.eq.s32.totalorder %v2313, 1
        %vm2330 = vcmp.eq.s32.totalorder %v2314, 1
        %vm2331 = vcmp.eq.s32.totalorder %v2315, 1
        %vm2332 = vcmp.eq.s32.totalorder %v2316, 1
        %vm2333 = vcmp.eq.s32.totalorder %v2317, 1
        %vm2334 = vcmp.eq.s32.totalorder %v2318, 1
        %vm2335 = vcmp.eq.s32.totalorder %v2319, 1
        %vm2336 = vcmp.eq.s32.totalorder %v2320, 1
        %vm2337 = vcmp.eq.s32.totalorder %v2321, 1
        %v2338 = vsel %vm2322, %v1809, -1e+30
        %v2339 = vsel %vm2323, %v1812, -1e+30
        %v2340 = vsel %vm2324, %v1817, -1e+30
        %v2341 = vsel %vm2325, %v1820, -1e+30
        %v2342 = vsel %vm2326, %v1825, -1e+30
        %v2343 = vsel %vm2327, %v1828, -1e+30
        %v2344 = vsel %vm2328, %v1833, -1e+30
        %v2345 = vsel %vm2329, %v1836, -1e+30
        %v2346 = vsel %vm2330, %v1841, -1e+30
        %v2347 = vsel %vm2331, %v1844, -1e+30
        %v2348 = vsel %vm2332, %v1849, -1e+30
        %v2349 = vsel %vm2333, %v1852, -1e+30
        %v2350 = vsel %vm2334, %v1857, -1e+30
        %v2351 = vsel %vm2335, %v1860, -1e+30
        %v2352 = vsel %vm2336, %v1865, -1e+30
        %v2353 = vsel %vm2337, %v1868, -1e+30
        %v2354 = vsel %vm2322, %v1954, -1e+30
        %v2355 = vsel %vm2323, %v1957, -1e+30
        %v2356 = vsel %vm2324, %v1962, -1e+30
        %v2357 = vsel %vm2325, %v1965, -1e+30
        %v2358 = vsel %vm2326, %v1970, -1e+30
        %v2359 = vsel %vm2327, %v1973, -1e+30
        %v2360 = vsel %vm2328, %v1978, -1e+30
        %v2361 = vsel %vm2329, %v1981, -1e+30
        %v2362 = vsel %vm2330, %v1986, -1e+30
        %v2363 = vsel %vm2331, %v1989, -1e+30
        %v2364 = vsel %vm2332, %v1994, -1e+30
        %v2365 = vsel %vm2333, %v1997, -1e+30
        %v2366 = vsel %vm2334, %v2002, -1e+30
        %v2367 = vsel %vm2335, %v2005, -1e+30
        %v2368 = vsel %vm2336, %v2010, -1e+30
        %v2369 = vsel %vm2337, %v2013, -1e+30
        %v2370 = vsel %vm2322, %v2099, -1e+30
        %v2371 = vsel %vm2323, %v2102, -1e+30
        %v2372 = vsel %vm2324, %v2107, -1e+30
        %v2373 = vsel %vm2325, %v2110, -1e+30
        %v2374 = vsel %vm2326, %v2115, -1e+30
        %v2375 = vsel %vm2327, %v2118, -1e+30
        %v2376 = vsel %vm2328, %v2123, -1e+30
        %v2377 = vsel %vm2329, %v2126, -1e+30
        %v2378 = vsel %vm2330, %v2131, -1e+30
        %v2379 = vsel %vm2331, %v2134, -1e+30
        %v2380 = vsel %vm2332, %v2139, -1e+30
        %v2381 = vsel %vm2333, %v2142, -1e+30
        %v2382 = vsel %vm2334, %v2147, -1e+30
        %v2383 = vsel %vm2335, %v2150, -1e+30
        %v2384 = vsel %vm2336, %v2155, -1e+30
        %v2385 = vsel %vm2337, %v2158, -1e+30
        %v2386 = vsel %vm2322, %v2244, -1e+30
        %v2387 = vsel %vm2323, %v2247, -1e+30
        %v2388 = vsel %vm2324, %v2252, -1e+30
        %v2389 = vsel %vm2325, %v2255, -1e+30
        %v2390 = vsel %vm2326, %v2260, -1e+30
        %v2391 = vsel %vm2327, %v2263, -1e+30
        %v2392 = vsel %vm2328, %v2268, -1e+30
        %v2393 = vsel %vm2329, %v2271, -1e+30
        %v2394 = vsel %vm2330, %v2276, -1e+30
        %v2395 = vsel %vm2331, %v2279, -1e+30
        %v2396 = vsel %vm2332, %v2284, -1e+30
        %v2397 = vsel %vm2333, %v2287, -1e+30
        %v2398 = vsel %vm2334, %v2292, -1e+30
        %v2399 = vsel %vm2335, %v2295, -1e+30
        %v2400 = vsel %vm2336, %v2300, -1e+30
        %v2401 = vsel %vm2337, %v2303, -1e+30
        %2402 = vmax.xlane.f32.xlu0 %v2338
        %v2403 = vpop.xlane.xlu0 %2402
        %2404 = vmax.xlane.f32.xlu0 %v2339
        %v2405 = vpop.xlane.xlu0 %2404
        %2406 = vmax.xlane.f32.xlu0 %v2340
        %v2407 = vpop.xlane.xlu0 %2406
        %2408 = vmax.xlane.f32.xlu0 %v2341
        %v2409 = vpop.xlane.xlu0 %2408
        %2410 = vmax.xlane.f32.xlu0 %v2342
        %v2411 = vpop.xlane.xlu0 %2410
        %2412 = vmax.xlane.f32.xlu0 %v2343
        %v2413 = vpop.xlane.xlu0 %2412
        %2414 = vmax.xlane.f32.xlu0 %v2344
        %v2415 = vpop.xlane.xlu0 %2414
        %2416 = vmax.xlane.f32.xlu0 %v2345
        %v2417 = vpop.xlane.xlu0 %2416
        %2418 = vmax.xlane.f32.xlu0 %v2346
        %v2419 = vpop.xlane.xlu0 %2418
        %2420 = vmax.xlane.f32.xlu0 %v2347
        %v2421 = vpop.xlane.xlu0 %2420
        %2422 = vmax.xlane.f32.xlu0 %v2348
        %v2423 = vpop.xlane.xlu0 %2422
        %2424 = vmax.xlane.f32.xlu0 %v2349
        %v2425 = vpop.xlane.xlu0 %2424
        %2426 = vmax.xlane.f32.xlu0 %v2350
        %v2427 = vpop.xlane.xlu0 %2426
        %2428 = vmax.xlane.f32.xlu0 %v2351
        %v2429 = vpop.xlane.xlu0 %2428
        %2430 = vmax.xlane.f32.xlu0 %v2352
        %v2431 = vpop.xlane.xlu0 %2430
        %2432 = vmax.xlane.f32.xlu0 %v2353
        %v2433 = vpop.xlane.xlu0 %2432
        %2434 = vmax.xlane.f32.xlu0 %v2354
        %v2435 = vpop.xlane.xlu0 %2434
        %2436 = vmax.xlane.f32.xlu0 %v2355
        %v2437 = vpop.xlane.xlu0 %2436
        %2438 = vmax.xlane.f32.xlu0 %v2356
        %v2439 = vpop.xlane.xlu0 %2438
        %2440 = vmax.xlane.f32.xlu0 %v2357
        %v2441 = vpop.xlane.xlu0 %2440
        %2442 = vmax.xlane.f32.xlu0 %v2358
        %v2443 = vpop.xlane.xlu0 %2442
        %2444 = vmax.xlane.f32.xlu0 %v2359
        %v2445 = vpop.xlane.xlu0 %2444
        %2446 = vmax.xlane.f32.xlu0 %v2360
        %v2447 = vpop.xlane.xlu0 %2446
        %2448 = vmax.xlane.f32.xlu0 %v2361
        %v2449 = vpop.xlane.xlu0 %2448
        %2450 = vmax.xlane.f32.xlu0 %v2362
        %v2451 = vpop.xlane.xlu0 %2450
        %2452 = vmax.xlane.f32.xlu0 %v2363
        %v2453 = vpop.xlane.xlu0 %2452
        %2454 = vmax.xlane.f32.xlu0 %v2364
        %v2455 = vpop.xlane.xlu0 %2454
        %2456 = vmax.xlane.f32.xlu0 %v2365
        %v2457 = vpop.xlane.xlu0 %2456
        %2458 = vmax.xlane.f32.xlu0 %v2366
        %v2459 = vpop.xlane.xlu0 %2458
        %2460 = vmax.xlane.f32.xlu0 %v2367
        %v2461 = vpop.xlane.xlu0 %2460
        %2462 = vmax.xlane.f32.xlu0 %v2368
        %v2463 = vpop.xlane.xlu0 %2462
        %2464 = vmax.xlane.f32.xlu0 %v2369
        %v2465 = vpop.xlane.xlu0 %2464
        %2466 = vmax.xlane.f32.xlu0 %v2370
        %v2467 = vpop.xlane.xlu0 %2466
        %2468 = vmax.xlane.f32.xlu0 %v2371
        %v2469 = vpop.xlane.xlu0 %2468
        %2470 = vmax.xlane.f32.xlu0 %v2372
        %v2471 = vpop.xlane.xlu0 %2470
        %2472 = vmax.xlane.f32.xlu0 %v2373
        %v2473 = vpop.xlane.xlu0 %2472
        %2474 = vmax.xlane.f32.xlu0 %v2374
        %v2475 = vpop.xlane.xlu0 %2474
        %2476 = vmax.xlane.f32.xlu0 %v2375
        %v2477 = vpop.xlane.xlu0 %2476
        %2478 = vmax.xlane.f32.xlu0 %v2376
        %v2479 = vpop.xlane.xlu0 %2478
        %2480 = vmax.xlane.f32.xlu0 %v2377
        %v2481 = vpop.xlane.xlu0 %2480
        %2482 = vmax.xlane.f32.xlu0 %v2378
        %v2483 = vpop.xlane.xlu0 %2482
        %2484 = vmax.xlane.f32.xlu0 %v2379
        %v2485 = vpop.xlane.xlu0 %2484
        %2486 = vmax.xlane.f32.xlu0 %v2380
        %v2487 = vpop.xlane.xlu0 %2486
        %2488 = vmax.xlane.f32.xlu0 %v2381
        %v2489 = vpop.xlane.xlu0 %2488
        %2490 = vmax.xlane.f32.xlu0 %v2382
        %v2491 = vpop.xlane.xlu0 %2490
        %2492 = vmax.xlane.f32.xlu0 %v2383
        %v2493 = vpop.xlane.xlu0 %2492
        %2494 = vmax.xlane.f32.xlu0 %v2384
        %v2495 = vpop.xlane.xlu0 %2494
        %2496 = vmax.xlane.f32.xlu0 %v2385
        %v2497 = vpop.xlane.xlu0 %2496
        %2498 = vmax.xlane.f32.xlu0 %v2386
        %v2499 = vpop.xlane.xlu0 %2498
        %2500 = vmax.xlane.f32.xlu0 %v2387
        %v2501 = vpop.xlane.xlu0 %2500
        %2502 = vmax.xlane.f32.xlu0 %v2388
        %v2503 = vpop.xlane.xlu0 %2502
        %2504 = vmax.xlane.f32.xlu0 %v2389
        %v2505 = vpop.xlane.xlu0 %2504
        %2506 = vmax.xlane.f32.xlu0 %v2390
        %v2507 = vpop.xlane.xlu0 %2506
        %2508 = vmax.xlane.f32.xlu0 %v2391
        %v2509 = vpop.xlane.xlu0 %2508
        %2510 = vmax.xlane.f32.xlu0 %v2392
        %v2511 = vpop.xlane.xlu0 %2510
        %2512 = vmax.xlane.f32.xlu0 %v2393
        %v2513 = vpop.xlane.xlu0 %2512
        %2514 = vmax.xlane.f32.xlu0 %v2394
        %v2515 = vpop.xlane.xlu0 %2514
        %2516 = vmax.xlane.f32.xlu0 %v2395
        %v2517 = vpop.xlane.xlu0 %2516
        %2518 = vmax.xlane.f32.xlu0 %v2396
        %v2519 = vpop.xlane.xlu0 %2518
        %2520 = vmax.xlane.f32.xlu0 %v2397
        %v2521 = vpop.xlane.xlu0 %2520
        %2522 = vmax.xlane.f32.xlu0 %v2398
        %v2523 = vpop.xlane.xlu0 %2522
        %2524 = vmax.xlane.f32.xlu0 %v2399
        %v2525 = vpop.xlane.xlu0 %2524
        %2526 = vmax.xlane.f32.xlu0 %v2400
        %v2527 = vpop.xlane.xlu0 %2526
        %2528 = vmax.xlane.f32.xlu0 %v2401
        %v2529 = vpop.xlane.xlu0 %2528
        %v2530 = vsub.f32 %v2338, %v2403
        %v2531 = vsub.f32 %v2339, %v2405
        %v2532 = vsub.f32 %v2340, %v2407
        %v2533 = vsub.f32 %v2341, %v2409
        %v2534 = vsub.f32 %v2342, %v2411
        %v2535 = vsub.f32 %v2343, %v2413
        %v2536 = vsub.f32 %v2344, %v2415
        %v2537 = vsub.f32 %v2345, %v2417
        %v2538 = vsub.f32 %v2346, %v2419
        %v2539 = vsub.f32 %v2347, %v2421
        %v2540 = vsub.f32 %v2348, %v2423
        %v2541 = vsub.f32 %v2349, %v2425
        %v2542 = vsub.f32 %v2350, %v2427
        %v2543 = vsub.f32 %v2351, %v2429
        %v2544 = vsub.f32 %v2352, %v2431
        %v2545 = vsub.f32 %v2353, %v2433
        %v2546 = vsub.f32 %v2354, %v2435
        %v2547 = vsub.f32 %v2355, %v2437
        %v2548 = vsub.f32 %v2356, %v2439
        %v2549 = vsub.f32 %v2357, %v2441
        %v2550 = vsub.f32 %v2358, %v2443
        %v2551 = vsub.f32 %v2359, %v2445
        %v2552 = vsub.f32 %v2360, %v2447
        %v2553 = vsub.f32 %v2361, %v2449
        %v2554 = vsub.f32 %v2362, %v2451
        %v2555 = vsub.f32 %v2363, %v2453
        %v2556 = vsub.f32 %v2364, %v2455
        %v2557 = vsub.f32 %v2365, %v2457
        %v2558 = vsub.f32 %v2366, %v2459
        %v2559 = vsub.f32 %v2367, %v2461
        %v2560 = vsub.f32 %v2368, %v2463
        %v2561 = vsub.f32 %v2369, %v2465
        %v2562 = vsub.f32 %v2370, %v2467
        %v2563 = vsub.f32 %v2371, %v2469
        %v2564 = vsub.f32 %v2372, %v2471
        %v2565 = vsub.f32 %v2373, %v2473
        %v2566 = vsub.f32 %v2374, %v2475
        %v2567 = vsub.f32 %v2375, %v2477
        %v2568 = vsub.f32 %v2376, %v2479
        %v2569 = vsub.f32 %v2377, %v2481
        %v2570 = vsub.f32 %v2378, %v2483
        %v2571 = vsub.f32 %v2379, %v2485
        %v2572 = vsub.f32 %v2380, %v2487
        %v2573 = vsub.f32 %v2381, %v2489
        %v2574 = vsub.f32 %v2382, %v2491
        %v2575 = vsub.f32 %v2383, %v2493
        %v2576 = vsub.f32 %v2384, %v2495
        %v2577 = vsub.f32 %v2385, %v2497
        %v2578 = vsub.f32 %v2386, %v2499
        %v2579 = vsub.f32 %v2387, %v2501
        %v2580 = vsub.f32 %v2388, %v2503
        %v2581 = vsub.f32 %v2389, %v2505
        %v2582 = vsub.f32 %v2390, %v2507
        %v2583 = vsub.f32 %v2391, %v2509
        %v2584 = vsub.f32 %v2392, %v2511
        %v2585 = vsub.f32 %v2393, %v2513
        %v2586 = vsub.f32 %v2394, %v2515
        %v2587 = vsub.f32 %v2395, %v2517
        %v2588 = vsub.f32 %v2396, %v2519
        %v2589 = vsub.f32 %v2397, %v2521
        %v2590 = vsub.f32 %v2398, %v2523
        %v2591 = vsub.f32 %v2399, %v2525
        %v2592 = vsub.f32 %v2400, %v2527
        %v2593 = vsub.f32 %v2401, %v2529
        %v2594 = vmul.f32 %v2530, 1.442695
        %v2595 = vpow.pop %v2594
        %v2596 = vmul.f32 %v2531, 1.442695
        %v2597 = vpow.pop %v2596
        %v2598 = vmul.f32 %v2532, 1.442695
        %v2599 = vpow.pop %v2598
        %v2600 = vmul.f32 %v2533, 1.442695
        %v2601 = vpow.pop %v2600
        %v2602 = vmul.f32 %v2534, 1.442695
        %v2603 = vpow.pop %v2602
        %v2604 = vmul.f32 %v2535, 1.442695
        %v2605 = vpow.pop %v2604
        %v2606 = vmul.f32 %v2536, 1.442695
        %v2607 = vpow.pop %v2606
        %v2608 = vmul.f32 %v2537, 1.442695
        %v2609 = vpow.pop %v2608
        %v2610 = vmul.f32 %v2538, 1.442695
        %v2611 = vpow.pop %v2610
        %v2612 = vmul.f32 %v2539, 1.442695
        %v2613 = vpow.pop %v2612
        %v2614 = vmul.f32 %v2540, 1.442695
        %v2615 = vpow.pop %v2614
        %v2616 = vmul.f32 %v2541, 1.442695
        %v2617 = vpow.pop %v2616
        %v2618 = vmul.f32 %v2542, 1.442695
        %v2619 = vpow.pop %v2618
        %v2620 = vmul.f32 %v2543, 1.442695
        %v2621 = vpow.pop %v2620
        %v2622 = vmul.f32 %v2544, 1.442695
        %v2623 = vpow.pop %v2622
        %v2624 = vmul.f32 %v2545, 1.442695
        %v2625 = vpow.pop %v2624
        %v2626 = vmul.f32 %v2546, 1.442695
        %v2627 = vpow.pop %v2626
        %v2628 = vmul.f32 %v2547, 1.442695
        %v2629 = vpow.pop %v2628
        %v2630 = vmul.f32 %v2548, 1.442695
        %v2631 = vpow.pop %v2630
        %v2632 = vmul.f32 %v2549, 1.442695
        %v2633 = vpow.pop %v2632
        %v2634 = vmul.f32 %v2550, 1.442695
        %v2635 = vpow.pop %v2634
        %v2636 = vmul.f32 %v2551, 1.442695
        %v2637 = vpow.pop %v2636
        %v2638 = vmul.f32 %v2552, 1.442695
        %v2639 = vpow.pop %v2638
        %v2640 = vmul.f32 %v2553, 1.442695
        %v2641 = vpow.pop %v2640
        %v2642 = vmul.f32 %v2554, 1.442695
        %v2643 = vpow.pop %v2642
        %v2644 = vmul.f32 %v2555, 1.442695
        %v2645 = vpow.pop %v2644
        %v2646 = vmul.f32 %v2556, 1.442695
        %v2647 = vpow.pop %v2646
        %v2648 = vmul.f32 %v2557, 1.442695
        %v2649 = vpow.pop %v2648
        %v2650 = vmul.f32 %v2558, 1.442695
        %v2651 = vpow.pop %v2650
        %v2652 = vmul.f32 %v2559, 1.442695
        %v2653 = vpow.pop %v2652
        %v2654 = vmul.f32 %v2560, 1.442695
        %v2655 = vpow.pop %v2654
        %v2656 = vmul.f32 %v2561, 1.442695
        %v2657 = vpow.pop %v2656
        %v2658 = vmul.f32 %v2562, 1.442695
        %v2659 = vpow.pop %v2658
        %v2660 = vmul.f32 %v2563, 1.442695
        %v2661 = vpow.pop %v2660
        %v2662 = vmul.f32 %v2564, 1.442695
        %v2663 = vpow.pop %v2662
        %v2664 = vmul.f32 %v2565, 1.442695
        %v2665 = vpow.pop %v2664
        %v2666 = vmul.f32 %v2566, 1.442695
        %v2667 = vpow.pop %v2666
        %v2668 = vmul.f32 %v2567, 1.442695
        %v2669 = vpow.pop %v2668
        %v2670 = vmul.f32 %v2568, 1.442695
        %v2671 = vpow.pop %v2670
        %v2672 = vmul.f32 %v2569, 1.442695
        %v2673 = vpow.pop %v2672
        %v2674 = vmul.f32 %v2570, 1.442695
        %v2675 = vpow.pop %v2674
        %v2676 = vmul.f32 %v2571, 1.442695
        %v2677 = vpow.pop %v2676
        %v2678 = vmul.f32 %v2572, 1.442695
        %v2679 = vpow.pop %v2678
        %v2680 = vmul.f32 %v2573, 1.442695
        %v2681 = vpow.pop %v2680
        %v2682 = vmul.f32 %v2574, 1.442695
        %v2683 = vpow.pop %v2682
        %v2684 = vmul.f32 %v2575, 1.442695
        %v2685 = vpow.pop %v2684
        %v2686 = vmul.f32 %v2576, 1.442695
        %v2687 = vpow.pop %v2686
        %v2688 = vmul.f32 %v2577, 1.442695
        %v2689 = vpow.pop %v2688
        %v2690 = vmul.f32 %v2578, 1.442695
        %v2691 = vpow.pop %v2690
        %v2692 = vmul.f32 %v2579, 1.442695
        %v2693 = vpow.pop %v2692
        %v2694 = vmul.f32 %v2580, 1.442695
        %v2695 = vpow.pop %v2694
        %v2696 = vmul.f32 %v2581, 1.442695
        %v2697 = vpow.pop %v2696
        %v2698 = vmul.f32 %v2582, 1.442695
        %v2699 = vpow.pop %v2698
        %v2700 = vmul.f32 %v2583, 1.442695
        %v2701 = vpow.pop %v2700
        %v2702 = vmul.f32 %v2584, 1.442695
        %v2703 = vpow.pop %v2702
        %v2704 = vmul.f32 %v2585, 1.442695
        %v2705 = vpow.pop %v2704
        %v2706 = vmul.f32 %v2586, 1.442695
        %v2707 = vpow.pop %v2706
        %v2708 = vmul.f32 %v2587, 1.442695
        %v2709 = vpow.pop %v2708
        %v2710 = vmul.f32 %v2588, 1.442695
        %v2711 = vpow.pop %v2710
        %v2712 = vmul.f32 %v2589, 1.442695
        %v2713 = vpow.pop %v2712
        %v2714 = vmul.f32 %v2590, 1.442695
        %v2715 = vpow.pop %v2714
        %v2716 = vmul.f32 %v2591, 1.442695
        %v2717 = vpow.pop %v2716
        %v2718 = vmul.f32 %v2592, 1.442695
        %v2719 = vpow.pop %v2718
        %v2720 = vmul.f32 %v2593, 1.442695
        %v2721 = vpow.pop %v2720
        %2722 = vadd.xlane.f32.xlu0 %v2595
        %v2723 = vpop.xlane.xlu0 %2722
        %2724 = vadd.xlane.f32.xlu0 %v2597
        %v2725 = vpop.xlane.xlu0 %2724
        %2726 = vadd.xlane.f32.xlu0 %v2599
        %v2727 = vpop.xlane.xlu0 %2726
        %2728 = vadd.xlane.f32.xlu0 %v2601
        %v2729 = vpop.xlane.xlu0 %2728
        %2730 = vadd.xlane.f32.xlu0 %v2603
        %v2731 = vpop.xlane.xlu0 %2730
        %2732 = vadd.xlane.f32.xlu0 %v2605
        %v2733 = vpop.xlane.xlu0 %2732
        %2734 = vadd.xlane.f32.xlu0 %v2607
        %v2735 = vpop.xlane.xlu0 %2734
        %2736 = vadd.xlane.f32.xlu0 %v2609
        %v2737 = vpop.xlane.xlu0 %2736
        %2738 = vadd.xlane.f32.xlu0 %v2611
        %v2739 = vpop.xlane.xlu0 %2738
        %2740 = vadd.xlane.f32.xlu0 %v2613
        %v2741 = vpop.xlane.xlu0 %2740
        %2742 = vadd.xlane.f32.xlu0 %v2615
        %v2743 = vpop.xlane.xlu0 %2742
        %2744 = vadd.xlane.f32.xlu0 %v2617
        %v2745 = vpop.xlane.xlu0 %2744
        %2746 = vadd.xlane.f32.xlu0 %v2619
        %v2747 = vpop.xlane.xlu0 %2746
        %2748 = vadd.xlane.f32.xlu0 %v2621
        %v2749 = vpop.xlane.xlu0 %2748
        %2750 = vadd.xlane.f32.xlu0 %v2623
        %v2751 = vpop.xlane.xlu0 %2750
        %2752 = vadd.xlane.f32.xlu0 %v2625
        %v2753 = vpop.xlane.xlu0 %2752
        %2754 = vadd.xlane.f32.xlu0 %v2627
        %v2755 = vpop.xlane.xlu0 %2754
        %2756 = vadd.xlane.f32.xlu0 %v2629
        %v2757 = vpop.xlane.xlu0 %2756
        %2758 = vadd.xlane.f32.xlu0 %v2631
        %v2759 = vpop.xlane.xlu0 %2758
        %2760 = vadd.xlane.f32.xlu0 %v2633
        %v2761 = vpop.xlane.xlu0 %2760
        %2762 = vadd.xlane.f32.xlu0 %v2635
        %v2763 = vpop.xlane.xlu0 %2762
        %2764 = vadd.xlane.f32.xlu0 %v2637
        %v2765 = vpop.xlane.xlu0 %2764
        %2766 = vadd.xlane.f32.xlu0 %v2639
        %v2767 = vpop.xlane.xlu0 %2766
        %2768 = vadd.xlane.f32.xlu0 %v2641
        %v2769 = vpop.xlane.xlu0 %2768
        %2770 = vadd.xlane.f32.xlu0 %v2643
        %v2771 = vpop.xlane.xlu0 %2770
        %2772 = vadd.xlane.f32.xlu0 %v2645
        %v2773 = vpop.xlane.xlu0 %2772
        %2774 = vadd.xlane.f32.xlu0 %v2647
        %v2775 = vpop.xlane.xlu0 %2774
        %2776 = vadd.xlane.f32.xlu0 %v2649
        %v2777 = vpop.xlane.xlu0 %2776
        %2778 = vadd.xlane.f32.xlu0 %v2651
        %v2779 = vpop.xlane.xlu0 %2778
        %2780 = vadd.xlane.f32.xlu0 %v2653
        %v2781 = vpop.xlane.xlu0 %2780
        %2782 = vadd.xlane.f32.xlu0 %v2655
        %v2783 = vpop.xlane.xlu0 %2782
        %2784 = vadd.xlane.f32.xlu0 %v2657
        %v2785 = vpop.xlane.xlu0 %2784
        %2786 = vadd.xlane.f32.xlu0 %v2659
        %v2787 = vpop.xlane.xlu0 %2786
        %2788 = vadd.xlane.f32.xlu0 %v2661
        %v2789 = vpop.xlane.xlu0 %2788
        %2790 = vadd.xlane.f32.xlu0 %v2663
        %v2791 = vpop.xlane.xlu0 %2790
        %2792 = vadd.xlane.f32.xlu0 %v2665
        %v2793 = vpop.xlane.xlu0 %2792
        %2794 = vadd.xlane.f32.xlu0 %v2667
        %v2795 = vpop.xlane.xlu0 %2794
        %2796 = vadd.xlane.f32.xlu0 %v2669
        %v2797 = vpop.xlane.xlu0 %2796
        %2798 = vadd.xlane.f32.xlu0 %v2671
        %v2799 = vpop.xlane.xlu0 %2798
        %2800 = vadd.xlane.f32.xlu0 %v2673
        %v2801 = vpop.xlane.xlu0 %2800
        %2802 = vadd.xlane.f32.xlu0 %v2675
        %v2803 = vpop.xlane.xlu0 %2802
        %2804 = vadd.xlane.f32.xlu0 %v2677
        %v2805 = vpop.xlane.xlu0 %2804
        %2806 = vadd.xlane.f32.xlu0 %v2679
        %v2807 = vpop.xlane.xlu0 %2806
        %2808 = vadd.xlane.f32.xlu0 %v2681
        %v2809 = vpop.xlane.xlu0 %2808
        %2810 = vadd.xlane.f32.xlu0 %v2683
        %v2811 = vpop.xlane.xlu0 %2810
        %2812 = vadd.xlane.f32.xlu0 %v2685
        %v2813 = vpop.xlane.xlu0 %2812
        %2814 = vadd.xlane.f32.xlu0 %v2687
        %v2815 = vpop.xlane.xlu0 %2814
        %2816 = vadd.xlane.f32.xlu0 %v2689
        %v2817 = vpop.xlane.xlu0 %2816
        %2818 = vadd.xlane.f32.xlu0 %v2691
        %v2819 = vpop.xlane.xlu0 %2818
        %2820 = vadd.xlane.f32.xlu0 %v2693
        %v2821 = vpop.xlane.xlu0 %2820
        %2822 = vadd.xlane.f32.xlu0 %v2695
        %v2823 = vpop.xlane.xlu0 %2822
        %2824 = vadd.xlane.f32.xlu0 %v2697
        %v2825 = vpop.xlane.xlu0 %2824
        %2826 = vadd.xlane.f32.xlu0 %v2699
        %v2827 = vpop.xlane.xlu0 %2826
        %2828 = vadd.xlane.f32.xlu0 %v2701
        %v2829 = vpop.xlane.xlu0 %2828
        %2830 = vadd.xlane.f32.xlu0 %v2703
        %v2831 = vpop.xlane.xlu0 %2830
        %2832 = vadd.xlane.f32.xlu0 %v2705
        %v2833 = vpop.xlane.xlu0 %2832
        %2834 = vadd.xlane.f32.xlu0 %v2707
        %v2835 = vpop.xlane.xlu0 %2834
        %2836 = vadd.xlane.f32.xlu0 %v2709
        %v2837 = vpop.xlane.xlu0 %2836
        %2838 = vadd.xlane.f32.xlu0 %v2711
        %v2839 = vpop.xlane.xlu0 %2838
        %2840 = vadd.xlane.f32.xlu0 %v2713
        %v2841 = vpop.xlane.xlu0 %2840
        %2842 = vadd.xlane.f32.xlu0 %v2715
        %v2843 = vpop.xlane.xlu0 %2842
        %2844 = vadd.xlane.f32.xlu0 %v2717
        %v2845 = vpop.xlane.xlu0 %2844
        %2846 = vadd.xlane.f32.xlu0 %v2719
        %v2847 = vpop.xlane.xlu0 %2846
        %2848 = vadd.xlane.f32.xlu0 %v2721
        %v2849 = vpop.xlane.xlu0 %2848
        %v2850 = vrcp.pop %v2723
        %v2851 = vrcp.pop %v2725
        %v2852 = vrcp.pop %v2727
        %v2853 = vrcp.pop %v2729
        %v2854 = vrcp.pop %v2731
        %v2855 = vrcp.pop %v2733
        %v2856 = vrcp.pop %v2735
        %v2857 = vrcp.pop %v2737
        %v2858 = vrcp.pop %v2739
        %v2859 = vrcp.pop %v2741
        %v2860 = vrcp.pop %v2743
        %v2861 = vrcp.pop %v2745
        %v2862 = vrcp.pop %v2747
        %v2863 = vrcp.pop %v2749
        %v2864 = vrcp.pop %v2751
        %v2865 = vrcp.pop %v2753
        %v2866 = vrcp.pop %v2755
        %v2867 = vrcp.pop %v2757
        %v2868 = vrcp.pop %v2759
        %v2869 = vrcp.pop %v2761
        %v2870 = vrcp.pop %v2763
        %v2871 = vrcp.pop %v2765
        %v2872 = vrcp.pop %v2767
        %v2873 = vrcp.pop %v2769
        %v2874 = vrcp.pop %v2771
        %v2875 = vrcp.pop %v2773
        %v2876 = vrcp.pop %v2775
        %v2877 = vrcp.pop %v2777
        %v2878 = vrcp.pop %v2779
        %v2879 = vrcp.pop %v2781
        %v2880 = vrcp.pop %v2783
        %v2881 = vrcp.pop %v2785
        %v2882 = vrcp.pop %v2787
        %v2883 = vrcp.pop %v2789
        %v2884 = vrcp.pop %v2791
        %v2885 = vrcp.pop %v2793
        %v2886 = vrcp.pop %v2795
        %v2887 = vrcp.pop %v2797
        %v2888 = vrcp.pop %v2799
        %v2889 = vrcp.pop %v2801
        %v2890 = vrcp.pop %v2803
        %v2891 = vrcp.pop %v2805
        %v2892 = vrcp.pop %v2807
        %v2893 = vrcp.pop %v2809
        %v2894 = vrcp.pop %v2811
        %v2895 = vrcp.pop %v2813
        %v2896 = vrcp.pop %v2815
        %v2897 = vrcp.pop %v2817
        %v2898 = vrcp.pop %v2819
        %v2899 = vrcp.pop %v2821
        %v2900 = vrcp.pop %v2823
        %v2901 = vrcp.pop %v2825
        %v2902 = vrcp.pop %v2827
        %v2903 = vrcp.pop %v2829
        %v2904 = vrcp.pop %v2831
        %v2905 = vrcp.pop %v2833
        %v2906 = vrcp.pop %v2835
        %v2907 = vrcp.pop %v2837
        %v2908 = vrcp.pop %v2839
        %v2909 = vrcp.pop %v2841
        %v2910 = vrcp.pop %v2843
        %v2911 = vrcp.pop %v2845
        %v2912 = vrcp.pop %v2847
        %v2913 = vrcp.pop %v2849
        %v2914 = vmul.f32 %v2595, %v2850
        %v2915 = vmul.f32 %v2597, %v2851
        %v2916 = vmul.f32 %v2599, %v2852
        %v2917 = vmul.f32 %v2601, %v2853
        %v2918 = vmul.f32 %v2603, %v2854
        %v2919 = vmul.f32 %v2605, %v2855
        %v2920 = vmul.f32 %v2607, %v2856
        %v2921 = vmul.f32 %v2609, %v2857
        %v2922 = vmul.f32 %v2611, %v2858
        %v2923 = vmul.f32 %v2613, %v2859
        %v2924 = vmul.f32 %v2615, %v2860
        %v2925 = vmul.f32 %v2617, %v2861
        %v2926 = vmul.f32 %v2619, %v2862
        %v2927 = vmul.f32 %v2621, %v2863
        %v2928 = vmul.f32 %v2623, %v2864
        %v2929 = vmul.f32 %v2625, %v2865
        %v2930 = vmul.f32 %v2627, %v2866
        %v2931 = vmul.f32 %v2629, %v2867
        %v2932 = vmul.f32 %v2631, %v2868
        %v2933 = vmul.f32 %v2633, %v2869
        %v2934 = vmul.f32 %v2635, %v2870
        %v2935 = vmul.f32 %v2637, %v2871
        %v2936 = vmul.f32 %v2639, %v2872
        %v2937 = vmul.f32 %v2641, %v2873
        %v2938 = vmul.f32 %v2643, %v2874
        %v2939 = vmul.f32 %v2645, %v2875
        %v2940 = vmul.f32 %v2647, %v2876
        %v2941 = vmul.f32 %v2649, %v2877
        %v2942 = vmul.f32 %v2651, %v2878
        %v2943 = vmul.f32 %v2653, %v2879
        %v2944 = vmul.f32 %v2655, %v2880
        %v2945 = vmul.f32 %v2657, %v2881
        %v2946 = vmul.f32 %v2659, %v2882
        %v2947 = vmul.f32 %v2661, %v2883
        %v2948 = vmul.f32 %v2663, %v2884
        %v2949 = vmul.f32 %v2665, %v2885
        %v2950 = vmul.f32 %v2667, %v2886
        %v2951 = vmul.f32 %v2669, %v2887
        %v2952 = vmul.f32 %v2671, %v2888
        %v2953 = vmul.f32 %v2673, %v2889
        %v2954 = vmul.f32 %v2675, %v2890
        %v2955 = vmul.f32 %v2677, %v2891
        %v2956 = vmul.f32 %v2679, %v2892
        %v2957 = vmul.f32 %v2681, %v2893
        %v2958 = vmul.f32 %v2683, %v2894
        %v2959 = vmul.f32 %v2685, %v2895
        %v2960 = vmul.f32 %v2687, %v2896
        %v2961 = vmul.f32 %v2689, %v2897
        %v2962 = vmul.f32 %v2691, %v2898
        %v2963 = vmul.f32 %v2693, %v2899
        %v2964 = vmul.f32 %v2695, %v2900
        %v2965 = vmul.f32 %v2697, %v2901
        %v2966 = vmul.f32 %v2699, %v2902
        %v2967 = vmul.f32 %v2701, %v2903
        %v2968 = vmul.f32 %v2703, %v2904
        %v2969 = vmul.f32 %v2705, %v2905
        %v2970 = vmul.f32 %v2707, %v2906
        %v2971 = vmul.f32 %v2709, %v2907
        %v2972 = vmul.f32 %v2711, %v2908
        %v2973 = vmul.f32 %v2713, %v2909
        %v2974 = vmul.f32 %v2715, %v2910
        %v2975 = vmul.f32 %v2717, %v2911
        %v2976 = vmul.f32 %v2719, %v2912
        %v2977 = vmul.f32 %v2721, %v2913
        %v2978 = vpack.c.bf16 %v2915, %v2914
        %v2979 = vpack.c.bf16 %v2917, %v2916
        %v2980 = vpack.c.bf16 %v2919, %v2918
        %v2981 = vpack.c.bf16 %v2921, %v2920
        %v2982 = vpack.c.bf16 %v2923, %v2922
        %v2983 = vpack.c.bf16 %v2925, %v2924
        %v2984 = vpack.c.bf16 %v2927, %v2926
        %v2985 = vpack.c.bf16 %v2929, %v2928
        %v2986 = vpack.c.bf16 %v2931, %v2930
        %v2987 = vpack.c.bf16 %v2933, %v2932
        %v2988 = vpack.c.bf16 %v2935, %v2934
        %v2989 = vpack.c.bf16 %v2937, %v2936
        %v2990 = vpack.c.bf16 %v2939, %v2938
        %v2991 = vpack.c.bf16 %v2941, %v2940
        %v2992 = vpack.c.bf16 %v2943, %v2942
        %v2993 = vpack.c.bf16 %v2945, %v2944
        %v2994 = vpack.c.bf16 %v2947, %v2946
        %v2995 = vpack.c.bf16 %v2949, %v2948
        %v2996 = vpack.c.bf16 %v2951, %v2950
        %v2997 = vpack.c.bf16 %v2953, %v2952
        %v2998 = vpack.c.bf16 %v2955, %v2954
        %v2999 = vpack.c.bf16 %v2957, %v2956
        %v3000 = vpack.c.bf16 %v2959, %v2958
        %v3001 = vpack.c.bf16 %v2961, %v2960
        %v3002 = vpack.c.bf16 %v2963, %v2962
        %v3003 = vpack.c.bf16 %v2965, %v2964
        %v3004 = vpack.c.bf16 %v2967, %v2966
        %v3005 = vpack.c.bf16 %v2969, %v2968
        %v3006 = vpack.c.bf16 %v2971, %v2970
        %v3007 = vpack.c.bf16 %v2973, %v2972
        %v3008 = vpack.c.bf16 %v2975, %v2974
        %v3009 = vpack.c.bf16 %v2977, %v2976
        %3010 = vmatprep.subr.bf16.mxu0 0
        %3011 = vmatpush1.bf16.msra.mxu0 %v1664
        %3012 = vmatprep.subr.bf16.mxu0 0
        %3013 = vmatpush1.bf16.msra.mxu0 %v1663
        %3014 = vmatprep.subr.bf16.mxu0 0
        %3015 = vmatpush1.bf16.msra.mxu0 %v1662
        %3016 = vmatprep.subr.bf16.mxu0 0
        %3017 = vmatpush1.bf16.msra.mxu0 %v1661
        %3018 = vmatprep.subr.bf16.mxu0 0
        %3019 = vmatpush1.bf16.msra.mxu0 %v1660
        %3020 = vmatprep.subr.bf16.mxu0 0
        %3021 = vmatpush1.bf16.msra.mxu0 %v1659
        %3022 = vmatprep.subr.bf16.mxu0 0
        %3023 = vmatpush1.bf16.msra.mxu0 %v1658
        %3024 = vmatprep.subr.bf16.mxu0 0
        %3025 = vmatpush1.bf16.msra.mxu0 %v1657
        %3026 = vmatprep.subr.bf16.mxu0 0
        %3027 = vmatpush2.bf16.msra.mxu0 0
        %3028 = vmatprep.subr.bf16.mxu0 0
        %3029 = vmatpush2.bf16.msra.mxu0 0
        %3030 = vmatprep.subr.bf16.mxu0 0
        %3031 = vmatpush2.bf16.msra.mxu0 0
        %3032 = vmatprep.subr.bf16.mxu0 0
        %3033 = vmatpush2.bf16.msra.mxu0 0
        %3034 = vmatprep.subr.bf16.mxu0 0
        %3035 = vmatpush2.bf16.msra.mxu0 0
        %3036 = vmatprep.subr.bf16.mxu0 0
        %3037 = vmatpush2.bf16.msra.mxu0 0
        %3038 = vmatprep.subr.bf16.mxu0 0
        %3039 = vmatpush2.bf16.msra.mxu0 0
        %3040 = vmatprep.subr.bf16.mxu0 0
        %3041 = vmatpush2.bf16.msra.mxu0 0
        %3042 = vmatprep.mubr.bf16.mxu0 0
        %3043 = vmatmul.mubr.bf16.gmra.mxu0 %v2978
        %v3044 = vpop.f32.mrf.mxu0
        %v3045 = vadd.f32 0.0, %v3044
        %v3046 = vpop.f32.mrf.mxu0
        %v3047 = vpop.f32.mrf.mxu0
        %v3048 = vadd.f32 0.0, %v3047
        %v3049 = vpop.f32.mrf.mxu0
        %3050 = vmatprep.mubr.bf16.mxu0 0
        %3051 = vmatmul.mubr.bf16.gmra.mxu0 %v2979
        %v3052 = vpop.f32.mrf.mxu0
        %v3053 = vadd.f32 0.0, %v3052
        %v3054 = vpop.f32.mrf.mxu0
        %v3055 = vpop.f32.mrf.mxu0
        %v3056 = vadd.f32 0.0, %v3055
        %v3057 = vpop.f32.mrf.mxu0
        %3058 = vmatprep.mubr.bf16.mxu0 0
        %3059 = vmatmul.mubr.bf16.gmra.mxu0 %v2980
        %v3060 = vpop.f32.mrf.mxu0
        %v3061 = vadd.f32 0.0, %v3060
        %v3062 = vpop.f32.mrf.mxu0
        %v3063 = vpop.f32.mrf.mxu0
        %v3064 = vadd.f32 0.0, %v3063
        %v3065 = vpop.f32.mrf.mxu0
        %3066 = vmatprep.mubr.bf16.mxu0 0
        %3067 = vmatmul.mubr.bf16.gmra.mxu0 %v2981
        %v3068 = vpop.f32.mrf.mxu0
        %v3069 = vadd.f32 0.0, %v3068
        %v3070 = vpop.f32.mrf.mxu0
        %v3071 = vpop.f32.mrf.mxu0
        %v3072 = vadd.f32 0.0, %v3071
        %v3073 = vpop.f32.mrf.mxu0
        %3074 = vmatprep.mubr.bf16.mxu0 0
        %3075 = vmatmul.mubr.bf16.gmra.mxu0 %v2982
        %v3076 = vpop.f32.mrf.mxu0
        %v3077 = vadd.f32 0.0, %v3076
        %v3078 = vpop.f32.mrf.mxu0
        %v3079 = vpop.f32.mrf.mxu0
        %v3080 = vadd.f32 0.0, %v3079
        %v3081 = vpop.f32.mrf.mxu0
        %3082 = vmatprep.mubr.bf16.mxu0 0
        %3083 = vmatmul.mubr.bf16.gmra.mxu0 %v2983
        %v3084 = vpop.f32.mrf.mxu0
        %v3085 = vadd.f32 0.0, %v3084
        %v3086 = vpop.f32.mrf.mxu0
        %v3087 = vpop.f32.mrf.mxu0
        %v3088 = vadd.f32 0.0, %v3087
        %v3089 = vpop.f32.mrf.mxu0
        %3090 = vmatprep.mubr.bf16.mxu0 0
        %3091 = vmatmul.mubr.bf16.gmra.mxu0 %v2984
        %v3092 = vpop.f32.mrf.mxu0
        %v3093 = vadd.f32 0.0, %v3092
        %v3094 = vpop.f32.mrf.mxu0
        %v3095 = vpop.f32.mrf.mxu0
        %v3096 = vadd.f32 0.0, %v3095
        %v3097 = vpop.f32.mrf.mxu0
        %3098 = vmatprep.mubr.bf16.mxu0 0
        %3099 = vmatmul.mubr.bf16.gmra.mxu0 %v2985
        %v3100 = vpop.f32.mrf.mxu0
        %v3101 = vadd.f32 0.0, %v3100
        %v3102 = vpop.f32.mrf.mxu0
        %v3103 = vpop.f32.mrf.mxu0
        %v3104 = vadd.f32 0.0, %v3103
        %v3105 = vpop.f32.mrf.mxu0
        %3106 = vdwg.mxu0
        %3107 = vmatprep.subr.bf16.mxu0 0
        %3108 = vmatpush1.bf16.msra.mxu0 %v1672
        %3109 = vmatprep.subr.bf16.mxu0 0
        %3110 = vmatpush1.bf16.msra.mxu0 %v1671
        %3111 = vmatprep.subr.bf16.mxu0 0
        %3112 = vmatpush1.bf16.msra.mxu0 %v1670
        %3113 = vmatprep.subr.bf16.mxu0 0
        %3114 = vmatpush1.bf16.msra.mxu0 %v1669
        %3115 = vmatprep.subr.bf16.mxu0 0
        %3116 = vmatpush1.bf16.msra.mxu0 %v1668
        %3117 = vmatprep.subr.bf16.mxu0 0
        %3118 = vmatpush1.bf16.msra.mxu0 %v1667
        %3119 = vmatprep.subr.bf16.mxu0 0
        %3120 = vmatpush1.bf16.msra.mxu0 %v1666
        %3121 = vmatprep.subr.bf16.mxu0 0
        %3122 = vmatpush1.bf16.msra.mxu0 %v1665
        %3123 = vmatprep.subr.bf16.mxu0 0
        %3124 = vmatpush2.bf16.msra.mxu0 0
        %3125 = vmatprep.subr.bf16.mxu0 0
        %3126 = vmatpush2.bf16.msra.mxu0 0
        %3127 = vmatprep.subr.bf16.mxu0 0
        %3128 = vmatpush2.bf16.msra.mxu0 0
        %3129 = vmatprep.subr.bf16.mxu0 0
        %3130 = vmatpush2.bf16.msra.mxu0 0
        %3131 = vmatprep.subr.bf16.mxu0 0
        %3132 = vmatpush2.bf16.msra.mxu0 0
        %3133 = vmatprep.subr.bf16.mxu0 0
        %3134 = vmatpush2.bf16.msra.mxu0 0
        %3135 = vmatprep.subr.bf16.mxu0 0
        %3136 = vmatpush2.bf16.msra.mxu0 0
        %3137 = vmatprep.subr.bf16.mxu0 0
        %3138 = vmatpush2.bf16.msra.mxu0 0
        %3139 = vmatprep.mubr.bf16.mxu0 0
        %3140 = vmatmul.mubr.bf16.gmra.mxu0 %v2986
        %v3141 = vpop.f32.mrf.mxu0
        %v3142 = vadd.f32 0.0, %v3141
        %v3143 = vpop.f32.mrf.mxu0
        %v3144 = vpop.f32.mrf.mxu0
        %v3145 = vadd.f32 0.0, %v3144
        %v3146 = vpop.f32.mrf.mxu0
        %3147 = vmatprep.mubr.bf16.mxu0 0
        %3148 = vmatmul.mubr.bf16.gmra.mxu0 %v2987
        %v3149 = vpop.f32.mrf.mxu0
        %v3150 = vadd.f32 0.0, %v3149
        %v3151 = vpop.f32.mrf.mxu0
        %v3152 = vpop.f32.mrf.mxu0
        %v3153 = vadd.f32 0.0, %v3152
        %v3154 = vpop.f32.mrf.mxu0
        %3155 = vmatprep.mubr.bf16.mxu0 0
        %3156 = vmatmul.mubr.bf16.gmra.mxu0 %v2988
        %v3157 = vpop.f32.mrf.mxu0
        %v3158 = vadd.f32 0.0, %v3157
        %v3159 = vpop.f32.mrf.mxu0
        %v3160 = vpop.f32.mrf.mxu0
        %v3161 = vadd.f32 0.0, %v3160
        %v3162 = vpop.f32.mrf.mxu0
        %3163 = vmatprep.mubr.bf16.mxu0 0
        %3164 = vmatmul.mubr.bf16.gmra.mxu0 %v2989
        %v3165 = vpop.f32.mrf.mxu0
        %v3166 = vadd.f32 0.0, %v3165
        %v3167 = vpop.f32.mrf.mxu0
        %v3168 = vpop.f32.mrf.mxu0
        %v3169 = vadd.f32 0.0, %v3168
        %v3170 = vpop.f32.mrf.mxu0
        %3171 = vmatprep.mubr.bf16.mxu0 0
        %3172 = vmatmul.mubr.bf16.gmra.mxu0 %v2990
        %v3173 = vpop.f32.mrf.mxu0
        %v3174 = vadd.f32 0.0, %v3173
        %v3175 = vpop.f32.mrf.mxu0
        %v3176 = vpop.f32.mrf.mxu0
        %v3177 = vadd.f32 0.0, %v3176
        %v3178 = vpop.f32.mrf.mxu0
        %3179 = vmatprep.mubr.bf16.mxu0 0
        %3180 = vmatmul.mubr.bf16.gmra.mxu0 %v2991
        %v3181 = vpop.f32.mrf.mxu0
        %v3182 = vadd.f32 0.0, %v3181
        %v3183 = vpop.f32.mrf.mxu0
        %v3184 = vpop.f32.mrf.mxu0
        %v3185 = vadd.f32 0.0, %v3184
        %v3186 = vpop.f32.mrf.mxu0
        %3187 = vmatprep.mubr.bf16.mxu0 0
        %3188 = vmatmul.mubr.bf16.gmra.mxu0 %v2992
        %v3189 = vpop.f32.mrf.mxu0
        %v3190 = vadd.f32 0.0, %v3189
        %v3191 = vpop.f32.mrf.mxu0
        %v3192 = vpop.f32.mrf.mxu0
        %v3193 = vadd.f32 0.0, %v3192
        %v3194 = vpop.f32.mrf.mxu0
        %3195 = vmatprep.mubr.bf16.mxu0 0
        %3196 = vmatmul.mubr.bf16.gmra.mxu0 %v2993
        %v3197 = vpop.f32.mrf.mxu0
        %v3198 = vadd.f32 0.0, %v3197
        %v3199 = vpop.f32.mrf.mxu0
        %v3200 = vpop.f32.mrf.mxu0
        %v3201 = vadd.f32 0.0, %v3200
        %v3202 = vpop.f32.mrf.mxu0
        %3203 = vdwg.mxu0
        %3204 = vmatprep.subr.bf16.mxu0 0
        %3205 = vmatpush1.bf16.msra.mxu0 %v1680
        %3206 = vmatprep.subr.bf16.mxu0 0
        %3207 = vmatpush1.bf16.msra.mxu0 %v1679
        %3208 = vmatprep.subr.bf16.mxu0 0
        %3209 = vmatpush1.bf16.msra.mxu0 %v1678
        %3210 = vmatprep.subr.bf16.mxu0 0
        %3211 = vmatpush1.bf16.msra.mxu0 %v1677
        %3212 = vmatprep.subr.bf16.mxu0 0
        %3213 = vmatpush1.bf16.msra.mxu0 %v1676
        %3214 = vmatprep.subr.bf16.mxu0 0
        %3215 = vmatpush1.bf16.msra.mxu0 %v1675
        %3216 = vmatprep.subr.bf16.mxu0 0
        %3217 = vmatpush1.bf16.msra.mxu0 %v1674
        %3218 = vmatprep.subr.bf16.mxu0 0
        %3219 = vmatpush1.bf16.msra.mxu0 %v1673
        %3220 = vmatprep.subr.bf16.mxu0 0
        %3221 = vmatpush2.bf16.msra.mxu0 0
        %3222 = vmatprep.subr.bf16.mxu0 0
        %3223 = vmatpush2.bf16.msra.mxu0 0
        %3224 = vmatprep.subr.bf16.mxu0 0
        %3225 = vmatpush2.bf16.msra.mxu0 0
        %3226 = vmatprep.subr.bf16.mxu0 0
        %3227 = vmatpush2.bf16.msra.mxu0 0
        %3228 = vmatprep.subr.bf16.mxu0 0
        %3229 = vmatpush2.bf16.msra.mxu0 0
        %3230 = vmatprep.subr.bf16.mxu0 0
        %3231 = vmatpush2.bf16.msra.mxu0 0
        %3232 = vmatprep.subr.bf16.mxu0 0
        %3233 = vmatpush2.bf16.msra.mxu0 0
        %3234 = vmatprep.subr.bf16.mxu0 0
        %3235 = vmatpush2.bf16.msra.mxu0 0
        %3236 = vmatprep.mubr.bf16.mxu0 0
        %3237 = vmatmul.mubr.bf16.gmra.mxu0 %v2994
        %v3238 = vpop.f32.mrf.mxu0
        %v3239 = vadd.f32 0.0, %v3238
        %v3240 = vpop.f32.mrf.mxu0
        %v3241 = vpop.f32.mrf.mxu0
        %v3242 = vadd.f32 0.0, %v3241
        %v3243 = vpop.f32.mrf.mxu0
        %3244 = vmatprep.mubr.bf16.mxu0 0
        %3245 = vmatmul.mubr.bf16.gmra.mxu0 %v2995
        %v3246 = vpop.f32.mrf.mxu0
        %v3247 = vadd.f32 0.0, %v3246
        %v3248 = vpop.f32.mrf.mxu0
        %v3249 = vpop.f32.mrf.mxu0
        %v3250 = vadd.f32 0.0, %v3249
        %v3251 = vpop.f32.mrf.mxu0
        %3252 = vmatprep.mubr.bf16.mxu0 0
        %3253 = vmatmul.mubr.bf16.gmra.mxu0 %v2996
        %v3254 = vpop.f32.mrf.mxu0
        %v3255 = vadd.f32 0.0, %v3254
        %v3256 = vpop.f32.mrf.mxu0
        %v3257 = vpop.f32.mrf.mxu0
        %v3258 = vadd.f32 0.0, %v3257
        %v3259 = vpop.f32.mrf.mxu0
        %3260 = vmatprep.mubr.bf16.mxu0 0
        %3261 = vmatmul.mubr.bf16.gmra.mxu0 %v2997
        %v3262 = vpop.f32.mrf.mxu0
        %v3263 = vadd.f32 0.0, %v3262
        %v3264 = vpop.f32.mrf.mxu0
        %v3265 = vpop.f32.mrf.mxu0
        %v3266 = vadd.f32 0.0, %v3265
        %v3267 = vpop.f32.mrf.mxu0
        %3268 = vmatprep.mubr.bf16.mxu0 0
        %3269 = vmatmul.mubr.bf16.gmra.mxu0 %v2998
        %v3270 = vpop.f32.mrf.mxu0
        %v3271 = vadd.f32 0.0, %v3270
        %v3272 = vpop.f32.mrf.mxu0
        %v3273 = vpop.f32.mrf.mxu0
        %v3274 = vadd.f32 0.0, %v3273
        %v3275 = vpop.f32.mrf.mxu0
        %3276 = vmatprep.mubr.bf16.mxu0 0
        %3277 = vmatmul.mubr.bf16.gmra.mxu0 %v2999
        %v3278 = vpop.f32.mrf.mxu0
        %v3279 = vadd.f32 0.0, %v3278
        %v3280 = vpop.f32.mrf.mxu0
        %v3281 = vpop.f32.mrf.mxu0
        %v3282 = vadd.f32 0.0, %v3281
        %v3283 = vpop.f32.mrf.mxu0
        %3284 = vmatprep.mubr.bf16.mxu0 0
        %3285 = vmatmul.mubr.bf16.gmra.mxu0 %v3000
        %v3286 = vpop.f32.mrf.mxu0
        %v3287 = vadd.f32 0.0, %v3286
        %v3288 = vpop.f32.mrf.mxu0
        %v3289 = vpop.f32.mrf.mxu0
        %v3290 = vadd.f32 0.0, %v3289
        %v3291 = vpop.f32.mrf.mxu0
        %3292 = vmatprep.mubr.bf16.mxu0 0
        %3293 = vmatmul.mubr.bf16.gmra.mxu0 %v3001
        %v3294 = vpop.f32.mrf.mxu0
        %v3295 = vadd.f32 0.0, %v3294
        %v3296 = vpop.f32.mrf.mxu0
        %v3297 = vpop.f32.mrf.mxu0
        %v3298 = vadd.f32 0.0, %v3297
        %v3299 = vpop.f32.mrf.mxu0
        %3300 = vdwg.mxu0
        %3301 = vmatprep.subr.bf16.mxu0 0
        %3302 = vmatpush1.bf16.msra.mxu0 %v1688
        %3303 = vmatprep.subr.bf16.mxu0 0
        %3304 = vmatpush1.bf16.msra.mxu0 %v1687
        %3305 = vmatprep.subr.bf16.mxu0 0
        %3306 = vmatpush1.bf16.msra.mxu0 %v1686
        %3307 = vmatprep.subr.bf16.mxu0 0
        %3308 = vmatpush1.bf16.msra.mxu0 %v1685
        %3309 = vmatprep.subr.bf16.mxu0 0
        %3310 = vmatpush1.bf16.msra.mxu0 %v1684
        %3311 = vmatprep.subr.bf16.mxu0 0
        %3312 = vmatpush1.bf16.msra.mxu0 %v1683
        %3313 = vmatprep.subr.bf16.mxu0 0
        %3314 = vmatpush1.bf16.msra.mxu0 %v1682
        %3315 = vmatprep.subr.bf16.mxu0 0
        %3316 = vmatpush1.bf16.msra.mxu0 %v1681
        %3317 = vmatprep.subr.bf16.mxu0 0
        %3318 = vmatpush2.bf16.msra.mxu0 0
        %3319 = vmatprep.subr.bf16.mxu0 0
        %3320 = vmatpush2.bf16.msra.mxu0 0
        %3321 = vmatprep.subr.bf16.mxu0 0
        %3322 = vmatpush2.bf16.msra.mxu0 0
        %3323 = vmatprep.subr.bf16.mxu0 0
        %3324 = vmatpush2.bf16.msra.mxu0 0
        %3325 = vmatprep.subr.bf16.mxu0 0
        %3326 = vmatpush2.bf16.msra.mxu0 0
        %3327 = vmatprep.subr.bf16.mxu0 0
        %3328 = vmatpush2.bf16.msra.mxu0 0
        %3329 = vmatprep.subr.bf16.mxu0 0
        %3330 = vmatpush2.bf16.msra.mxu0 0
        %3331 = vmatprep.subr.bf16.mxu0 0
        %3332 = vmatpush2.bf16.msra.mxu0 0
        %3333 = vmatprep.mubr.bf16.mxu0 0
        %3334 = vmatmul.mubr.bf16.gmra.mxu0 %v3002
        %v3335 = vpop.f32.mrf.mxu0
        %v3336 = vadd.f32 0.0, %v3335
        %v3337 = vpop.f32.mrf.mxu0
        %v3338 = vpop.f32.mrf.mxu0
        %v3339 = vadd.f32 0.0, %v3338
        %v3340 = vpop.f32.mrf.mxu0
        %3341 = vmatprep.mubr.bf16.mxu0 0
        %3342 = vmatmul.mubr.bf16.gmra.mxu0 %v3003
        %v3343 = vpop.f32.mrf.mxu0
        %v3344 = vadd.f32 0.0, %v3343
        %v3345 = vpop.f32.mrf.mxu0
        %v3346 = vpop.f32.mrf.mxu0
        %v3347 = vadd.f32 0.0, %v3346
        %v3348 = vpop.f32.mrf.mxu0
        %3349 = vmatprep.mubr.bf16.mxu0 0
        %3350 = vmatmul.mubr.bf16.gmra.mxu0 %v3004
        %v3351 = vpop.f32.mrf.mxu0
        %v3352 = vadd.f32 0.0, %v3351
        %v3353 = vpop.f32.mrf.mxu0
        %v3354 = vpop.f32.mrf.mxu0
        %v3355 = vadd.f32 0.0, %v3354
        %v3356 = vpop.f32.mrf.mxu0
        %3357 = vmatprep.mubr.bf16.mxu0 0
        %3358 = vmatmul.mubr.bf16.gmra.mxu0 %v3005
        %v3359 = vpop.f32.mrf.mxu0
        %v3360 = vadd.f32 0.0, %v3359
        %v3361 = vpop.f32.mrf.mxu0
        %v3362 = vpop.f32.mrf.mxu0
        %v3363 = vadd.f32 0.0, %v3362
        %v3364 = vpop.f32.mrf.mxu0
        %3365 = vmatprep.mubr.bf16.mxu0 0
        %3366 = vmatmul.mubr.bf16.gmra.mxu0 %v3006
        %v3367 = vpop.f32.mrf.mxu0
        %v3368 = vadd.f32 0.0, %v3367
        %v3369 = vpop.f32.mrf.mxu0
        %v3370 = vpop.f32.mrf.mxu0
        %v3371 = vadd.f32 0.0, %v3370
        %v3372 = vpop.f32.mrf.mxu0
        %3373 = vmatprep.mubr.bf16.mxu0 0
        %3374 = vmatmul.mubr.bf16.gmra.mxu0 %v3007
        %v3375 = vpop.f32.mrf.mxu0
        %v3376 = vadd.f32 0.0, %v3375
        %v3377 = vpop.f32.mrf.mxu0
        %v3378 = vpop.f32.mrf.mxu0
        %v3379 = vadd.f32 0.0, %v3378
        %v3380 = vpop.f32.mrf.mxu0
        %3381 = vmatprep.mubr.bf16.mxu0 0
        %3382 = vmatmul.mubr.bf16.gmra.mxu0 %v3008
        %v3383 = vpop.f32.mrf.mxu0
        %v3384 = vadd.f32 0.0, %v3383
        %v3385 = vpop.f32.mrf.mxu0
        %v3386 = vpop.f32.mrf.mxu0
        %v3387 = vadd.f32 0.0, %v3386
        %v3388 = vpop.f32.mrf.mxu0
        %3389 = vmatprep.mubr.bf16.mxu0 0
        %3390 = vmatmul.mubr.bf16.gmra.mxu0 %v3009
        %v3391 = vpop.f32.mrf.mxu0
        %v3392 = vadd.f32 0.0, %v3391
        %v3393 = vpop.f32.mrf.mxu0
        %v3394 = vpop.f32.mrf.mxu0
        %v3395 = vadd.f32 0.0, %v3394
        %v3396 = vpop.f32.mrf.mxu0
        %3397 = vdwg.mxu0
        %v3398 = vpack.c.bf16 %v3048, %v3045
        %v3399 = vpack.c.bf16 %v3056, %v3053
        %v3400 = vpack.c.bf16 %v3064, %v3061
        %v3401 = vpack.c.bf16 %v3072, %v3069
        %v3402 = vpack.c.bf16 %v3080, %v3077
        %v3403 = vpack.c.bf16 %v3088, %v3085
        %v3404 = vpack.c.bf16 %v3096, %v3093
        %v3405 = vpack.c.bf16 %v3104, %v3101
        %v3406 = vld [vmem:[#allocation7] sm:$0xff]
        %v3407 = vld [vmem:[#allocation7 + $0x8] sm:$0xff]
        %v3408 = vld [vmem:[#allocation7 + $0x10] sm:$0xff]
        %v3409 = vld [vmem:[#allocation7 + $0x18] sm:$0xff]
        %v3410 = vld [vmem:[#allocation7 + $0x20] sm:$0xff]
        %v3411 = vld [vmem:[#allocation7 + $0x28] sm:$0xff]
        %v3412 = vld [vmem:[#allocation7 + $0x30] sm:$0xff]
        %v3413 = vld [vmem:[#allocation7 + $0x38] sm:$0xff]
        %v3414 = vpack.c.bf16 %v3145, %v3142
        %v3415 = vpack.c.bf16 %v3153, %v3150
        %v3416 = vpack.c.bf16 %v3161, %v3158
        %v3417 = vpack.c.bf16 %v3169, %v3166
        %v3418 = vpack.c.bf16 %v3177, %v3174
        %v3419 = vpack.c.bf16 %v3185, %v3182
        %v3420 = vpack.c.bf16 %v3193, %v3190
        %v3421 = vpack.c.bf16 %v3201, %v3198
        %v3422 = vld [vmem:[#allocation7 + $0x40] sm:$0xff]
        %v3423 = vld [vmem:[#allocation7 + $0x48] sm:$0xff]
        %v3424 = vld [vmem:[#allocation7 + $0x50] sm:$0xff]
        %v3425 = vld [vmem:[#allocation7 + $0x58] sm:$0xff]
        %v3426 = vld [vmem:[#allocation7 + $0x60] sm:$0xff]
        %v3427 = vld [vmem:[#allocation7 + $0x68] sm:$0xff]
        %v3428 = vld [vmem:[#allocation7 + $0x70] sm:$0xff]
        %v3429 = vld [vmem:[#allocation7 + $0x78] sm:$0xff]
        %v3438 = vunpack.c.l.b16 %v3422
        %v3439 = vunpack.c.h.b16 %v3422
        %v3440 = vunpack.c.l.b16 %v3423
        %v3441 = vunpack.c.h.b16 %v3423
        %v3442 = vunpack.c.l.b16 %v3424
        %v3443 = vunpack.c.h.b16 %v3424
        %v3444 = vunpack.c.l.b16 %v3425
        %v3445 = vunpack.c.h.b16 %v3425
        %v3446 = vunpack.c.l.b16 %v3426
        %v3447 = vunpack.c.h.b16 %v3426
        %v3448 = vunpack.c.l.b16 %v3427
        %v3449 = vunpack.c.h.b16 %v3427
        %v3450 = vunpack.c.l.b16 %v3428
        %v3451 = vunpack.c.h.b16 %v3428
        %v3452 = vunpack.c.l.b16 %v3429
        %v3453 = vunpack.c.h.b16 %v3429
        %v3454 = vpack.c.b16 %v3440, %v3438
        %v3455 = vpack.c.b16 %v3441, %v3439
        %v3456 = vpack.c.b16 %v3444, %v3442
        %v3457 = vpack.c.b16 %v3445, %v3443
        %v3458 = vpack.c.b16 %v3448, %v3446
        %v3459 = vpack.c.b16 %v3449, %v3447
        %v3460 = vpack.c.b16 %v3452, %v3450
        %v3461 = vpack.c.b16 %v3453, %v3451
        %v3471 = vsel %vm1725, %v3414, 0
        %v3474 = vsel %vm1725, %v3415, 0
        %v3477 = vsel %vm1725, %v3416, 0
        %v3480 = vsel %vm1725, %v3417, 0
        %v3483 = vsel %vm1725, %v3418, 0
        %v3486 = vsel %vm1725, %v3419, 0
        %v3489 = vsel %vm1725, %v3420, 0
        %v3492 = vsel %vm1725, %v3421, 0
        %3494 = vmatprep.subr.bf16.mxu0 0
        %3495 = vmatpush1.bf16.msra.mxu0 0
        %3496 = vmatprep.subr.bf16.mxu0 0
        %3497 = vmatpush1.bf16.msra.mxu0 0
        %3498 = vmatprep.subr.bf16.mxu0 0
        %3499 = vmatpush1.bf16.msra.mxu0 0
        %3500 = vmatprep.subr.bf16.mxu0 0
        %3501 = vmatpush1.bf16.msra.mxu0 0
        %3502 = vmatprep.subr.bf16.mxu0 %v3461
        %3503 = vmatpush1.bf16.msra.mxu0 %v3460
        %3504 = vmatprep.subr.bf16.mxu0 %v3459
        %3505 = vmatpush1.bf16.msra.mxu0 %v3458
        %3506 = vmatprep.subr.bf16.mxu0 %v3457
        %3507 = vmatpush1.bf16.msra.mxu0 %v3456
        %3508 = vmatprep.subr.bf16.mxu0 %v3455
        %3509 = vmatpush1.bf16.msra.mxu0 %v3454
        %3510 = vmatprep.subr.bf16.mxu0 0
        %3511 = vmatpush2.bf16.msra.mxu0 0
        %3512 = vmatprep.subr.bf16.mxu0 0
        %3513 = vmatpush2.bf16.msra.mxu0 0
        %3514 = vmatprep.subr.bf16.mxu0 0
        %3515 = vmatpush2.bf16.msra.mxu0 0
        %3516 = vmatprep.subr.bf16.mxu0 0
        %3517 = vmatpush2.bf16.msra.mxu0 0
        %3518 = vmatprep.subr.bf16.mxu0 0
        %3519 = vmatpush2.bf16.msra.mxu0 0
        %3520 = vmatprep.subr.bf16.mxu0 0
        %3521 = vmatpush2.bf16.msra.mxu0 0
        %3522 = vmatprep.subr.bf16.mxu0 0
        %3523 = vmatpush2.bf16.msra.mxu0 0
        %3524 = vmatprep.subr.bf16.mxu0 0
        %3525 = vmatpush2.bf16.msra.mxu0 0
        %3526 = vmatprep.mubr.bf16.mxu0 0
        %3527 = vmatmul.mubr.bf16.gmra.mxu0 %v3471
        %v3528 = vpop.f32.mrf.mxu0
        %v3529 = vadd.f32 0.0, %v3528
        %v3530 = vpop.f32.mrf.mxu0
        %v3531 = vadd.f32 0.0, %v3530
        %v3532 = vpop.f32.mrf.mxu0
        %v3533 = vadd.f32 0.0, %v3532
        %v3534 = vpop.f32.mrf.mxu0
        %v3535 = vadd.f32 0.0, %v3534
        %3536 = vmatprep.mubr.bf16.mxu0 0
        %3537 = vmatmul.mubr.bf16.gmra.mxu0 %v3474
        %v3538 = vpop.f32.mrf.mxu0
        %v3539 = vadd.f32 0.0, %v3538
        %v3540 = vpop.f32.mrf.mxu0
        %v3541 = vadd.f32 0.0, %v3540
        %v3542 = vpop.f32.mrf.mxu0
        %v3543 = vadd.f32 0.0, %v3542
        %v3544 = vpop.f32.mrf.mxu0
        %v3545 = vadd.f32 0.0, %v3544
        %3546 = vmatprep.mubr.bf16.mxu0 0
        %3547 = vmatmul.mubr.bf16.gmra.mxu0 %v3477
        %v3548 = vpop.f32.mrf.mxu0
        %v3549 = vadd.f32 0.0, %v3548
        %v3550 = vpop.f32.mrf.mxu0
        %v3551 = vadd.f32 0.0, %v3550
        %v3552 = vpop.f32.mrf.mxu0
        %v3553 = vadd.f32 0.0, %v3552
        %v3554 = vpop.f32.mrf.mxu0
        %v3555 = vadd.f32 0.0, %v3554
        %3556 = vmatprep.mubr.bf16.mxu0 0
        %3557 = vmatmul.mubr.bf16.gmra.mxu0 %v3480
        %v3558 = vpop.f32.mrf.mxu0
        %v3559 = vadd.f32 0.0, %v3558
        %v3560 = vpop.f32.mrf.mxu0
        %v3561 = vadd.f32 0.0, %v3560
        %v3562 = vpop.f32.mrf.mxu0
        %v3563 = vadd.f32 0.0, %v3562
        %v3564 = vpop.f32.mrf.mxu0
        %v3565 = vadd.f32 0.0, %v3564
        %3566 = vmatprep.mubr.bf16.mxu0 0
        %3567 = vmatmul.mubr.bf16.gmra.mxu0 %v3483
        %v3568 = vpop.f32.mrf.mxu0
        %v3569 = vadd.f32 0.0, %v3568
        %v3570 = vpop.f32.mrf.mxu0
        %v3571 = vadd.f32 0.0, %v3570
        %v3572 = vpop.f32.mrf.mxu0
        %v3573 = vadd.f32 0.0, %v3572
        %v3574 = vpop.f32.mrf.mxu0
        %v3575 = vadd.f32 0.0, %v3574
        %3576 = vmatprep.mubr.bf16.mxu0 0
        %3577 = vmatmul.mubr.bf16.gmra.mxu0 %v3486
        %v3578 = vpop.f32.mrf.mxu0
        %v3579 = vadd.f32 0.0, %v3578
        %v3580 = vpop.f32.mrf.mxu0
        %v3581 = vadd.f32 0.0, %v3580
        %v3582 = vpop.f32.mrf.mxu0
        %v3583 = vadd.f32 0.0, %v3582
        %v3584 = vpop.f32.mrf.mxu0
        %v3585 = vadd.f32 0.0, %v3584
        %3586 = vmatprep.mubr.bf16.mxu0 0
        %3587 = vmatmul.mubr.bf16.gmra.mxu0 %v3489
        %v3588 = vpop.f32.mrf.mxu0
        %v3589 = vadd.f32 0.0, %v3588
        %v3590 = vpop.f32.mrf.mxu0
        %v3591 = vadd.f32 0.0, %v3590
        %v3592 = vpop.f32.mrf.mxu0
        %v3593 = vadd.f32 0.0, %v3592
        %v3594 = vpop.f32.mrf.mxu0
        %v3595 = vadd.f32 0.0, %v3594
        %3596 = vmatprep.mubr.bf16.mxu0 0
        %3597 = vmatmul.mubr.bf16.gmra.mxu0 %v3492
        %v3598 = vpop.f32.mrf.mxu0
        %v3599 = vadd.f32 0.0, %v3598
        %v3600 = vpop.f32.mrf.mxu0
        %v3601 = vadd.f32 0.0, %v3600
        %v3602 = vpop.f32.mrf.mxu0
        %v3603 = vadd.f32 0.0, %v3602
        %v3604 = vpop.f32.mrf.mxu0
        %v3605 = vadd.f32 0.0, %v3604
        %3606 = vdwg.mxu0
        %v3615 = vunpack.c.l.b16 %v3406
        %v3616 = vunpack.c.h.b16 %v3406
        %v3617 = vunpack.c.l.b16 %v3407
        %v3618 = vunpack.c.h.b16 %v3407
        %v3619 = vunpack.c.l.b16 %v3408
        %v3620 = vunpack.c.h.b16 %v3408
        %v3621 = vunpack.c.l.b16 %v3409
        %v3622 = vunpack.c.h.b16 %v3409
        %v3623 = vunpack.c.l.b16 %v3410
        %v3624 = vunpack.c.h.b16 %v3410
        %v3625 = vunpack.c.l.b16 %v3411
        %v3626 = vunpack.c.h.b16 %v3411
        %v3627 = vunpack.c.l.b16 %v3412
        %v3628 = vunpack.c.h.b16 %v3412
        %v3629 = vunpack.c.l.b16 %v3413
        %v3630 = vunpack.c.h.b16 %v3413
        %v3631 = vpack.c.b16 %v3617, %v3615
        %v3632 = vpack.c.b16 %v3618, %v3616
        %v3633 = vpack.c.b16 %v3621, %v3619
        %v3634 = vpack.c.b16 %v3622, %v3620
        %v3635 = vpack.c.b16 %v3625, %v3623
        %v3636 = vpack.c.b16 %v3626, %v3624
        %v3637 = vpack.c.b16 %v3629, %v3627
        %v3638 = vpack.c.b16 %v3630, %v3628
        %v3648 = vsel %vm1725, %v3398, 0
        %v3651 = vsel %vm1725, %v3399, 0
        %v3654 = vsel %vm1725, %v3400, 0
        %v3657 = vsel %vm1725, %v3401, 0
        %v3660 = vsel %vm1725, %v3402, 0
        %v3663 = vsel %vm1725, %v3403, 0
        %v3666 = vsel %vm1725, %v3404, 0
        %v3669 = vsel %vm1725, %v3405, 0
        %3671 = vmatprep.subr.bf16.mxu0 0
        %3672 = vmatpush1.bf16.msra.mxu0 0
        %3673 = vmatprep.subr.bf16.mxu0 0
        %3674 = vmatpush1.bf16.msra.mxu0 0
        %3675 = vmatprep.subr.bf16.mxu0 0
        %3676 = vmatpush1.bf16.msra.mxu0 0
        %3677 = vmatprep.subr.bf16.mxu0 0
        %3678 = vmatpush1.bf16.msra.mxu0 0
        %3679 = vmatprep.subr.bf16.mxu0 %v3638
        %3680 = vmatpush1.bf16.msra.mxu0 %v3637
        %3681 = vmatprep.subr.bf16.mxu0 %v3636
        %3682 = vmatpush1.bf16.msra.mxu0 %v3635
        %3683 = vmatprep.subr.bf16.mxu0 %v3634
        %3684 = vmatpush1.bf16.msra.mxu0 %v3633
        %3685 = vmatprep.subr.bf16.mxu0 %v3632
        %3686 = vmatpush1.bf16.msra.mxu0 %v3631
        %3687 = vmatprep.subr.bf16.mxu0 0
        %3688 = vmatpush2.bf16.msra.mxu0 0
        %3689 = vmatprep.subr.bf16.mxu0 0
        %3690 = vmatpush2.bf16.msra.mxu0 0
        %3691 = vmatprep.subr.bf16.mxu0 0
        %3692 = vmatpush2.bf16.msra.mxu0 0
        %3693 = vmatprep.subr.bf16.mxu0 0
        %3694 = vmatpush2.bf16.msra.mxu0 0
        %3695 = vmatprep.subr.bf16.mxu0 0
        %3696 = vmatpush2.bf16.msra.mxu0 0
        %3697 = vmatprep.subr.bf16.mxu0 0
        %3698 = vmatpush2.bf16.msra.mxu0 0
        %3699 = vmatprep.subr.bf16.mxu0 0
        %3700 = vmatpush2.bf16.msra.mxu0 0
        %3701 = vmatprep.subr.bf16.mxu0 0
        %3702 = vmatpush2.bf16.msra.mxu0 0
        %3703 = vmatprep.mubr.bf16.mxu0 0
        %3704 = vmatmul.mubr.bf16.gmra.mxu0 %v3648
        %v3705 = vpop.f32.mrf.mxu0
        %v3706 = vadd.f32 %v3529, %v3705
        %v3707 = vpop.f32.mrf.mxu0
        %v3708 = vadd.f32 %v3531, %v3707
        %v3709 = vpop.f32.mrf.mxu0
        %v3710 = vadd.f32 %v3533, %v3709
        %v3711 = vpop.f32.mrf.mxu0
        %v3712 = vadd.f32 %v3535, %v3711
        %3713 = vmatprep.mubr.bf16.mxu0 0
        %3714 = vmatmul.mubr.bf16.gmra.mxu0 %v3651
        %v3715 = vpop.f32.mrf.mxu0
        %v3716 = vadd.f32 %v3539, %v3715
        %v3717 = vpop.f32.mrf.mxu0
        %v3718 = vadd.f32 %v3541, %v3717
        %v3719 = vpop.f32.mrf.mxu0
        %v3720 = vadd.f32 %v3543, %v3719
        %v3721 = vpop.f32.mrf.mxu0
        %v3722 = vadd.f32 %v3545, %v3721
        %3723 = vmatprep.mubr.bf16.mxu0 0
        %3724 = vmatmul.mubr.bf16.gmra.mxu0 %v3654
        %v3725 = vpop.f32.mrf.mxu0
        %v3726 = vadd.f32 %v3549, %v3725
        %v3727 = vpop.f32.mrf.mxu0
        %v3728 = vadd.f32 %v3551, %v3727
        %v3729 = vpop.f32.mrf.mxu0
        %v3730 = vadd.f32 %v3553, %v3729
        %v3731 = vpop.f32.mrf.mxu0
        %v3732 = vadd.f32 %v3555, %v3731
        %3733 = vmatprep.mubr.bf16.mxu0 0
        %3734 = vmatmul.mubr.bf16.gmra.mxu0 %v3657
        %v3735 = vpop.f32.mrf.mxu0
        %v3736 = vadd.f32 %v3559, %v3735
        %v3737 = vpop.f32.mrf.mxu0
        %v3738 = vadd.f32 %v3561, %v3737
        %v3739 = vpop.f32.mrf.mxu0
        %v3740 = vadd.f32 %v3563, %v3739
        %v3741 = vpop.f32.mrf.mxu0
        %v3742 = vadd.f32 %v3565, %v3741
        %3743 = vmatprep.mubr.bf16.mxu0 0
        %3744 = vmatmul.mubr.bf16.gmra.mxu0 %v3660
        %v3745 = vpop.f32.mrf.mxu0
        %v3746 = vadd.f32 %v3569, %v3745
        %v3747 = vpop.f32.mrf.mxu0
        %v3748 = vadd.f32 %v3571, %v3747
        %v3749 = vpop.f32.mrf.mxu0
        %v3750 = vadd.f32 %v3573, %v3749
        %v3751 = vpop.f32.mrf.mxu0
        %v3752 = vadd.f32 %v3575, %v3751
        %3753 = vmatprep.mubr.bf16.mxu0 0
        %3754 = vmatmul.mubr.bf16.gmra.mxu0 %v3663
        %v3755 = vpop.f32.mrf.mxu0
        %v3756 = vadd.f32 %v3579, %v3755
        %v3757 = vpop.f32.mrf.mxu0
        %v3758 = vadd.f32 %v3581, %v3757
        %v3759 = vpop.f32.mrf.mxu0
        %v3760 = vadd.f32 %v3583, %v3759
        %v3761 = vpop.f32.mrf.mxu0
        %v3762 = vadd.f32 %v3585, %v3761
        %3763 = vmatprep.mubr.bf16.mxu0 0
        %3764 = vmatmul.mubr.bf16.gmra.mxu0 %v3666
        %v3765 = vpop.f32.mrf.mxu0
        %v3766 = vadd.f32 %v3589, %v3765
        %v3767 = vpop.f32.mrf.mxu0
        %v3768 = vadd.f32 %v3591, %v3767
        %v3769 = vpop.f32.mrf.mxu0
        %v3770 = vadd.f32 %v3593, %v3769
        %v3771 = vpop.f32.mrf.mxu0
        %v3772 = vadd.f32 %v3595, %v3771
        %3773 = vmatprep.mubr.bf16.mxu0 0
        %3774 = vmatmul.mubr.bf16.gmra.mxu0 %v3669
        %v3775 = vpop.f32.mrf.mxu0
        %v3776 = vadd.f32 %v3599, %v3775
        %v3777 = vpop.f32.mrf.mxu0
        %v3778 = vadd.f32 %v3601, %v3777
        %v3779 = vpop.f32.mrf.mxu0
        %v3780 = vadd.f32 %v3603, %v3779
        %v3781 = vpop.f32.mrf.mxu0
        %v3782 = vadd.f32 %v3605, %v3781
        %3783 = vdwg.mxu0
        %v3784 = vpack.c.bf16 %v3242, %v3239
        %v3785 = vpack.c.bf16 %v3250, %v3247
        %v3786 = vpack.c.bf16 %v3258, %v3255
        %v3787 = vpack.c.bf16 %v3266, %v3263
        %v3788 = vpack.c.bf16 %v3274, %v3271
        %v3789 = vpack.c.bf16 %v3282, %v3279
        %v3790 = vpack.c.bf16 %v3290, %v3287
        %v3791 = vpack.c.bf16 %v3298, %v3295
        %v3792 = vld [vmem:[#allocation7 + $0x80] sm:$0xff]
        %v3793 = vld [vmem:[#allocation7 + $0x88] sm:$0xff]
        %v3794 = vld [vmem:[#allocation7 + $0x90] sm:$0xff]
        %v3795 = vld [vmem:[#allocation7 + $0x98] sm:$0xff]
        %v3796 = vld [vmem:[#allocation7 + $0xa0] sm:$0xff]
        %v3797 = vld [vmem:[#allocation7 + $0xa8] sm:$0xff]
        %v3798 = vld [vmem:[#allocation7 + $0xb0] sm:$0xff]
        %v3799 = vld [vmem:[#allocation7 + $0xb8] sm:$0xff]
        %v3808 = vunpack.c.l.b16 %v3792
        %v3809 = vunpack.c.h.b16 %v3792
        %v3810 = vunpack.c.l.b16 %v3793
        %v3811 = vunpack.c.h.b16 %v3793
        %v3812 = vunpack.c.l.b16 %v3794
        %v3813 = vunpack.c.h.b16 %v3794
        %v3814 = vunpack.c.l.b16 %v3795
        %v3815 = vunpack.c.h.b16 %v3795
        %v3816 = vunpack.c.l.b16 %v3796
        %v3817 = vunpack.c.h.b16 %v3796
        %v3818 = vunpack.c.l.b16 %v3797
        %v3819 = vunpack.c.h.b16 %v3797
        %v3820 = vunpack.c.l.b16 %v3798
        %v3821 = vunpack.c.h.b16 %v3798
        %v3822 = vunpack.c.l.b16 %v3799
        %v3823 = vunpack.c.h.b16 %v3799
        %v3824 = vpack.c.b16 %v3810, %v3808
        %v3825 = vpack.c.b16 %v3811, %v3809
        %v3826 = vpack.c.b16 %v3814, %v3812
        %v3827 = vpack.c.b16 %v3815, %v3813
        %v3828 = vpack.c.b16 %v3818, %v3816
        %v3829 = vpack.c.b16 %v3819, %v3817
        %v3830 = vpack.c.b16 %v3822, %v3820
        %v3831 = vpack.c.b16 %v3823, %v3821
        %v3841 = vsel %vm1725, %v3784, 0
        %v3844 = vsel %vm1725, %v3785, 0
        %v3847 = vsel %vm1725, %v3786, 0
        %v3850 = vsel %vm1725, %v3787, 0
        %v3853 = vsel %vm1725, %v3788, 0
        %v3856 = vsel %vm1725, %v3789, 0
        %v3859 = vsel %vm1725, %v3790, 0
        %v3862 = vsel %vm1725, %v3791, 0
        %3864 = vmatprep.subr.bf16.mxu0 0
        %3865 = vmatpush1.bf16.msra.mxu0 0
        %3866 = vmatprep.subr.bf16.mxu0 0
        %3867 = vmatpush1.bf16.msra.mxu0 0
        %3868 = vmatprep.subr.bf16.mxu0 0
        %3869 = vmatpush1.bf16.msra.mxu0 0
        %3870 = vmatprep.subr.bf16.mxu0 0
        %3871 = vmatpush1.bf16.msra.mxu0 0
        %3872 = vmatprep.subr.bf16.mxu0 %v3831
        %3873 = vmatpush1.bf16.msra.mxu0 %v3830
        %3874 = vmatprep.subr.bf16.mxu0 %v3829
        %3875 = vmatpush1.bf16.msra.mxu0 %v3828
        %3876 = vmatprep.subr.bf16.mxu0 %v3827
        %3877 = vmatpush1.bf16.msra.mxu0 %v3826
        %3878 = vmatprep.subr.bf16.mxu0 %v3825
        %3879 = vmatpush1.bf16.msra.mxu0 %v3824
        %3880 = vmatprep.subr.bf16.mxu0 0
        %3881 = vmatpush2.bf16.msra.mxu0 0
        %3882 = vmatprep.subr.bf16.mxu0 0
        %3883 = vmatpush2.bf16.msra.mxu0 0
        %3884 = vmatprep.subr.bf16.mxu0 0
        %3885 = vmatpush2.bf16.msra.mxu0 0
        %3886 = vmatprep.subr.bf16.mxu0 0
        %3887 = vmatpush2.bf16.msra.mxu0 0
        %3888 = vmatprep.subr.bf16.mxu0 0
        %3889 = vmatpush2.bf16.msra.mxu0 0
        %3890 = vmatprep.subr.bf16.mxu0 0
        %3891 = vmatpush2.bf16.msra.mxu0 0
        %3892 = vmatprep.subr.bf16.mxu0 0
        %3893 = vmatpush2.bf16.msra.mxu0 0
        %3894 = vmatprep.subr.bf16.mxu0 0
        %3895 = vmatpush2.bf16.msra.mxu0 0
        %3896 = vmatprep.mubr.bf16.mxu0 0
        %3897 = vmatmul.mubr.bf16.gmra.mxu0 %v3841
        %v3898 = vpop.f32.mrf.mxu0
        %v3899 = vadd.f32 0.0, %v3898
        %v3900 = vpop.f32.mrf.mxu0
        %v3901 = vadd.f32 0.0, %v3900
        %v3902 = vpop.f32.mrf.mxu0
        %v3903 = vadd.f32 0.0, %v3902
        %v3904 = vpop.f32.mrf.mxu0
        %v3905 = vadd.f32 0.0, %v3904
        %3906 = vmatprep.mubr.bf16.mxu0 0
        %3907 = vmatmul.mubr.bf16.gmra.mxu0 %v3844
        %v3908 = vpop.f32.mrf.mxu0
        %v3909 = vadd.f32 0.0, %v3908
        %v3910 = vpop.f32.mrf.mxu0
        %v3911 = vadd.f32 0.0, %v3910
        %v3912 = vpop.f32.mrf.mxu0
        %v3913 = vadd.f32 0.0, %v3912
        %v3914 = vpop.f32.mrf.mxu0
        %v3915 = vadd.f32 0.0, %v3914
        %3916 = vmatprep.mubr.bf16.mxu0 0
        %3917 = vmatmul.mubr.bf16.gmra.mxu0 %v3847
        %v3918 = vpop.f32.mrf.mxu0
        %v3919 = vadd.f32 0.0, %v3918
        %v3920 = vpop.f32.mrf.mxu0
        %v3921 = vadd.f32 0.0, %v3920
        %v3922 = vpop.f32.mrf.mxu0
        %v3923 = vadd.f32 0.0, %v3922
        %v3924 = vpop.f32.mrf.mxu0
        %v3925 = vadd.f32 0.0, %v3924
        %3926 = vmatprep.mubr.bf16.mxu0 0
        %3927 = vmatmul.mubr.bf16.gmra.mxu0 %v3850
        %v3928 = vpop.f32.mrf.mxu0
        %v3929 = vadd.f32 0.0, %v3928
        %v3930 = vpop.f32.mrf.mxu0
        %v3931 = vadd.f32 0.0, %v3930
        %v3932 = vpop.f32.mrf.mxu0
        %v3933 = vadd.f32 0.0, %v3932
        %v3934 = vpop.f32.mrf.mxu0
        %v3935 = vadd.f32 0.0, %v3934
        %3936 = vmatprep.mubr.bf16.mxu0 0
        %3937 = vmatmul.mubr.bf16.gmra.mxu0 %v3853
        %v3938 = vpop.f32.mrf.mxu0
        %v3939 = vadd.f32 0.0, %v3938
        %v3940 = vpop.f32.mrf.mxu0
        %v3941 = vadd.f32 0.0, %v3940
        %v3942 = vpop.f32.mrf.mxu0
        %v3943 = vadd.f32 0.0, %v3942
        %v3944 = vpop.f32.mrf.mxu0
        %v3945 = vadd.f32 0.0, %v3944
        %3946 = vmatprep.mubr.bf16.mxu0 0
        %3947 = vmatmul.mubr.bf16.gmra.mxu0 %v3856
        %v3948 = vpop.f32.mrf.mxu0
        %v3949 = vadd.f32 0.0, %v3948
        %v3950 = vpop.f32.mrf.mxu0
        %v3951 = vadd.f32 0.0, %v3950
        %v3952 = vpop.f32.mrf.mxu0
        %v3953 = vadd.f32 0.0, %v3952
        %v3954 = vpop.f32.mrf.mxu0
        %v3955 = vadd.f32 0.0, %v3954
        %3956 = vmatprep.mubr.bf16.mxu0 0
        %3957 = vmatmul.mubr.bf16.gmra.mxu0 %v3859
        %v3958 = vpop.f32.mrf.mxu0
        %v3959 = vadd.f32 0.0, %v3958
        %v3960 = vpop.f32.mrf.mxu0
        %v3961 = vadd.f32 0.0, %v3960
        %v3962 = vpop.f32.mrf.mxu0
        %v3963 = vadd.f32 0.0, %v3962
        %v3964 = vpop.f32.mrf.mxu0
        %v3965 = vadd.f32 0.0, %v3964
        %3966 = vmatprep.mubr.bf16.mxu0 0
        %3967 = vmatmul.mubr.bf16.gmra.mxu0 %v3862
        %v3968 = vpop.f32.mrf.mxu0
        %v3969 = vadd.f32 0.0, %v3968
        %v3970 = vpop.f32.mrf.mxu0
        %v3971 = vadd.f32 0.0, %v3970
        %v3972 = vpop.f32.mrf.mxu0
        %v3973 = vadd.f32 0.0, %v3972
        %v3974 = vpop.f32.mrf.mxu0
        %v3975 = vadd.f32 0.0, %v3974
        %3976 = vdwg.mxu0
        %v3977 = vadd.f32 %v3706, %v3899
        %v3978 = vadd.f32 %v3708, %v3901
        %v3979 = vadd.f32 %v3710, %v3903
        %v3980 = vadd.f32 %v3712, %v3905
        %v3981 = vadd.f32 %v3716, %v3909
        %v3982 = vadd.f32 %v3718, %v3911
        %v3983 = vadd.f32 %v3720, %v3913
        %v3984 = vadd.f32 %v3722, %v3915
        %v3985 = vadd.f32 %v3726, %v3919
        %v3986 = vadd.f32 %v3728, %v3921
        %v3987 = vadd.f32 %v3730, %v3923
        %v3988 = vadd.f32 %v3732, %v3925
        %v3989 = vadd.f32 %v3736, %v3929
        %v3990 = vadd.f32 %v3738, %v3931
        %v3991 = vadd.f32 %v3740, %v3933
        %v3992 = vadd.f32 %v3742, %v3935
        %v3993 = vadd.f32 %v3746, %v3939
        %v3994 = vadd.f32 %v3748, %v3941
        %v3995 = vadd.f32 %v3750, %v3943
        %v3996 = vadd.f32 %v3752, %v3945
        %v3997 = vadd.f32 %v3756, %v3949
        %v3998 = vadd.f32 %v3758, %v3951
        %v3999 = vadd.f32 %v3760, %v3953
        %v4000 = vadd.f32 %v3762, %v3955
        %v4001 = vadd.f32 %v3766, %v3959
        %v4002 = vadd.f32 %v3768, %v3961
        %v4003 = vadd.f32 %v3770, %v3963
        %v4004 = vadd.f32 %v3772, %v3965
        %v4005 = vadd.f32 %v3776, %v3969
        %v4006 = vadd.f32 %v3778, %v3971
        %v4007 = vadd.f32 %v3780, %v3973
        %v4008 = vadd.f32 %v3782, %v3975
        %v4009 = vpack.c.bf16 %v3339, %v3336
        %v4010 = vpack.c.bf16 %v3347, %v3344
        %v4011 = vpack.c.bf16 %v3355, %v3352
        %v4012 = vpack.c.bf16 %v3363, %v3360
        %v4013 = vpack.c.bf16 %v3371, %v3368
        %v4014 = vpack.c.bf16 %v3379, %v3376
        %v4015 = vpack.c.bf16 %v3387, %v3384
        %v4016 = vpack.c.bf16 %v3395, %v3392
        %v4017 = vld [vmem:[#allocation7 + $0xc0] sm:$0xff]
        %v4018 = vld [vmem:[#allocation7 + $0xc8] sm:$0xff]
        %v4019 = vld [vmem:[#allocation7 + $0xd0] sm:$0xff]
        %v4020 = vld [vmem:[#allocation7 + $0xd8] sm:$0xff]
        %v4021 = vld [vmem:[#allocation7 + $0xe0] sm:$0xff]
        %v4022 = vld [vmem:[#allocation7 + $0xe8] sm:$0xff]
        %v4023 = vld [vmem:[#allocation7 + $0xf0] sm:$0xff]
        %v4024 = vld [vmem:[#allocation7 + $0xf8] sm:$0xff]
        %v4033 = vunpack.c.l.b16 %v4017
        %v4034 = vunpack.c.h.b16 %v4017
        %v4035 = vunpack.c.l.b16 %v4018
        %v4036 = vunpack.c.h.b16 %v4018
        %v4037 = vunpack.c.l.b16 %v4019
        %v4038 = vunpack.c.h.b16 %v4019
        %v4039 = vunpack.c.l.b16 %v4020
        %v4040 = vunpack.c.h.b16 %v4020
        %v4041 = vunpack.c.l.b16 %v4021
        %v4042 = vunpack.c.h.b16 %v4021
        %v4043 = vunpack.c.l.b16 %v4022
        %v4044 = vunpack.c.h.b16 %v4022
        %v4045 = vunpack.c.l.b16 %v4023
        %v4046 = vunpack.c.h.b16 %v4023
        %v4047 = vunpack.c.l.b16 %v4024
        %v4048 = vunpack.c.h.b16 %v4024
        %v4049 = vpack.c.b16 %v4035, %v4033
        %v4050 = vpack.c.b16 %v4036, %v4034
        %v4051 = vpack.c.b16 %v4039, %v4037
        %v4052 = vpack.c.b16 %v4040, %v4038
        %v4053 = vpack.c.b16 %v4043, %v4041
        %v4054 = vpack.c.b16 %v4044, %v4042
        %v4055 = vpack.c.b16 %v4047, %v4045
        %v4056 = vpack.c.b16 %v4048, %v4046
        %v4066 = vsel %vm1725, %v4009, 0
        %v4069 = vsel %vm1725, %v4010, 0
        %v4072 = vsel %vm1725, %v4011, 0
        %v4075 = vsel %vm1725, %v4012, 0
        %v4078 = vsel %vm1725, %v4013, 0
        %v4081 = vsel %vm1725, %v4014, 0
        %v4084 = vsel %vm1725, %v4015, 0
        %v4087 = vsel %vm1725, %v4016, 0
        %4089 = vmatprep.subr.bf16.mxu0 0
        %4090 = vmatpush1.bf16.msra.mxu0 0
        %4091 = vmatprep.subr.bf16.mxu0 0
        %4092 = vmatpush1.bf16.msra.mxu0 0
        %4093 = vmatprep.subr.bf16.mxu0 0
        %4094 = vmatpush1.bf16.msra.mxu0 0
        %4095 = vmatprep.subr.bf16.mxu0 0
        %4096 = vmatpush1.bf16.msra.mxu0 0
        %4097 = vmatprep.subr.bf16.mxu0 %v4056
        %4098 = vmatpush1.bf16.msra.mxu0 %v4055
        %4099 = vmatprep.subr.bf16.mxu0 %v4054
        %4100 = vmatpush1.bf16.msra.mxu0 %v4053
        %4101 = vmatprep.subr.bf16.mxu0 %v4052
        %4102 = vmatpush1.bf16.msra.mxu0 %v4051
        %4103 = vmatprep.subr.bf16.mxu0 %v4050
        %4104 = vmatpush1.bf16.msra.mxu0 %v4049
        %4105 = vmatprep.subr.bf16.mxu0 0
        %4106 = vmatpush2.bf16.msra.mxu0 0
        %4107 = vmatprep.subr.bf16.mxu0 0
        %4108 = vmatpush2.bf16.msra.mxu0 0
        %4109 = vmatprep.subr.bf16.mxu0 0
        %4110 = vmatpush2.bf16.msra.mxu0 0
        %4111 = vmatprep.subr.bf16.mxu0 0
        %4112 = vmatpush2.bf16.msra.mxu0 0
        %4113 = vmatprep.subr.bf16.mxu0 0
        %4114 = vmatpush2.bf16.msra.mxu0 0
        %4115 = vmatprep.subr.bf16.mxu0 0
        %4116 = vmatpush2.bf16.msra.mxu0 0
        %4117 = vmatprep.subr.bf16.mxu0 0
        %4118 = vmatpush2.bf16.msra.mxu0 0
        %4119 = vmatprep.subr.bf16.mxu0 0
        %4120 = vmatpush2.bf16.msra.mxu0 0
        %4121 = vmatprep.mubr.bf16.mxu0 0
        %4122 = vmatmul.mubr.bf16.gmra.mxu0 %v4066
        %v4123 = vpop.f32.mrf.mxu0
        %v4124 = vadd.f32 0.0, %v4123
        %v4125 = vpop.f32.mrf.mxu0
        %v4126 = vadd.f32 0.0, %v4125
        %v4127 = vpop.f32.mrf.mxu0
        %v4128 = vadd.f32 0.0, %v4127
        %v4129 = vpop.f32.mrf.mxu0
        %v4130 = vadd.f32 0.0, %v4129
        %4131 = vmatprep.mubr.bf16.mxu0 0
        %4132 = vmatmul.mubr.bf16.gmra.mxu0 %v4069
        %v4133 = vpop.f32.mrf.mxu0
        %v4134 = vadd.f32 0.0, %v4133
        %v4135 = vpop.f32.mrf.mxu0
        %v4136 = vadd.f32 0.0, %v4135
        %v4137 = vpop.f32.mrf.mxu0
        %v4138 = vadd.f32 0.0, %v4137
        %v4139 = vpop.f32.mrf.mxu0
        %v4140 = vadd.f32 0.0, %v4139
        %4141 = vmatprep.mubr.bf16.mxu0 0
        %4142 = vmatmul.mubr.bf16.gmra.mxu0 %v4072
        %v4143 = vpop.f32.mrf.mxu0
        %v4144 = vadd.f32 0.0, %v4143
        %v4145 = vpop.f32.mrf.mxu0
        %v4146 = vadd.f32 0.0, %v4145
        %v4147 = vpop.f32.mrf.mxu0
        %v4148 = vadd.f32 0.0, %v4147
        %v4149 = vpop.f32.mrf.mxu0
        %v4150 = vadd.f32 0.0, %v4149
        %4151 = vmatprep.mubr.bf16.mxu0 0
        %4152 = vmatmul.mubr.bf16.gmra.mxu0 %v4075
        %v4153 = vpop.f32.mrf.mxu0
        %v4154 = vadd.f32 0.0, %v4153
        %v4155 = vpop.f32.mrf.mxu0
        %v4156 = vadd.f32 0.0, %v4155
        %v4157 = vpop.f32.mrf.mxu0
        %v4158 = vadd.f32 0.0, %v4157
        %v4159 = vpop.f32.mrf.mxu0
        %v4160 = vadd.f32 0.0, %v4159
        %4161 = vmatprep.mubr.bf16.mxu0 0
        %4162 = vmatmul.mubr.bf16.gmra.mxu0 %v4078
        %v4163 = vpop.f32.mrf.mxu0
        %v4164 = vadd.f32 0.0, %v4163
        %v4165 = vpop.f32.mrf.mxu0
        %v4166 = vadd.f32 0.0, %v4165
        %v4167 = vpop.f32.mrf.mxu0
        %v4168 = vadd.f32 0.0, %v4167
        %v4169 = vpop.f32.mrf.mxu0
        %v4170 = vadd.f32 0.0, %v4169
        %4171 = vmatprep.mubr.bf16.mxu0 0
        %4172 = vmatmul.mubr.bf16.gmra.mxu0 %v4081
        %v4173 = vpop.f32.mrf.mxu0
        %v4174 = vadd.f32 0.0, %v4173
        %v4175 = vpop.f32.mrf.mxu0
        %v4176 = vadd.f32 0.0, %v4175
        %v4177 = vpop.f32.mrf.mxu0
        %v4178 = vadd.f32 0.0, %v4177
        %v4179 = vpop.f32.mrf.mxu0
        %v4180 = vadd.f32 0.0, %v4179
        %4181 = vmatprep.mubr.bf16.mxu0 0
        %4182 = vmatmul.mubr.bf16.gmra.mxu0 %v4084
        %v4183 = vpop.f32.mrf.mxu0
        %v4184 = vadd.f32 0.0, %v4183
        %v4185 = vpop.f32.mrf.mxu0
        %v4186 = vadd.f32 0.0, %v4185
        %v4187 = vpop.f32.mrf.mxu0
        %v4188 = vadd.f32 0.0, %v4187
        %v4189 = vpop.f32.mrf.mxu0
        %v4190 = vadd.f32 0.0, %v4189
        %4191 = vmatprep.mubr.bf16.mxu0 0
        %4192 = vmatmul.mubr.bf16.gmra.mxu0 %v4087
        %v4193 = vpop.f32.mrf.mxu0
        %v4194 = vadd.f32 0.0, %v4193
        %v4195 = vpop.f32.mrf.mxu0
        %v4196 = vadd.f32 0.0, %v4195
        %v4197 = vpop.f32.mrf.mxu0
        %v4198 = vadd.f32 0.0, %v4197
        %v4199 = vpop.f32.mrf.mxu0
        %v4200 = vadd.f32 0.0, %v4199
        %4201 = vdwg.mxu0
        %v4202 = vadd.f32 %v3977, %v4124
        %v4203 = vadd.f32 %v3978, %v4126
        %v4204 = vadd.f32 %v3979, %v4128
        %v4205 = vadd.f32 %v3980, %v4130
        %v4206 = vadd.f32 %v3981, %v4134
        %v4207 = vadd.f32 %v3982, %v4136
        %v4208 = vadd.f32 %v3983, %v4138
        %v4209 = vadd.f32 %v3984, %v4140
        %v4210 = vadd.f32 %v3985, %v4144
        %v4211 = vadd.f32 %v3986, %v4146
        %v4212 = vadd.f32 %v3987, %v4148
        %v4213 = vadd.f32 %v3988, %v4150
        %v4214 = vadd.f32 %v3989, %v4154
        %v4215 = vadd.f32 %v3990, %v4156
        %v4216 = vadd.f32 %v3991, %v4158
        %v4217 = vadd.f32 %v3992, %v4160
        %v4218 = vadd.f32 %v3993, %v4164
        %v4219 = vadd.f32 %v3994, %v4166
        %v4220 = vadd.f32 %v3995, %v4168
        %v4221 = vadd.f32 %v3996, %v4170
        %v4222 = vadd.f32 %v3997, %v4174
        %v4223 = vadd.f32 %v3998, %v4176
        %v4224 = vadd.f32 %v3999, %v4178
        %v4225 = vadd.f32 %v4000, %v4180
        %v4226 = vadd.f32 %v4001, %v4184
        %v4227 = vadd.f32 %v4002, %v4186
        %v4228 = vadd.f32 %v4003, %v4188
        %v4229 = vadd.f32 %v4004, %v4190
        %v4230 = vadd.f32 %v4005, %v4194
        %v4231 = vadd.f32 %v4006, %v4196
        %v4232 = vadd.f32 %v4007, %v4198
        %v4233 = vadd.f32 %v4008, %v4200
        %v4235 = vlaneseq
        %v4236 = vshrl.u32 %v4235, 7
        %v4237 = vsub.s32 0, %v4236
        %v4238 = vrot.slane %v1724, %v4237
        %v4239 = vlaneseq
        %v4240 = vshrl.u32 %v4239, 7
        %v4241 = vsub.s32 1, %v4240
        %v4242 = vrot.slane %v1724, %v4241
        %v4245 = vadd.f32 %v4202, %v4238
        %v4246 = vadd.f32 %v4203, %v4242
        %v4247 = vadd.f32 %v4204, %v4238
        %v4248 = vadd.f32 %v4205, %v4242
        %v4249 = vadd.f32 %v4206, %v4238
        %v4250 = vadd.f32 %v4207, %v4242
        %v4251 = vadd.f32 %v4208, %v4238
        %v4252 = vadd.f32 %v4209, %v4242
        %v4253 = vadd.f32 %v4210, %v4238
        %v4254 = vadd.f32 %v4211, %v4242
        %v4255 = vadd.f32 %v4212, %v4238
        %v4256 = vadd.f32 %v4213, %v4242
        %v4257 = vadd.f32 %v4214, %v4238
        %v4258 = vadd.f32 %v4215, %v4242
        %v4259 = vadd.f32 %v4216, %v4238
        %v4260 = vadd.f32 %v4217, %v4242
        %v4261 = vadd.f32 %v4218, %v4238
        %v4262 = vadd.f32 %v4219, %v4242
        %v4263 = vadd.f32 %v4220, %v4238
        %v4264 = vadd.f32 %v4221, %v4242
        %v4265 = vadd.f32 %v4222, %v4238
        %v4266 = vadd.f32 %v4223, %v4242
        %v4267 = vadd.f32 %v4224, %v4238
        %v4268 = vadd.f32 %v4225, %v4242
        %v4269 = vadd.f32 %v4226, %v4238
        %v4270 = vadd.f32 %v4227, %v4242
        %v4271 = vadd.f32 %v4228, %v4238
        %v4272 = vadd.f32 %v4229, %v4242
        %v4273 = vadd.f32 %v4230, %v4238
        %v4274 = vadd.f32 %v4231, %v4242
        %v4275 = vadd.f32 %v4232, %v4238
        %v4276 = vadd.f32 %v4233, %v4242
        %4277 = vst [vmem:[%s244] sm:$0xff] %v4245
        %4278 = vst [vmem:[%s244 + $0x8] sm:$0xff] %v4246
        %4279 = vst [vmem:[%s244 + $0x10] sm:$0xff] %v4247
        %4280 = vst [vmem:[%s244 + $0x18] sm:$0xff] %v4248
        %4281 = vst [vmem:[%s244 + $0x20] sm:$0xff] %v4249
        %4282 = vst [vmem:[%s244 + $0x28] sm:$0xff] %v4250
        %4283 = vst [vmem:[%s244 + $0x30] sm:$0xff] %v4251
        %4284 = vst [vmem:[%s244 + $0x38] sm:$0xff] %v4252
        %4285 = vst [vmem:[%s244 + $0x40] sm:$0xff] %v4253
        %4286 = vst [vmem:[%s244 + $0x48] sm:$0xff] %v4254
        %4287 = vst [vmem:[%s244 + $0x50] sm:$0xff] %v4255
        %4288 = vst [vmem:[%s244 + $0x58] sm:$0xff] %v4256
        %4289 = vst [vmem:[%s244 + $0x60] sm:$0xff] %v4257
        %4290 = vst [vmem:[%s244 + $0x68] sm:$0xff] %v4258
        %4291 = vst [vmem:[%s244 + $0x70] sm:$0xff] %v4259
        %4292 = vst [vmem:[%s244 + $0x78] sm:$0xff] %v4260
        %4293 = vst [vmem:[%s244 + $0x80] sm:$0xff] %v4261
        %4294 = vst [vmem:[%s244 + $0x88] sm:$0xff] %v4262
        %4295 = vst [vmem:[%s244 + $0x90] sm:$0xff] %v4263
        %4296 = vst [vmem:[%s244 + $0x98] sm:$0xff] %v4264
        %4297 = vst [vmem:[%s244 + $0xa0] sm:$0xff] %v4265
        %4298 = vst [vmem:[%s244 + $0xa8] sm:$0xff] %v4266
        %4299 = vst [vmem:[%s244 + $0xb0] sm:$0xff] %v4267
        %4300 = vst [vmem:[%s244 + $0xb8] sm:$0xff] %v4268
        %4301 = vst [vmem:[%s244 + $0xc0] sm:$0xff] %v4269
        %4302 = vst [vmem:[%s244 + $0xc8] sm:$0xff] %v4270
        %4303 = vst [vmem:[%s244 + $0xd0] sm:$0xff] %v4271
        %4304 = vst [vmem:[%s244 + $0xd8] sm:$0xff] %v4272
        %4305 = vst [vmem:[%s244 + $0xe0] sm:$0xff] %v4273
        %4306 = vst [vmem:[%s244 + $0xe8] sm:$0xff] %v4274
        %4307 = vst [vmem:[%s244 + $0xf0] sm:$0xff] %v4275
        %4308 = vst [vmem:[%s244 + $0xf8] sm:$0xff] %v4276
        %s4309 = sand.u32 %s119, 1
        %s4310 = scalar_lea.sflag [#allocation4], %s4309
        %s4311 = sand.u32 %s119, 1
        %s4312 = smul.addr %s4311, 256
        %s4313 = scalar_lea.vmem [#allocation8], %s4312
        // Predicated region
        $region49: #{tpu_custom_call.1} parent=35 // pred_check
          %p4314 = pneg %p129
        $region50: #{tpu_custom_call.1} parent=35 // pred_check_branch
          %4316 = sbr.rel (%p4314) target = $region52
        $region51: #{tpu_custom_call.1} parent=35 // pred_region
          %s4318 = ssub.s32 4096, 4096
          %4319 = vsyncadd %s4310, %s4318
          %s4320 = smul.addr %s22, 32
          %s4321 = smul.addr %s4320, 128
          %s4322 = scalar_lea.hbm %s4, %s4321
          %s4323 = sshll.u32 %s4313, 4
          %s4324 = int_to_ptr.vmem [resolvable:$true] %s4323
          %4329 = dma.vmem_to_hbm [thread:$0]  %s4324, 4096, %s4322, %s4310, 256, 256, 16
        $region52: #{tpu_custom_call.1} parent=35 // pred_fallthru
          _
      $region36: #{tpu_custom_call.1} parent=5 // pred_fallthru
        _
      %p4330 = scmp.le.s32.totalorder 2, %s17
      // Predicated region
      $region53: #{tpu_custom_call.1} parent=5 // pred_check
        %p4331 = pneg %p4330
      $region54: #{tpu_custom_call.1} parent=5 // pred_check_branch
        %4333 = sbr.rel (%p4331) target = $region56
      $region55: #{tpu_custom_call.1} parent=5 // pred_region
        %s4334 = ssub.s32 %s17, 2
        // Predicated region
        $region57: #{tpu_custom_call.1} parent=55 // pred_check
          %p4335 = pneg %p135
        $region58: #{tpu_custom_call.1} parent=55 // pred_check_branch
          %4337 = sbr.rel (%p4335) target = $region60
        $region59: #{tpu_custom_call.1} parent=55 // pred_region
          %s4338 = sand.u32 %s120, 1
          %s4339 = scalar_lea.sflag [#allocation4], %s4338
          %s4340 = sand.u32 %s120, 1
          %s4341 = smul.addr %s4340, 256
          %s4342 = scalar_lea.vmem [#allocation8], %s4341
          %4343 = dma.done %s4339, 4096
        $region60: #{tpu_custom_call.1} parent=55 // pred_fallthru
          _
      $region56: #{tpu_custom_call.1} parent=5 // pred_fallthru
        _
    $region6: #{tpu_custom_call.1} parent=1 // loop_footer
      %s21 = sadd.s32 1, %s17
    $region7: #{tpu_custom_call.1} parent=1 // loop_footer_branch
      %16 = sbr.rel target = $region3
    $region8: #{tpu_custom_call.1} parent=1 // loop_exit
      _
    %4344 = vsyncpa [#allocation3], 1
    %s4345 = scalar_lea.sflag [#allocation3], 1
    %4346 = vsyncpa %s4345, 1
    %4347 = vsyncpa [#allocation6], 1
    %4348 = vsyncpa [#allocation4], 1
    %s4349 = scalar_lea.sflag [#allocation4], 1
    %4350 = vsyncpa %s4349, 1

</llo_original>
